<compile_context>
chip_gen: v7x
topology: tpu7x:2x2x1
jax: 0.10.0
libtpu: 0.0.40
codegen_flags: <defaults>
</compile_context>

<pallas_src>
import functools

import jax
import jax.numpy as jnp
from jax import lax
from jax.experimental import pallas as pl
from jax.experimental.pallas import tpu as pltpu


INCEPTION_FEATS = 2048   # InceptionV3 fc.in_features (backbone stub's output width)
LANES = 128              # TPU lane width (one vreg row)


# ----------------------------------------------------------------------------
# Fused forward kernel
# ----------------------------------------------------------------------------

def _captionizer_kernel(num_layers, seq_len, batch, hidden,
                        img_ref, cap_ref, enc_w_ref, enc_b_ref,
                        embed_ref, dec_w_ref, dec_b_ref, *rest):
    """Entire ImageCaptionizer forward in one Pallas invocation (all operands in VMEM).

    Weight packing (done host-side in pack_params):
      * gate order along lanes is PyTorch's (i, f, g, o), one H-wide lane group each;
      * h_t's payload lives only in the o-gate lane group (3H..4H); W_hh, layer>=1
        W_ih and dec_w have their real rows placed at rows 3H..4H so no h replication
        is needed;
      * c_t is replicated across all four lane groups (needed in the f group for f*c
        and in the o group for o*tanh(c)); its replication uses only direction-agnostic
        rotation amounts (2H, then H applied to a 2H-periodic tensor).
    """
    lstm_refs = rest[:3 * num_layers]
    out_ref = rest[3 * num_layers]
    xh_sc, pre_sc = rest[3 * num_layers + 1:]

    S, B, H = seq_len, batch, hidden
    G = 4 * H                      # lane width of gates / padded state (= 128 here)
    SB = S * B
    Vocab = embed_ref.shape[0]

    # ---------------- Encoder ----------------
    # TODO(synk): InceptionV3 body is a linear stub pre-composed with encoder.fc into
    #             one bf16 (img_flat, 4H) weight; ReLU applied after; dropout = identity.
    img_bf = img_ref[...].astype(jnp.bfloat16)
    feats = jnp.dot(img_bf, enc_w_ref[...], preferred_element_type=jnp.float32)  # (B, G)
    feats = jnp.maximum(feats + enc_b_ref[...], 0.0)

    # ------ Embedding lookup fused in-kernel as a one-hot matmul (no gather) -------
    cap = cap_ref[...]                                                       # (T*B, 1) int32
    onehot = (cap == lax.broadcasted_iota(jnp.int32, (SB - B, Vocab), 1)).astype(jnp.float32)
    emb = jnp.dot(onehot, embed_ref[...], preferred_element_type=jnp.float32)  # (T*B, G)

    # Layer-0 input sequence: feature vector prepended to caption embeddings.
    xh_sc[pl.ds(0, B), :] = feats
    xh_sc[pl.ds(B, SB - B), :] = emb

    # Lane-group masks, hoisted out of the recurrence (broadcasts are not CSE'd).
    lane = lax.broadcasted_iota(jnp.int32, (B, G), 1)
    m_forget = (lane >= H) & (lane < 2 * H)   # f-gate group
    m_cell = lane < 2 * H                     # groups holding the two c_new products
    m_out = lane >= 3 * H                     # o-gate group (h_t payload lives here)

    def run_layer(w_ih_ref, w_hh_ref, b_ref):
        # Hoisted input->hidden matmul: one (S*B, G)@(G, G) MXU call per layer instead
        # of one tiny matmul per timestep on the serial critical path.
        pre_sc[...] = jnp.dot(xh_sc[...], w_ih_ref[...],
                              preferred_element_type=jnp.float32) + b_ref[...]

        def step(t, carry):
            h, c = carry                      # vreg-resident loop carry (no VMEM scratch)
            # Only h@W_hh + gate nonlinearities remain inside the recurrence.
            gates = pre_sc[pl.ds(t * B, B), :] + jnp.dot(
                h, w_hh_ref[...], preferred_element_type=jnp.float32)   # (B, 4H)
            # NOTE: sigmoid is also evaluated on g-gate lanes and tanh on i/f/o lanes;
            # those lanes are masked below -- do not remove the masks.
            sig = jax.nn.sigmoid(gates)           # i | f | . | o   (full-width EUP)
            tnh = jnp.tanh(gates)                 # . | . | g | .
            # group0: i*g  (g sits 2H lanes from i),  group1: f*c   ->  c_new = sum.
            prod = sig * jnp.where(m_forget, c, pltpu.roll(tnh, 2 * H, axis=1))
            part = jnp.where(m_cell, prod, 0.0)
            y = part + pltpu.roll(part, 2 * H, axis=1)        # 2H-periodic
            c_new = y + pltpu.roll(y, H, axis=1)              # c_t in every lane group
            # h_t payload only in the o-gate group; downstream weight rows are aligned
            # to it, so no replicate(h) rolls are needed.
            h_new = jnp.where(m_out, sig * jnp.tanh(c_new), 0.0)
            xh_sc[pl.ds(t * B, B), :] = h_new     # single (B, G) store per step
            return (h_new, c_new)

        zero = jnp.zeros((B, G), jnp.float32)     # PyTorch default zero initial state
        # S is small and static: full unroll gives the scheduler cross-step visibility.
        # TODO(synk): if a bundle dump shows vreg spills from the full unroll, drop to
        #             unroll=2 or 4.
        lax.fori_loop(0, S, step, (zero, zero), unroll=True)

    for layer in range(num_layers):
        run_layer(lstm_refs[3 * layer], lstm_refs[3 * layer + 1], lstm_refs[3 * layer + 2])

    # Hoisted vocab projection: one (S*B, G)@(G, V) matmul, lane-dense unmasked stores.
    out_ref[...] = jnp.dot(xh_sc[...], dec_w_ref[...],
                           preferred_element_type=jnp.float32) + dec_b_ref[...]


# ----------------------------------------------------------------------------
# Parameter construction (deterministic, synthetic) + kernel-layout packing
# ----------------------------------------------------------------------------

def init_params(key, embed_size, hidden_size, vocab_size, num_layers, image_flat_dim):
    keys = jax.random.split(key, 6 + 4 * num_layers)
    ki = iter(keys)
    p = {}

    # Backbone stub (stand-in for InceptionV3 body): flattened image -> 2048 feats.
    p["backbone_w"] = 0.02 * jax.random.normal(next(ki), (image_flat_dim, INCEPTION_FEATS),
                                               jnp.float32)
    # encoder.inception.fc : Linear(2048, embed_size)
    p["enc_fc_w"] = 0.02 * jax.random.normal(next(ki), (INCEPTION_FEATS, embed_size), jnp.float32)
    p["enc_fc_b"] = 0.01 * jax.random.normal(next(ki), (embed_size,), jnp.float32)
    # decoder.embed : Embedding(vocab_size, embed_size)
    p["embed_table"] = 0.1 * jax.random.normal(next(ki), (vocab_size, embed_size), jnp.float32)
    # decoder.lstm : LSTM(embed_size, hidden_size, num_layers), gate order (i, f, g, o)
    p["lstm"] = []
    in_dim = embed_size
    for _ in range(num_layers):
        w_ih = 0.1 * jax.random.normal(next(ki), (in_dim, 4 * hidden_size), jnp.float32)
        w_hh = 0.1 * jax.random.normal(next(ki), (hidden_size, 4 * hidden_size), jnp.float32)
        b_ih = 0.01 * jax.random.normal(next(ki), (4 * hidden_size,), jnp.float32)
        b_hh = 0.01 * jax.random.normal(next(ki), (4 * hidden_size,), jnp.float32)
        p["lstm"].append({"w_ih_t": w_ih, "w_hh_t": w_hh, "b": b_ih + b_hh})
        in_dim = hidden_size
    # decoder.linear : Linear(hidden_size, vocab_size)
    p["dec_lin_w"] = 0.05 * jax.random.normal(next(ki), (hidden_size, vocab_size), jnp.float32)
    p["dec_lin_b"] = 0.01 * jax.random.normal(next(ki), (vocab_size,), jnp.float32)
    return p


def _pad_to(x, shape):
    return jnp.pad(x, [(0, t - s) for s, t in zip(x.shape, shape)])


def _rows_at_o_group(w, rows):
    """Place w's real rows at the LAST w.shape[0] rows of a `rows`-row matrix.

    Used for weights that contract against the hidden state h, whose payload lives in
    the o-gate lane group (lanes 3H..4H)."""
    return jnp.pad(w, ((rows - w.shape[0], 0), (0, 0)))


def pack_params(p, hidden_size, vocab_size):
    """Repack logical weights into the kernel's 128-lane-padded layout (done once)."""
    G = 4 * hidden_size
    # Pre-compose the linear backbone stub with encoder.fc: one tiny fused bf16 weight
    # (replaces ~4 MB of weight DMA with ~0.19 MB).
    fused_enc_w = p["backbone_w"] @ p["enc_fc_w"]                     # (img_flat, embed)
    packed = {
        "enc_w": _pad_to(fused_enc_w, (fused_enc_w.shape[0], G)).astype(jnp.bfloat16),
        "enc_b": _pad_to(p["enc_fc_b"].reshape(1, -1), (1, G)),
        "embed": _pad_to(p["embed_table"], (vocab_size, G)),
        # dec_w contracts against h -> real rows at lanes 3H..4H.
        "dec_w": _rows_at_o_group(p["dec_lin_w"], G),
        "dec_b": p["dec_lin_b"].reshape(1, vocab_size),
        "lstm": [],
    }
    for li, layer in enumerate(p["lstm"]):
        if li == 0:
            w_ih = _pad_to(layer["w_ih_t"], (G, G))          # layer-0 input: lanes 0..embed
        else:
            w_ih = _rows_at_o_group(layer["w_ih_t"], G)      # input is prev-layer h
        w_hh = _rows_at_o_group(layer["w_hh_t"], G)          # contracts against h
        packed["lstm"].append({"w_ih": w_ih, "w_hh": w_hh, "b": layer["b"].reshape(1, G)})
    return packed


# ----------------------------------------------------------------------------
# Forward pass wrapper (single fused pallas_call)
# ----------------------------------------------------------------------------

def image_captionizer_forward(packed, image, captions, hidden_size):
    """image: (B, C, H, W) f32, captions: (T, B) int32 -> logits (T+1, B, V) f32."""
    B = image.shape[0]
    T = captions.shape[0]
    S = T + 1
    B_pad = max(8, -(-B // 8) * 8)          # pad batch to full sublane groups
    G = 4 * hidden_size
    V = packed["embed"].shape[0]
    num_layers = len(packed["lstm"])
    assert G == LANES, "kernel packs gates/state into one 128-lane tile (needs 4*hidden == 128)"
    assert V % LANES == 0

    img_flat = image.reshape(B, -1).astype(jnp.float32)
    img_flat = jnp.pad(img_flat, ((0, B_pad - B), (0, 0)))
    cap = jnp.pad(captions.astype(jnp.int32), ((0, 0), (0, B_pad - B)))
    cap = cap.reshape(T * B_pad, 1)         # row index = t*B_pad + b (time-major)

    lstm_flat = []
    for layer in packed["lstm"]:
        lstm_flat += [layer["w_ih"], layer["w_hh"], layer["b"]]

    kernel = functools.partial(_captionizer_kernel, num_layers, S, B_pad, hidden_size)
    num_inputs = 7 + 3 * num_layers

    logits = pl.pallas_call(
        kernel,
        # Flat (S*B, V) output -> lane-dense unmasked stores; reshaped outside.
        out_shape=jax.ShapeDtypeStruct((S * B_pad, V), jnp.float32),
        in_specs=[pl.BlockSpec(memory_space=pltpu.MemorySpace.VMEM)
                  for _ in range(num_inputs)],
        out_specs=pl.BlockSpec(memory_space=pltpu.MemorySpace.VMEM),
        scratch_shapes=[
            pltpu.VMEM((S * B_pad, G), jnp.float32),   # xh : input / hidden sequence
            pltpu.VMEM((S * B_pad, G), jnp.float32),   # pre: hoisted x @ W_ih + b
        ],
        # No grid: total operands < 1 MB, everything stays VMEM-resident in a single
        # invocation (no HBM round-trips of intermediates).
        # TODO(synk): if batch/vocab grow, add a "parallel" grid axis so the second
        #             TensorCore on v7x is used; not worth it at B_pad=8 / V=128.
    )(img_flat, cap, packed["enc_w"], packed["enc_b"],
      packed["embed"], packed["dec_w"], packed["dec_b"], *lstm_flat)

    return logits.reshape(S, B_pad, V)[:, :B, :]


# ----------------------------------------------------------------------------
# Main
# ----------------------------------------------------------------------------

if __name__ == "__main__":
    EMBED_SIZE = 32
    HIDDEN_SIZE = 32          # 4*H = 128 = one lane tile
    VOCAB_SIZE = 128
    NUM_LAYERS = 2
    BATCH = 4
    SEQ_T = 7                 # caption length; LSTM runs SEQ_T + 1 steps
    IMG_SHAPE = (BATCH, 3, 16, 16)

    key = jax.random.PRNGKey(0)
    k_img, k_cap, k_par = jax.random.split(key, 3)

    image = jax.random.normal(k_img, IMG_SHAPE, jnp.float32)
    captions = jax.random.randint(k_cap, (SEQ_T, BATCH), 0, VOCAB_SIZE, jnp.int32)

    params = init_params(k_par, EMBED_SIZE, HIDDEN_SIZE, VOCAB_SIZE, NUM_LAYERS,
                         image_flat_dim=IMG_SHAPE[1] * IMG_SHAPE[2] * IMG_SHAPE[3])
    packed = pack_params(params, HIDDEN_SIZE, VOCAB_SIZE)

    fwd = jax.jit(functools.partial(image_captionizer_forward, hidden_size=HIDDEN_SIZE))
    out = fwd(packed, image, captions)
    out = jax.block_until_ready(out)

    assert out.shape == (SEQ_T + 1, BATCH, VOCAB_SIZE), out.shape
    assert out.dtype == jnp.float32
    assert bool(jnp.all(jnp.isfinite(out)))
    print("KERNEL_OK")
</pallas_src>

<mosaic_0001>
module attributes {stable_mosaic.version = 11 : i64} {
  func.func @_captionizer_kernel(%arg0: memref<8x768xf32, #tpu.memory_space<vmem>>, %arg1: memref<56x1xi32, #tpu.memory_space<vmem>>, %arg2: memref<768x128xbf16, #tpu.memory_space<vmem>>, %arg3: memref<1x128xf32, #tpu.memory_space<vmem>>, %arg4: memref<128x128xf32, #tpu.memory_space<vmem>>, %arg5: memref<128x128xf32, #tpu.memory_space<vmem>>, %arg6: memref<1x128xf32, #tpu.memory_space<vmem>>, %arg7: memref<128x128xf32, #tpu.memory_space<vmem>>, %arg8: memref<128x128xf32, #tpu.memory_space<vmem>>, %arg9: memref<1x128xf32, #tpu.memory_space<vmem>>, %arg10: memref<128x128xf32, #tpu.memory_space<vmem>>, %arg11: memref<128x128xf32, #tpu.memory_space<vmem>>, %arg12: memref<1x128xf32, #tpu.memory_space<vmem>>, %arg13: memref<64x128xf32, #tpu.memory_space<vmem>>, %arg14: memref<64x128xf32, #tpu.memory_space<vmem>>, %arg15: memref<64x128xf32, #tpu.memory_space<vmem>>) attributes {dimension_semantics = [], scalar_prefetch = 0 : i64, scratch_operands = 2 : i64, tpu.core_type = #tpu.core_type<tc>} {
    %c0 = arith.constant 0 : index
    %c0_0 = arith.constant 0 : index
    %0 = vector.load %arg0[%c0, %c0_0] : memref<8x768xf32, #tpu.memory_space<vmem>>, vector<8x768xf32>
    %1 = arith.truncf %0 : vector<8x768xf32> to vector<8x768xbf16>
    %c0_1 = arith.constant 0 : index
    %c0_2 = arith.constant 0 : index
    %2 = vector.load %arg2[%c0_1, %c0_2] : memref<768x128xbf16, #tpu.memory_space<vmem>>, vector<768x128xbf16>
    %cst = arith.constant dense<0.000000e+00> : vector<8x128xf32>
    %3 = tpu.matmul %1, %2, %cst {dimension_numbers = #tpu.dot_dimension_numbers<[1], [0], [0], [1], [0, 0, 1, 1], [], []>} : vector<8x768xbf16>, vector<768x128xbf16>, vector<8x128xf32> -> vector<8x128xf32>
    %c0_3 = arith.constant 0 : index
    %c0_4 = arith.constant 0 : index
    %4 = vector.load %arg3[%c0_3, %c0_4] : memref<1x128xf32, #tpu.memory_space<vmem>>, vector<1x128xf32>
    %5 = vector.broadcast %4 : vector<1x128xf32> to vector<8x128xf32>
    %6 = arith.addf %3, %5 : vector<8x128xf32>
    %cst_5 = arith.constant 0.000000e+00 : f32
    %7 = vector.broadcast %cst_5 : f32 to vector<8x128xf32>
    %8 = arith.maximumf %6, %7 : vector<8x128xf32>
    %c0_6 = arith.constant 0 : index
    %c0_7 = arith.constant 0 : index
    %9 = vector.load %arg1[%c0_6, %c0_7] : memref<56x1xi32, #tpu.memory_space<vmem>>, vector<56x1xi32>
    %10 = tpu.iota {dimensions = array<i32: 1>} : vector<56x128xi32>
    %11 = vector.broadcast %9 : vector<56x1xi32> to vector<56x128xi32>
    %12 = arith.cmpi eq, %11, %10 : vector<56x128xi32>
    %13 = arith.extui %12 : vector<56x128xi1> to vector<56x128xi32>
    %14 = arith.sitofp %13 : vector<56x128xi32> to vector<56x128xf32>
    %c0_8 = arith.constant 0 : index
    %c0_9 = arith.constant 0 : index
    %15 = vector.load %arg4[%c0_8, %c0_9] : memref<128x128xf32, #tpu.memory_space<vmem>>, vector<128x128xf32>
    %cst_10 = arith.constant dense<0.000000e+00> : vector<56x128xf32>
    %16 = tpu.matmul %14, %15, %cst_10 {dimension_numbers = #tpu.dot_dimension_numbers<[1], [0], [0], [1], [0, 0, 1, 1], [], []>} : vector<56x128xf32>, vector<128x128xf32>, vector<56x128xf32> -> vector<56x128xf32>
    %c0_11 = arith.constant 0 : index
    %c0_12 = arith.constant 0 : index
    %17 = vector.load %arg14[%c0_11, %c0_12] : memref<64x128xf32, #tpu.memory_space<vmem>>, vector<8x128xf32>
    tpu.vector_store %arg14[%c0_11, %c0_12], %8 {strides = array<i32>} : memref<64x128xf32, #tpu.memory_space<vmem>>, vector<8x128xf32>,
    %c8 = arith.constant 8 : index
    %c0_13 = arith.constant 0 : index
    %18 = vector.load %arg14[%c8, %c0_13] : memref<64x128xf32, #tpu.memory_space<vmem>>, vector<56x128xf32>
    tpu.vector_store %arg14[%c8, %c0_13], %16 {strides = array<i32>} : memref<64x128xf32, #tpu.memory_space<vmem>>, vector<56x128xf32>,
    %19 = tpu.iota {dimensions = array<i32: 1>} : vector<8x128xi32>
    %c32_i32 = arith.constant 32 : i32
    %20 = vector.broadcast %c32_i32 : i32 to vector<8x128xi32>
    %21 = arith.cmpi sge, %19, %20 : vector<8x128xi32>
    %c64_i32 = arith.constant 64 : i32
    %22 = vector.broadcast %c64_i32 : i32 to vector<8x128xi32>
    %23 = arith.cmpi slt, %19, %22 : vector<8x128xi32>
    %24 = arith.andi %21, %23 : vector<8x128xi1>
    %c64_i32_14 = arith.constant 64 : i32
    %25 = vector.broadcast %c64_i32_14 : i32 to vector<8x128xi32>
    %26 = arith.cmpi slt, %19, %25 : vector<8x128xi32>
    %c96_i32 = arith.constant 96 : i32
    %27 = vector.broadcast %c96_i32 : i32 to vector<8x128xi32>
    %28 = arith.cmpi sge, %19, %27 : vector<8x128xi32>
    %c0_15 = arith.constant 0 : index
    %c0_16 = arith.constant 0 : index
    %29 = vector.load %arg14[%c0_15, %c0_16] : memref<64x128xf32, #tpu.memory_space<vmem>>, vector<64x128xf32>
    %c0_17 = arith.constant 0 : index
    %c0_18 = arith.constant 0 : index
    %30 = vector.load %arg7[%c0_17, %c0_18] : memref<128x128xf32, #tpu.memory_space<vmem>>, vector<128x128xf32>
    %cst_19 = arith.constant dense<0.000000e+00> : vector<64x128xf32>
    %31 = tpu.matmul %29, %30, %cst_19 {dimension_numbers = #tpu.dot_dimension_numbers<[1], [0], [0], [1], [0, 0, 1, 1], [], []>} : vector<64x128xf32>, vector<128x128xf32>, vector<64x128xf32> -> vector<64x128xf32>
    %c0_20 = arith.constant 0 : index
    %c0_21 = arith.constant 0 : index
    %32 = vector.load %arg9[%c0_20, %c0_21] : memref<1x128xf32, #tpu.memory_space<vmem>>, vector<1x128xf32>
    %33 = vector.broadcast %32 : vector<1x128xf32> to vector<64x128xf32>
    %34 = arith.addf %31, %33 : vector<64x128xf32>
    %c0_22 = arith.constant 0 : index
    %c0_23 = arith.constant 0 : index
    %35 = vector.load %arg15[%c0_22, %c0_23] : memref<64x128xf32, #tpu.memory_space<vmem>>, vector<64x128xf32>
    tpu.vector_store %arg15[%c0_22, %c0_23], %34 {strides = array<i32>} : memref<64x128xf32, #tpu.memory_space<vmem>>, vector<64x128xf32>,
    %cst_24 = arith.constant 0.000000e+00 : f32
    %36 = vector.broadcast %cst_24 : f32 to vector<8x128xf32>
    %c0_i32 = arith.constant 0 : i32
    %c8_i32 = arith.constant 8 : i32
    %37 = arith.muli %c0_i32, %c8_i32 : i32
    %38 = arith.index_cast %37 : i32 to index
    %c0_25 = arith.constant 0 : index
    %39 = vector.load %arg15[%38, %c0_25] : memref<64x128xf32, #tpu.memory_space<vmem>>, vector<8x128xf32>
    %c0_26 = arith.constant 0 : index
    %c0_27 = arith.constant 0 : index
    %40 = vector.load %arg8[%c0_26, %c0_27] : memref<128x128xf32, #tpu.memory_space<vmem>>, vector<128x128xf32>
    %cst_28 = arith.constant dense<0.000000e+00> : vector<8x128xf32>
    %41 = tpu.matmul %36, %40, %cst_28 {dimension_numbers = #tpu.dot_dimension_numbers<[1], [0], [0], [1], [0, 0, 1, 1], [], []>} : vector<8x128xf32>, vector<128x128xf32>, vector<8x128xf32> -> vector<8x128xf32>
    %42 = arith.addf %39, %41 : vector<8x128xf32>
    %43 = arith.negf %42 : vector<8x128xf32>
    %44 = math.exp %43 : vector<8x128xf32>
    %cst_29 = arith.constant 1.000000e+00 : f32
    %45 = vector.broadcast %cst_29 : f32 to vector<8x128xf32>
    %46 = arith.addf %45, %44 : vector<8x128xf32>
    %47 = arith.divf %45, %46 : vector<8x128xf32>
    %48 = math.tanh %42 : vector<8x128xf32>
    %c64_i32_30 = arith.constant 64 : i32
    %49 = tpu.dynamic_rotate %48 by %c64_i32_30 dim 1 : vector<8x128xf32>, i32 -> vector<8x128xf32>
    %50 = arith.select %24, %36, %49 : vector<8x128xi1>, vector<8x128xf32>
    %51 = arith.mulf %47, %50 : vector<8x128xf32>
    %cst_31 = arith.constant 0.000000e+00 : f32
    %52 = vector.broadcast %cst_31 : f32 to vector<8x128xf32>
    %53 = arith.select %26, %51, %52 : vector<8x128xi1>, vector<8x128xf32>
    %c64_i32_32 = arith.constant 64 : i32
    %54 = tpu.dynamic_rotate %53 by %c64_i32_32 dim 1 : vector<8x128xf32>, i32 -> vector<8x128xf32>
    %55 = arith.addf %53, %54 : vector<8x128xf32>
    %c32_i32_33 = arith.constant 32 : i32
    %56 = tpu.dynamic_rotate %55 by %c32_i32_33 dim 1 : vector<8x128xf32>, i32 -> vector<8x128xf32>
    %57 = arith.addf %55, %56 : vector<8x128xf32>
    %58 = math.tanh %57 : vector<8x128xf32>
    %59 = arith.mulf %47, %58 : vector<8x128xf32>
    %cst_34 = arith.constant 0.000000e+00 : f32
    %60 = vector.broadcast %cst_34 : f32 to vector<8x128xf32>
    %61 = arith.select %28, %59, %60 : vector<8x128xi1>, vector<8x128xf32>
    %c8_i32_35 = arith.constant 8 : i32
    %62 = arith.muli %c0_i32, %c8_i32_35 : i32
    %63 = arith.index_cast %62 : i32 to index
    %c0_36 = arith.constant 0 : index
    %64 = vector.load %arg14[%63, %c0_36] : memref<64x128xf32, #tpu.memory_space<vmem>>, vector<8x128xf32>
    tpu.vector_store %arg14[%63, %c0_36], %61 {strides = array<i32>} : memref<64x128xf32, #tpu.memory_space<vmem>>, vector<8x128xf32>,
    %c1_i32 = arith.constant 1 : i32
    %c8_i32_37 = arith.constant 8 : i32
    %65 = arith.muli %c1_i32, %c8_i32_37 : i32
    %66 = arith.index_cast %65 : i32 to index
    %c0_38 = arith.constant 0 : index
    %67 = vector.load %arg15[%66, %c0_38] : memref<64x128xf32, #tpu.memory_space<vmem>>, vector<8x128xf32>
    %c0_39 = arith.constant 0 : index
    %c0_40 = arith.constant 0 : index
    %68 = vector.load %arg8[%c0_39, %c0_40] : memref<128x128xf32, #tpu.memory_space<vmem>>, vector<128x128xf32>
    %cst_41 = arith.constant dense<0.000000e+00> : vector<8x128xf32>
    %69 = tpu.matmul %61, %68, %cst_41 {dimension_numbers = #tpu.dot_dimension_numbers<[1], [0], [0], [1], [0, 0, 1, 1], [], []>} : vector<8x128xf32>, vector<128x128xf32>, vector<8x128xf32> -> vector<8x128xf32>
    %70 = arith.addf %67, %69 : vector<8x128xf32>
    %71 = arith.negf %70 : vector<8x128xf32>
    %72 = math.exp %71 : vector<8x128xf32>
    %cst_42 = arith.constant 1.000000e+00 : f32
    %73 = vector.broadcast %cst_42 : f32 to vector<8x128xf32>
    %74 = arith.addf %73, %72 : vector<8x128xf32>
    %75 = arith.divf %73, %74 : vector<8x128xf32>
    %76 = math.tanh %70 : vector<8x128xf32>
    %c64_i32_43 = arith.constant 64 : i32
    %77 = tpu.dynamic_rotate %76 by %c64_i32_43 dim 1 : vector<8x128xf32>, i32 -> vector<8x128xf32>
    %78 = arith.select %24, %57, %77 : vector<8x128xi1>, vector<8x128xf32>
    %79 = arith.mulf %75, %78 : vector<8x128xf32>
    %cst_44 = arith.constant 0.000000e+00 : f32
    %80 = vector.broadcast %cst_44 : f32 to vector<8x128xf32>
    %81 = arith.select %26, %79, %80 : vector<8x128xi1>, vector<8x128xf32>
    %c64_i32_45 = arith.constant 64 : i32
    %82 = tpu.dynamic_rotate %81 by %c64_i32_45 dim 1 : vector<8x128xf32>, i32 -> vector<8x128xf32>
    %83 = arith.addf %81, %82 : vector<8x128xf32>
    %c32_i32_46 = arith.constant 32 : i32
    %84 = tpu.dynamic_rotate %83 by %c32_i32_46 dim 1 : vector<8x128xf32>, i32 -> vector<8x128xf32>
    %85 = arith.addf %83, %84 : vector<8x128xf32>
    %86 = math.tanh %85 : vector<8x128xf32>
    %87 = arith.mulf %75, %86 : vector<8x128xf32>
    %cst_47 = arith.constant 0.000000e+00 : f32
    %88 = vector.broadcast %cst_47 : f32 to vector<8x128xf32>
    %89 = arith.select %28, %87, %88 : vector<8x128xi1>, vector<8x128xf32>
    %c8_i32_48 = arith.constant 8 : i32
    %90 = arith.muli %c1_i32, %c8_i32_48 : i32
    %91 = arith.index_cast %90 : i32 to index
    %c0_49 = arith.constant 0 : index
    %92 = vector.load %arg14[%91, %c0_49] : memref<64x128xf32, #tpu.memory_space<vmem>>, vector<8x128xf32>
    tpu.vector_store %arg14[%91, %c0_49], %89 {strides = array<i32>} : memref<64x128xf32, #tpu.memory_space<vmem>>, vector<8x128xf32>,
    %c2_i32 = arith.constant 2 : i32
    %c8_i32_50 = arith.constant 8 : i32
    %93 = arith.muli %c2_i32, %c8_i32_50 : i32
    %94 = arith.index_cast %93 : i32 to index
    %c0_51 = arith.constant 0 : index
    %95 = vector.load %arg15[%94, %c0_51] : memref<64x128xf32, #tpu.memory_space<vmem>>, vector<8x128xf32>
    %c0_52 = arith.constant 0 : index
    %c0_53 = arith.constant 0 : index
    %96 = vector.load %arg8[%c0_52, %c0_53] : memref<128x128xf32, #tpu.memory_space<vmem>>, vector<128x128xf32>
    %cst_54 = arith.constant dense<0.000000e+00> : vector<8x128xf32>
    %97 = tpu.matmul %89, %96, %cst_54 {dimension_numbers = #tpu.dot_dimension_numbers<[1], [0], [0], [1], [0, 0, 1, 1], [], []>} : vector<8x128xf32>, vector<128x128xf32>, vector<8x128xf32> -> vector<8x128xf32>
    %98 = arith.addf %95, %97 : vector<8x128xf32>
    %99 = arith.negf %98 : vector<8x128xf32>
    %100 = math.exp %99 : vector<8x128xf32>
    %cst_55 = arith.constant 1.000000e+00 : f32
    %101 = vector.broadcast %cst_55 : f32 to vector<8x128xf32>
    %102 = arith.addf %101, %100 : vector<8x128xf32>
    %103 = arith.divf %101, %102 : vector<8x128xf32>
    %104 = math.tanh %98 : vector<8x128xf32>
    %c64_i32_56 = arith.constant 64 : i32
    %105 = tpu.dynamic_rotate %104 by %c64_i32_56 dim 1 : vector<8x128xf32>, i32 -> vector<8x128xf32>
    %106 = arith.select %24, %85, %105 : vector<8x128xi1>, vector<8x128xf32>
    %107 = arith.mulf %103, %106 : vector<8x128xf32>
    %cst_57 = arith.constant 0.000000e+00 : f32
    %108 = vector.broadcast %cst_57 : f32 to vector<8x128xf32>
    %109 = arith.select %26, %107, %108 : vector<8x128xi1>, vector<8x128xf32>
    %c64_i32_58 = arith.constant 64 : i32
    %110 = tpu.dynamic_rotate %109 by %c64_i32_58 dim 1 : vector<8x128xf32>, i32 -> vector<8x128xf32>
    %111 = arith.addf %109, %110 : vector<8x128xf32>
    %c32_i32_59 = arith.constant 32 : i32
    %112 = tpu.dynamic_rotate %111 by %c32_i32_59 dim 1 : vector<8x128xf32>, i32 -> vector<8x128xf32>
    %113 = arith.addf %111, %112 : vector<8x128xf32>
    %114 = math.tanh %113 : vector<8x128xf32>
    %115 = arith.mulf %103, %114 : vector<8x128xf32>
    %cst_60 = arith.constant 0.000000e+00 : f32
    %116 = vector.broadcast %cst_60 : f32 to vector<8x128xf32>
    %117 = arith.select %28, %115, %116 : vector<8x128xi1>, vector<8x128xf32>
    %c8_i32_61 = arith.constant 8 : i32
    %118 = arith.muli %c2_i32, %c8_i32_61 : i32
    %119 = arith.index_cast %118 : i32 to index
    %c0_62 = arith.constant 0 : index
    %120 = vector.load %arg14[%119, %c0_62] : memref<64x128xf32, #tpu.memory_space<vmem>>, vector<8x128xf32>
    tpu.vector_store %arg14[%119, %c0_62], %117 {strides = array<i32>} : memref<64x128xf32, #tpu.memory_space<vmem>>, vector<8x128xf32>,
    %c3_i32 = arith.constant 3 : i32
    %c8_i32_63 = arith.constant 8 : i32
    %121 = arith.muli %c3_i32, %c8_i32_63 : i32
    %122 = arith.index_cast %121 : i32 to index
    %c0_64 = arith.constant 0 : index
    %123 = vector.load %arg15[%122, %c0_64] : memref<64x128xf32, #tpu.memory_space<vmem>>, vector<8x128xf32>
    %c0_65 = arith.constant 0 : index
    %c0_66 = arith.constant 0 : index
    %124 = vector.load %arg8[%c0_65, %c0_66] : memref<128x128xf32, #tpu.memory_space<vmem>>, vector<128x128xf32>
    %cst_67 = arith.constant dense<0.000000e+00> : vector<8x128xf32>
    %125 = tpu.matmul %117, %124, %cst_67 {dimension_numbers = #tpu.dot_dimension_numbers<[1], [0], [0], [1], [0, 0, 1, 1], [], []>} : vector<8x128xf32>, vector<128x128xf32>, vector<8x128xf32> -> vector<8x128xf32>
    %126 = arith.addf %123, %125 : vector<8x128xf32>
    %127 = arith.negf %126 : vector<8x128xf32>
    %128 = math.exp %127 : vector<8x128xf32>
    %cst_68 = arith.constant 1.000000e+00 : f32
    %129 = vector.broadcast %cst_68 : f32 to vector<8x128xf32>
    %130 = arith.addf %129, %128 : vector<8x128xf32>
    %131 = arith.divf %129, %130 : vector<8x128xf32>
    %132 = math.tanh %126 : vector<8x128xf32>
    %c64_i32_69 = arith.constant 64 : i32
    %133 = tpu.dynamic_rotate %132 by %c64_i32_69 dim 1 : vector<8x128xf32>, i32 -> vector<8x128xf32>
    %134 = arith.select %24, %113, %133 : vector<8x128xi1>, vector<8x128xf32>
    %135 = arith.mulf %131, %134 : vector<8x128xf32>
    %cst_70 = arith.constant 0.000000e+00 : f32
    %136 = vector.broadcast %cst_70 : f32 to vector<8x128xf32>
    %137 = arith.select %26, %135, %136 : vector<8x128xi1>, vector<8x128xf32>
    %c64_i32_71 = arith.constant 64 : i32
    %138 = tpu.dynamic_rotate %137 by %c64_i32_71 dim 1 : vector<8x128xf32>, i32 -> vector<8x128xf32>
    %139 = arith.addf %137, %138 : vector<8x128xf32>
    %c32_i32_72 = arith.constant 32 : i32
    %140 = tpu.dynamic_rotate %139 by %c32_i32_72 dim 1 : vector<8x128xf32>, i32 -> vector<8x128xf32>
    %141 = arith.addf %139, %140 : vector<8x128xf32>
    %142 = math.tanh %141 : vector<8x128xf32>
    %143 = arith.mulf %131, %142 : vector<8x128xf32>
    %cst_73 = arith.constant 0.000000e+00 : f32
    %144 = vector.broadcast %cst_73 : f32 to vector<8x128xf32>
    %145 = arith.select %28, %143, %144 : vector<8x128xi1>, vector<8x128xf32>
    %c8_i32_74 = arith.constant 8 : i32
    %146 = arith.muli %c3_i32, %c8_i32_74 : i32
    %147 = arith.index_cast %146 : i32 to index
    %c0_75 = arith.constant 0 : index
    %148 = vector.load %arg14[%147, %c0_75] : memref<64x128xf32, #tpu.memory_space<vmem>>, vector<8x128xf32>
    tpu.vector_store %arg14[%147, %c0_75], %145 {strides = array<i32>} : memref<64x128xf32, #tpu.memory_space<vmem>>, vector<8x128xf32>,
    %c4_i32 = arith.constant 4 : i32
    %c8_i32_76 = arith.constant 8 : i32
    %149 = arith.muli %c4_i32, %c8_i32_76 : i32
    %150 = arith.index_cast %149 : i32 to index
    %c0_77 = arith.constant 0 : index
    %151 = vector.load %arg15[%150, %c0_77] : memref<64x128xf32, #tpu.memory_space<vmem>>, vector<8x128xf32>
    %c0_78 = arith.constant 0 : index
    %c0_79 = arith.constant 0 : index
    %152 = vector.load %arg8[%c0_78, %c0_79] : memref<128x128xf32, #tpu.memory_space<vmem>>, vector<128x128xf32>
    %cst_80 = arith.constant dense<0.000000e+00> : vector<8x128xf32>
    %153 = tpu.matmul %145, %152, %cst_80 {dimension_numbers = #tpu.dot_dimension_numbers<[1], [0], [0], [1], [0, 0, 1, 1], [], []>} : vector<8x128xf32>, vector<128x128xf32>, vector<8x128xf32> -> vector<8x128xf32>
    %154 = arith.addf %151, %153 : vector<8x128xf32>
    %155 = arith.negf %154 : vector<8x128xf32>
    %156 = math.exp %155 : vector<8x128xf32>
    %cst_81 = arith.constant 1.000000e+00 : f32
    %157 = vector.broadcast %cst_81 : f32 to vector<8x128xf32>
    %158 = arith.addf %157, %156 : vector<8x128xf32>
    %159 = arith.divf %157, %158 : vector<8x128xf32>
    %160 = math.tanh %154 : vector<8x128xf32>
    %c64_i32_82 = arith.constant 64 : i32
    %161 = tpu.dynamic_rotate %160 by %c64_i32_82 dim 1 : vector<8x128xf32>, i32 -> vector<8x128xf32>
    %162 = arith.select %24, %141, %161 : vector<8x128xi1>, vector<8x128xf32>
    %163 = arith.mulf %159, %162 : vector<8x128xf32>
    %cst_83 = arith.constant 0.000000e+00 : f32
    %164 = vector.broadcast %cst_83 : f32 to vector<8x128xf32>
    %165 = arith.select %26, %163, %164 : vector<8x128xi1>, vector<8x128xf32>
    %c64_i32_84 = arith.constant 64 : i32
    %166 = tpu.dynamic_rotate %165 by %c64_i32_84 dim 1 : vector<8x128xf32>, i32 -> vector<8x128xf32>
    %167 = arith.addf %165, %166 : vector<8x128xf32>
    %c32_i32_85 = arith.constant 32 : i32
    %168 = tpu.dynamic_rotate %167 by %c32_i32_85 dim 1 : vector<8x128xf32>, i32 -> vector<8x128xf32>
    %169 = arith.addf %167, %168 : vector<8x128xf32>
    %170 = math.tanh %169 : vector<8x128xf32>
    %171 = arith.mulf %159, %170 : vector<8x128xf32>
    %cst_86 = arith.constant 0.000000e+00 : f32
    %172 = vector.broadcast %cst_86 : f32 to vector<8x128xf32>
    %173 = arith.select %28, %171, %172 : vector<8x128xi1>, vector<8x128xf32>
    %c8_i32_87 = arith.constant 8 : i32
    %174 = arith.muli %c4_i32, %c8_i32_87 : i32
    %175 = arith.index_cast %174 : i32 to index
    %c0_88 = arith.constant 0 : index
    %176 = vector.load %arg14[%175, %c0_88] : memref<64x128xf32, #tpu.memory_space<vmem>>, vector<8x128xf32>
    tpu.vector_store %arg14[%175, %c0_88], %173 {strides = array<i32>} : memref<64x128xf32, #tpu.memory_space<vmem>>, vector<8x128xf32>,
    %c5_i32 = arith.constant 5 : i32
    %c8_i32_89 = arith.constant 8 : i32
    %177 = arith.muli %c5_i32, %c8_i32_89 : i32
    %178 = arith.index_cast %177 : i32 to index
    %c0_90 = arith.constant 0 : index
    %179 = vector.load %arg15[%178, %c0_90] : memref<64x128xf32, #tpu.memory_space<vmem>>, vector<8x128xf32>
    %c0_91 = arith.constant 0 : index
    %c0_92 = arith.constant 0 : index
    %180 = vector.load %arg8[%c0_91, %c0_92] : memref<128x128xf32, #tpu.memory_space<vmem>>, vector<128x128xf32>
    %cst_93 = arith.constant dense<0.000000e+00> : vector<8x128xf32>
    %181 = tpu.matmul %173, %180, %cst_93 {dimension_numbers = #tpu.dot_dimension_numbers<[1], [0], [0], [1], [0, 0, 1, 1], [], []>} : vector<8x128xf32>, vector<128x128xf32>, vector<8x128xf32> -> vector<8x128xf32>
    %182 = arith.addf %179, %181 : vector<8x128xf32>
    %183 = arith.negf %182 : vector<8x128xf32>
    %184 = math.exp %183 : vector<8x128xf32>
    %cst_94 = arith.constant 1.000000e+00 : f32
    %185 = vector.broadcast %cst_94 : f32 to vector<8x128xf32>
    %186 = arith.addf %185, %184 : vector<8x128xf32>
    %187 = arith.divf %185, %186 : vector<8x128xf32>
    %188 = math.tanh %182 : vector<8x128xf32>
    %c64_i32_95 = arith.constant 64 : i32
    %189 = tpu.dynamic_rotate %188 by %c64_i32_95 dim 1 : vector<8x128xf32>, i32 -> vector<8x128xf32>
    %190 = arith.select %24, %169, %189 : vector<8x128xi1>, vector<8x128xf32>
    %191 = arith.mulf %187, %190 : vector<8x128xf32>
    %cst_96 = arith.constant 0.000000e+00 : f32
    %192 = vector.broadcast %cst_96 : f32 to vector<8x128xf32>
    %193 = arith.select %26, %191, %192 : vector<8x128xi1>, vector<8x128xf32>
    %c64_i32_97 = arith.constant 64 : i32
    %194 = tpu.dynamic_rotate %193 by %c64_i32_97 dim 1 : vector<8x128xf32>, i32 -> vector<8x128xf32>
    %195 = arith.addf %193, %194 : vector<8x128xf32>
    %c32_i32_98 = arith.constant 32 : i32
    %196 = tpu.dynamic_rotate %195 by %c32_i32_98 dim 1 : vector<8x128xf32>, i32 -> vector<8x128xf32>
    %197 = arith.addf %195, %196 : vector<8x128xf32>
    %198 = math.tanh %197 : vector<8x128xf32>
    %199 = arith.mulf %187, %198 : vector<8x128xf32>
    %cst_99 = arith.constant 0.000000e+00 : f32
    %200 = vector.broadcast %cst_99 : f32 to vector<8x128xf32>
    %201 = arith.select %28, %199, %200 : vector<8x128xi1>, vector<8x128xf32>
    %c8_i32_100 = arith.constant 8 : i32
    %202 = arith.muli %c5_i32, %c8_i32_100 : i32
    %203 = arith.index_cast %202 : i32 to index
    %c0_101 = arith.constant 0 : index
    %204 = vector.load %arg14[%203, %c0_101] : memref<64x128xf32, #tpu.memory_space<vmem>>, vector<8x128xf32>
    tpu.vector_store %arg14[%203, %c0_101], %201 {strides = array<i32>} : memref<64x128xf32, #tpu.memory_space<vmem>>, vector<8x128xf32>,
    %c6_i32 = arith.constant 6 : i32
    %c8_i32_102 = arith.constant 8 : i32
    %205 = arith.muli %c6_i32, %c8_i32_102 : i32
    %206 = arith.index_cast %205 : i32 to index
    %c0_103 = arith.constant 0 : index
    %207 = vector.load %arg15[%206, %c0_103] : memref<64x128xf32, #tpu.memory_space<vmem>>, vector<8x128xf32>
    %c0_104 = arith.constant 0 : index
    %c0_105 = arith.constant 0 : index
    %208 = vector.load %arg8[%c0_104, %c0_105] : memref<128x128xf32, #tpu.memory_space<vmem>>, vector<128x128xf32>
    %cst_106 = arith.constant dense<0.000000e+00> : vector<8x128xf32>
    %209 = tpu.matmul %201, %208, %cst_106 {dimension_numbers = #tpu.dot_dimension_numbers<[1], [0], [0], [1], [0, 0, 1, 1], [], []>} : vector<8x128xf32>, vector<128x128xf32>, vector<8x128xf32> -> vector<8x128xf32>
    %210 = arith.addf %207, %209 : vector<8x128xf32>
    %211 = arith.negf %210 : vector<8x128xf32>
    %212 = math.exp %211 : vector<8x128xf32>
    %cst_107 = arith.constant 1.000000e+00 : f32
    %213 = vector.broadcast %cst_107 : f32 to vector<8x128xf32>
    %214 = arith.addf %213, %212 : vector<8x128xf32>
    %215 = arith.divf %213, %214 : vector<8x128xf32>
    %216 = math.tanh %210 : vector<8x128xf32>
    %c64_i32_108 = arith.constant 64 : i32
    %217 = tpu.dynamic_rotate %216 by %c64_i32_108 dim 1 : vector<8x128xf32>, i32 -> vector<8x128xf32>
    %218 = arith.select %24, %197, %217 : vector<8x128xi1>, vector<8x128xf32>
    %219 = arith.mulf %215, %218 : vector<8x128xf32>
    %cst_109 = arith.constant 0.000000e+00 : f32
    %220 = vector.broadcast %cst_109 : f32 to vector<8x128xf32>
    %221 = arith.select %26, %219, %220 : vector<8x128xi1>, vector<8x128xf32>
    %c64_i32_110 = arith.constant 64 : i32
    %222 = tpu.dynamic_rotate %221 by %c64_i32_110 dim 1 : vector<8x128xf32>, i32 -> vector<8x128xf32>
    %223 = arith.addf %221, %222 : vector<8x128xf32>
    %c32_i32_111 = arith.constant 32 : i32
    %224 = tpu.dynamic_rotate %223 by %c32_i32_111 dim 1 : vector<8x128xf32>, i32 -> vector<8x128xf32>
    %225 = arith.addf %223, %224 : vector<8x128xf32>
    %226 = math.tanh %225 : vector<8x128xf32>
    %227 = arith.mulf %215, %226 : vector<8x128xf32>
    %cst_112 = arith.constant 0.000000e+00 : f32
    %228 = vector.broadcast %cst_112 : f32 to vector<8x128xf32>
    %229 = arith.select %28, %227, %228 : vector<8x128xi1>, vector<8x128xf32>
    %c8_i32_113 = arith.constant 8 : i32
    %230 = arith.muli %c6_i32, %c8_i32_113 : i32
    %231 = arith.index_cast %230 : i32 to index
    %c0_114 = arith.constant 0 : index
    %232 = vector.load %arg14[%231, %c0_114] : memref<64x128xf32, #tpu.memory_space<vmem>>, vector<8x128xf32>
    tpu.vector_store %arg14[%231, %c0_114], %229 {strides = array<i32>} : memref<64x128xf32, #tpu.memory_space<vmem>>, vector<8x128xf32>,
    %c7_i32 = arith.constant 7 : i32
    %c8_i32_115 = arith.constant 8 : i32
    %233 = arith.muli %c7_i32, %c8_i32_115 : i32
    %234 = arith.index_cast %233 : i32 to index
    %c0_116 = arith.constant 0 : index
    %235 = vector.load %arg15[%234, %c0_116] : memref<64x128xf32, #tpu.memory_space<vmem>>, vector<8x128xf32>
    %c0_117 = arith.constant 0 : index
    %c0_118 = arith.constant 0 : index
    %236 = vector.load %arg8[%c0_117, %c0_118] : memref<128x128xf32, #tpu.memory_space<vmem>>, vector<128x128xf32>
    %cst_119 = arith.constant dense<0.000000e+00> : vector<8x128xf32>
    %237 = tpu.matmul %229, %236, %cst_119 {dimension_numbers = #tpu.dot_dimension_numbers<[1], [0], [0], [1], [0, 0, 1, 1], [], []>} : vector<8x128xf32>, vector<128x128xf32>, vector<8x128xf32> -> vector<8x128xf32>
    %238 = arith.addf %235, %237 : vector<8x128xf32>
    %239 = arith.negf %238 : vector<8x128xf32>
    %240 = math.exp %239 : vector<8x128xf32>
    %cst_120 = arith.constant 1.000000e+00 : f32
    %241 = vector.broadcast %cst_120 : f32 to vector<8x128xf32>
    %242 = arith.addf %241, %240 : vector<8x128xf32>
    %243 = arith.divf %241, %242 : vector<8x128xf32>
    %244 = math.tanh %238 : vector<8x128xf32>
    %c64_i32_121 = arith.constant 64 : i32
    %245 = tpu.dynamic_rotate %244 by %c64_i32_121 dim 1 : vector<8x128xf32>, i32 -> vector<8x128xf32>
    %246 = arith.select %24, %225, %245 : vector<8x128xi1>, vector<8x128xf32>
    %247 = arith.mulf %243, %246 : vector<8x128xf32>
    %cst_122 = arith.constant 0.000000e+00 : f32
    %248 = vector.broadcast %cst_122 : f32 to vector<8x128xf32>
    %249 = arith.select %26, %247, %248 : vector<8x128xi1>, vector<8x128xf32>
    %c64_i32_123 = arith.constant 64 : i32
    %250 = tpu.dynamic_rotate %249 by %c64_i32_123 dim 1 : vector<8x128xf32>, i32 -> vector<8x128xf32>
    %251 = arith.addf %249, %250 : vector<8x128xf32>
    %c32_i32_124 = arith.constant 32 : i32
    %252 = tpu.dynamic_rotate %251 by %c32_i32_124 dim 1 : vector<8x128xf32>, i32 -> vector<8x128xf32>
    %253 = arith.addf %251, %252 : vector<8x128xf32>
    %254 = math.tanh %253 : vector<8x128xf32>
    %255 = arith.mulf %243, %254 : vector<8x128xf32>
    %cst_125 = arith.constant 0.000000e+00 : f32
    %256 = vector.broadcast %cst_125 : f32 to vector<8x128xf32>
    %257 = arith.select %28, %255, %256 : vector<8x128xi1>, vector<8x128xf32>
    %c8_i32_126 = arith.constant 8 : i32
    %258 = arith.muli %c7_i32, %c8_i32_126 : i32
    %259 = arith.index_cast %258 : i32 to index
    %c0_127 = arith.constant 0 : index
    %260 = vector.load %arg14[%259, %c0_127] : memref<64x128xf32, #tpu.memory_space<vmem>>, vector<8x128xf32>
    tpu.vector_store %arg14[%259, %c0_127], %257 {strides = array<i32>} : memref<64x128xf32, #tpu.memory_space<vmem>>, vector<8x128xf32>,
    %c8_i32_128 = arith.constant 8 : i32
    %c0_129 = arith.constant 0 : index
    %c0_130 = arith.constant 0 : index
    %261 = vector.load %arg14[%c0_129, %c0_130] : memref<64x128xf32, #tpu.memory_space<vmem>>, vector<64x128xf32>
    %c0_131 = arith.constant 0 : index
    %c0_132 = arith.constant 0 : index
    %262 = vector.load %arg10[%c0_131, %c0_132] : memref<128x128xf32, #tpu.memory_space<vmem>>, vector<128x128xf32>
    %cst_133 = arith.constant dense<0.000000e+00> : vector<64x128xf32>
    %263 = tpu.matmul %261, %262, %cst_133 {dimension_numbers = #tpu.dot_dimension_numbers<[1], [0], [0], [1], [0, 0, 1, 1], [], []>} : vector<64x128xf32>, vector<128x128xf32>, vector<64x128xf32> -> vector<64x128xf32>
    %c0_134 = arith.constant 0 : index
    %c0_135 = arith.constant 0 : index
    %264 = vector.load %arg12[%c0_134, %c0_135] : memref<1x128xf32, #tpu.memory_space<vmem>>, vector<1x128xf32>
    %265 = vector.broadcast %264 : vector<1x128xf32> to vector<64x128xf32>
    %266 = arith.addf %263, %265 : vector<64x128xf32>
    %c0_136 = arith.constant 0 : index
    %c0_137 = arith.constant 0 : index
    %267 = vector.load %arg15[%c0_136, %c0_137] : memref<64x128xf32, #tpu.memory_space<vmem>>, vector<64x128xf32>
    tpu.vector_store %arg15[%c0_136, %c0_137], %266 {strides = array<i32>} : memref<64x128xf32, #tpu.memory_space<vmem>>, vector<64x128xf32>,
    %cst_138 = arith.constant 0.000000e+00 : f32
    %268 = vector.broadcast %cst_138 : f32 to vector<8x128xf32>
    %c0_i32_139 = arith.constant 0 : i32
    %c8_i32_140 = arith.constant 8 : i32
    %269 = arith.muli %c0_i32_139, %c8_i32_140 : i32
    %270 = arith.index_cast %269 : i32 to index
    %c0_141 = arith.constant 0 : index
    %271 = vector.load %arg15[%270, %c0_141] : memref<64x128xf32, #tpu.memory_space<vmem>>, vector<8x128xf32>
    %c0_142 = arith.constant 0 : index
    %c0_143 = arith.constant 0 : index
    %272 = vector.load %arg11[%c0_142, %c0_143] : memref<128x128xf32, #tpu.memory_space<vmem>>, vector<128x128xf32>
    %cst_144 = arith.constant dense<0.000000e+00> : vector<8x128xf32>
    %273 = tpu.matmul %268, %272, %cst_144 {dimension_numbers = #tpu.dot_dimension_numbers<[1], [0], [0], [1], [0, 0, 1, 1], [], []>} : vector<8x128xf32>, vector<128x128xf32>, vector<8x128xf32> -> vector<8x128xf32>
    %274 = arith.addf %271, %273 : vector<8x128xf32>
    %275 = arith.negf %274 : vector<8x128xf32>
    %276 = math.exp %275 : vector<8x128xf32>
    %cst_145 = arith.constant 1.000000e+00 : f32
    %277 = vector.broadcast %cst_145 : f32 to vector<8x128xf32>
    %278 = arith.addf %277, %276 : vector<8x128xf32>
    %279 = arith.divf %277, %278 : vector<8x128xf32>
    %280 = math.tanh %274 : vector<8x128xf32>
    %c64_i32_146 = arith.constant 64 : i32
    %281 = tpu.dynamic_rotate %280 by %c64_i32_146 dim 1 : vector<8x128xf32>, i32 -> vector<8x128xf32>
    %282 = arith.select %24, %268, %281 : vector<8x128xi1>, vector<8x128xf32>
    %283 = arith.mulf %279, %282 : vector<8x128xf32>
    %cst_147 = arith.constant 0.000000e+00 : f32
    %284 = vector.broadcast %cst_147 : f32 to vector<8x128xf32>
    %285 = arith.select %26, %283, %284 : vector<8x128xi1>, vector<8x128xf32>
    %c64_i32_148 = arith.constant 64 : i32
    %286 = tpu.dynamic_rotate %285 by %c64_i32_148 dim 1 : vector<8x128xf32>, i32 -> vector<8x128xf32>
    %287 = arith.addf %285, %286 : vector<8x128xf32>
    %c32_i32_149 = arith.constant 32 : i32
    %288 = tpu.dynamic_rotate %287 by %c32_i32_149 dim 1 : vector<8x128xf32>, i32 -> vector<8x128xf32>
    %289 = arith.addf %287, %288 : vector<8x128xf32>
    %290 = math.tanh %289 : vector<8x128xf32>
    %291 = arith.mulf %279, %290 : vector<8x128xf32>
    %cst_150 = arith.constant 0.000000e+00 : f32
    %292 = vector.broadcast %cst_150 : f32 to vector<8x128xf32>
    %293 = arith.select %28, %291, %292 : vector<8x128xi1>, vector<8x128xf32>
    %c8_i32_151 = arith.constant 8 : i32
    %294 = arith.muli %c0_i32_139, %c8_i32_151 : i32
    %295 = arith.index_cast %294 : i32 to index
    %c0_152 = arith.constant 0 : index
    %296 = vector.load %arg14[%295, %c0_152] : memref<64x128xf32, #tpu.memory_space<vmem>>, vector<8x128xf32>
    tpu.vector_store %arg14[%295, %c0_152], %293 {strides = array<i32>} : memref<64x128xf32, #tpu.memory_space<vmem>>, vector<8x128xf32>,
    %c1_i32_153 = arith.constant 1 : i32
    %c8_i32_154 = arith.constant 8 : i32
    %297 = arith.muli %c1_i32_153, %c8_i32_154 : i32
    %298 = arith.index_cast %297 : i32 to index
    %c0_155 = arith.constant 0 : index
    %299 = vector.load %arg15[%298, %c0_155] : memref<64x128xf32, #tpu.memory_space<vmem>>, vector<8x128xf32>
    %c0_156 = arith.constant 0 : index
    %c0_157 = arith.constant 0 : index
    %300 = vector.load %arg11[%c0_156, %c0_157] : memref<128x128xf32, #tpu.memory_space<vmem>>, vector<128x128xf32>
    %cst_158 = arith.constant dense<0.000000e+00> : vector<8x128xf32>
    %301 = tpu.matmul %293, %300, %cst_158 {dimension_numbers = #tpu.dot_dimension_numbers<[1], [0], [0], [1], [0, 0, 1, 1], [], []>} : vector<8x128xf32>, vector<128x128xf32>, vector<8x128xf32> -> vector<8x128xf32>
    %302 = arith.addf %299, %301 : vector<8x128xf32>
    %303 = arith.negf %302 : vector<8x128xf32>
    %304 = math.exp %303 : vector<8x128xf32>
    %cst_159 = arith.constant 1.000000e+00 : f32
    %305 = vector.broadcast %cst_159 : f32 to vector<8x128xf32>
    %306 = arith.addf %305, %304 : vector<8x128xf32>
    %307 = arith.divf %305, %306 : vector<8x128xf32>
    %308 = math.tanh %302 : vector<8x128xf32>
    %c64_i32_160 = arith.constant 64 : i32
    %309 = tpu.dynamic_rotate %308 by %c64_i32_160 dim 1 : vector<8x128xf32>, i32 -> vector<8x128xf32>
    %310 = arith.select %24, %289, %309 : vector<8x128xi1>, vector<8x128xf32>
    %311 = arith.mulf %307, %310 : vector<8x128xf32>
    %cst_161 = arith.constant 0.000000e+00 : f32
    %312 = vector.broadcast %cst_161 : f32 to vector<8x128xf32>
    %313 = arith.select %26, %311, %312 : vector<8x128xi1>, vector<8x128xf32>
    %c64_i32_162 = arith.constant 64 : i32
    %314 = tpu.dynamic_rotate %313 by %c64_i32_162 dim 1 : vector<8x128xf32>, i32 -> vector<8x128xf32>
    %315 = arith.addf %313, %314 : vector<8x128xf32>
    %c32_i32_163 = arith.constant 32 : i32
    %316 = tpu.dynamic_rotate %315 by %c32_i32_163 dim 1 : vector<8x128xf32>, i32 -> vector<8x128xf32>
    %317 = arith.addf %315, %316 : vector<8x128xf32>
    %318 = math.tanh %317 : vector<8x128xf32>
    %319 = arith.mulf %307, %318 : vector<8x128xf32>
    %cst_164 = arith.constant 0.000000e+00 : f32
    %320 = vector.broadcast %cst_164 : f32 to vector<8x128xf32>
    %321 = arith.select %28, %319, %320 : vector<8x128xi1>, vector<8x128xf32>
    %c8_i32_165 = arith.constant 8 : i32
    %322 = arith.muli %c1_i32_153, %c8_i32_165 : i32
    %323 = arith.index_cast %322 : i32 to index
    %c0_166 = arith.constant 0 : index
    %324 = vector.load %arg14[%323, %c0_166] : memref<64x128xf32, #tpu.memory_space<vmem>>, vector<8x128xf32>
    tpu.vector_store %arg14[%323, %c0_166], %321 {strides = array<i32>} : memref<64x128xf32, #tpu.memory_space<vmem>>, vector<8x128xf32>,
    %c2_i32_167 = arith.constant 2 : i32
    %c8_i32_168 = arith.constant 8 : i32
    %325 = arith.muli %c2_i32_167, %c8_i32_168 : i32
    %326 = arith.index_cast %325 : i32 to index
    %c0_169 = arith.constant 0 : index
    %327 = vector.load %arg15[%326, %c0_169] : memref<64x128xf32, #tpu.memory_space<vmem>>, vector<8x128xf32>
    %c0_170 = arith.constant 0 : index
    %c0_171 = arith.constant 0 : index
    %328 = vector.load %arg11[%c0_170, %c0_171] : memref<128x128xf32, #tpu.memory_space<vmem>>, vector<128x128xf32>
    %cst_172 = arith.constant dense<0.000000e+00> : vector<8x128xf32>
    %329 = tpu.matmul %321, %328, %cst_172 {dimension_numbers = #tpu.dot_dimension_numbers<[1], [0], [0], [1], [0, 0, 1, 1], [], []>} : vector<8x128xf32>, vector<128x128xf32>, vector<8x128xf32> -> vector<8x128xf32>
    %330 = arith.addf %327, %329 : vector<8x128xf32>
    %331 = arith.negf %330 : vector<8x128xf32>
    %332 = math.exp %331 : vector<8x128xf32>
    %cst_173 = arith.constant 1.000000e+00 : f32
    %333 = vector.broadcast %cst_173 : f32 to vector<8x128xf32>
    %334 = arith.addf %333, %332 : vector<8x128xf32>
    %335 = arith.divf %333, %334 : vector<8x128xf32>
    %336 = math.tanh %330 : vector<8x128xf32>
    %c64_i32_174 = arith.constant 64 : i32
    %337 = tpu.dynamic_rotate %336 by %c64_i32_174 dim 1 : vector<8x128xf32>, i32 -> vector<8x128xf32>
    %338 = arith.select %24, %317, %337 : vector<8x128xi1>, vector<8x128xf32>
    %339 = arith.mulf %335, %338 : vector<8x128xf32>
    %cst_175 = arith.constant 0.000000e+00 : f32
    %340 = vector.broadcast %cst_175 : f32 to vector<8x128xf32>
    %341 = arith.select %26, %339, %340 : vector<8x128xi1>, vector<8x128xf32>
    %c64_i32_176 = arith.constant 64 : i32
    %342 = tpu.dynamic_rotate %341 by %c64_i32_176 dim 1 : vector<8x128xf32>, i32 -> vector<8x128xf32>
    %343 = arith.addf %341, %342 : vector<8x128xf32>
    %c32_i32_177 = arith.constant 32 : i32
    %344 = tpu.dynamic_rotate %343 by %c32_i32_177 dim 1 : vector<8x128xf32>, i32 -> vector<8x128xf32>
    %345 = arith.addf %343, %344 : vector<8x128xf32>
    %346 = math.tanh %345 : vector<8x128xf32>
    %347 = arith.mulf %335, %346 : vector<8x128xf32>
    %cst_178 = arith.constant 0.000000e+00 : f32
    %348 = vector.broadcast %cst_178 : f32 to vector<8x128xf32>
    %349 = arith.select %28, %347, %348 : vector<8x128xi1>, vector<8x128xf32>
    %c8_i32_179 = arith.constant 8 : i32
    %350 = arith.muli %c2_i32_167, %c8_i32_179 : i32
    %351 = arith.index_cast %350 : i32 to index
    %c0_180 = arith.constant 0 : index
    %352 = vector.load %arg14[%351, %c0_180] : memref<64x128xf32, #tpu.memory_space<vmem>>, vector<8x128xf32>
    tpu.vector_store %arg14[%351, %c0_180], %349 {strides = array<i32>} : memref<64x128xf32, #tpu.memory_space<vmem>>, vector<8x128xf32>,
    %c3_i32_181 = arith.constant 3 : i32
    %c8_i32_182 = arith.constant 8 : i32
    %353 = arith.muli %c3_i32_181, %c8_i32_182 : i32
    %354 = arith.index_cast %353 : i32 to index
    %c0_183 = arith.constant 0 : index
    %355 = vector.load %arg15[%354, %c0_183] : memref<64x128xf32, #tpu.memory_space<vmem>>, vector<8x128xf32>
    %c0_184 = arith.constant 0 : index
    %c0_185 = arith.constant 0 : index
    %356 = vector.load %arg11[%c0_184, %c0_185] : memref<128x128xf32, #tpu.memory_space<vmem>>, vector<128x128xf32>
    %cst_186 = arith.constant dense<0.000000e+00> : vector<8x128xf32>
    %357 = tpu.matmul %349, %356, %cst_186 {dimension_numbers = #tpu.dot_dimension_numbers<[1], [0], [0], [1], [0, 0, 1, 1], [], []>} : vector<8x128xf32>, vector<128x128xf32>, vector<8x128xf32> -> vector<8x128xf32>
    %358 = arith.addf %355, %357 : vector<8x128xf32>
    %359 = arith.negf %358 : vector<8x128xf32>
    %360 = math.exp %359 : vector<8x128xf32>
    %cst_187 = arith.constant 1.000000e+00 : f32
    %361 = vector.broadcast %cst_187 : f32 to vector<8x128xf32>
    %362 = arith.addf %361, %360 : vector<8x128xf32>
    %363 = arith.divf %361, %362 : vector<8x128xf32>
    %364 = math.tanh %358 : vector<8x128xf32>
    %c64_i32_188 = arith.constant 64 : i32
    %365 = tpu.dynamic_rotate %364 by %c64_i32_188 dim 1 : vector<8x128xf32>, i32 -> vector<8x128xf32>
    %366 = arith.select %24, %345, %365 : vector<8x128xi1>, vector<8x128xf32>
    %367 = arith.mulf %363, %366 : vector<8x128xf32>
    %cst_189 = arith.constant 0.000000e+00 : f32
    %368 = vector.broadcast %cst_189 : f32 to vector<8x128xf32>
    %369 = arith.select %26, %367, %368 : vector<8x128xi1>, vector<8x128xf32>
    %c64_i32_190 = arith.constant 64 : i32
    %370 = tpu.dynamic_rotate %369 by %c64_i32_190 dim 1 : vector<8x128xf32>, i32 -> vector<8x128xf32>
    %371 = arith.addf %369, %370 : vector<8x128xf32>
    %c32_i32_191 = arith.constant 32 : i32
    %372 = tpu.dynamic_rotate %371 by %c32_i32_191 dim 1 : vector<8x128xf32>, i32 -> vector<8x128xf32>
    %373 = arith.addf %371, %372 : vector<8x128xf32>
    %374 = math.tanh %373 : vector<8x128xf32>
    %375 = arith.mulf %363, %374 : vector<8x128xf32>
    %cst_192 = arith.constant 0.000000e+00 : f32
    %376 = vector.broadcast %cst_192 : f32 to vector<8x128xf32>
    %377 = arith.select %28, %375, %376 : vector<8x128xi1>, vector<8x128xf32>
    %c8_i32_193 = arith.constant 8 : i32
    %378 = arith.muli %c3_i32_181, %c8_i32_193 : i32
    %379 = arith.index_cast %378 : i32 to index
    %c0_194 = arith.constant 0 : index
    %380 = vector.load %arg14[%379, %c0_194] : memref<64x128xf32, #tpu.memory_space<vmem>>, vector<8x128xf32>
    tpu.vector_store %arg14[%379, %c0_194], %377 {strides = array<i32>} : memref<64x128xf32, #tpu.memory_space<vmem>>, vector<8x128xf32>,
    %c4_i32_195 = arith.constant 4 : i32
    %c8_i32_196 = arith.constant 8 : i32
    %381 = arith.muli %c4_i32_195, %c8_i32_196 : i32
    %382 = arith.index_cast %381 : i32 to index
    %c0_197 = arith.constant 0 : index
    %383 = vector.load %arg15[%382, %c0_197] : memref<64x128xf32, #tpu.memory_space<vmem>>, vector<8x128xf32>
    %c0_198 = arith.constant 0 : index
    %c0_199 = arith.constant 0 : index
    %384 = vector.load %arg11[%c0_198, %c0_199] : memref<128x128xf32, #tpu.memory_space<vmem>>, vector<128x128xf32>
    %cst_200 = arith.constant dense<0.000000e+00> : vector<8x128xf32>
    %385 = tpu.matmul %377, %384, %cst_200 {dimension_numbers = #tpu.dot_dimension_numbers<[1], [0], [0], [1], [0, 0, 1, 1], [], []>} : vector<8x128xf32>, vector<128x128xf32>, vector<8x128xf32> -> vector<8x128xf32>
    %386 = arith.addf %383, %385 : vector<8x128xf32>
    %387 = arith.negf %386 : vector<8x128xf32>
    %388 = math.exp %387 : vector<8x128xf32>
    %cst_201 = arith.constant 1.000000e+00 : f32
    %389 = vector.broadcast %cst_201 : f32 to vector<8x128xf32>
    %390 = arith.addf %389, %388 : vector<8x128xf32>
    %391 = arith.divf %389, %390 : vector<8x128xf32>
    %392 = math.tanh %386 : vector<8x128xf32>
    %c64_i32_202 = arith.constant 64 : i32
    %393 = tpu.dynamic_rotate %392 by %c64_i32_202 dim 1 : vector<8x128xf32>, i32 -> vector<8x128xf32>
    %394 = arith.select %24, %373, %393 : vector<8x128xi1>, vector<8x128xf32>
    %395 = arith.mulf %391, %394 : vector<8x128xf32>
    %cst_203 = arith.constant 0.000000e+00 : f32
    %396 = vector.broadcast %cst_203 : f32 to vector<8x128xf32>
    %397 = arith.select %26, %395, %396 : vector<8x128xi1>, vector<8x128xf32>
    %c64_i32_204 = arith.constant 64 : i32
    %398 = tpu.dynamic_rotate %397 by %c64_i32_204 dim 1 : vector<8x128xf32>, i32 -> vector<8x128xf32>
    %399 = arith.addf %397, %398 : vector<8x128xf32>
    %c32_i32_205 = arith.constant 32 : i32
    %400 = tpu.dynamic_rotate %399 by %c32_i32_205 dim 1 : vector<8x128xf32>, i32 -> vector<8x128xf32>
    %401 = arith.addf %399, %400 : vector<8x128xf32>
    %402 = math.tanh %401 : vector<8x128xf32>
    %403 = arith.mulf %391, %402 : vector<8x128xf32>
    %cst_206 = arith.constant 0.000000e+00 : f32
    %404 = vector.broadcast %cst_206 : f32 to vector<8x128xf32>
    %405 = arith.select %28, %403, %404 : vector<8x128xi1>, vector<8x128xf32>
    %c8_i32_207 = arith.constant 8 : i32
    %406 = arith.muli %c4_i32_195, %c8_i32_207 : i32
    %407 = arith.index_cast %406 : i32 to index
    %c0_208 = arith.constant 0 : index
    %408 = vector.load %arg14[%407, %c0_208] : memref<64x128xf32, #tpu.memory_space<vmem>>, vector<8x128xf32>
    tpu.vector_store %arg14[%407, %c0_208], %405 {strides = array<i32>} : memref<64x128xf32, #tpu.memory_space<vmem>>, vector<8x128xf32>,
    %c5_i32_209 = arith.constant 5 : i32
    %c8_i32_210 = arith.constant 8 : i32
    %409 = arith.muli %c5_i32_209, %c8_i32_210 : i32
    %410 = arith.index_cast %409 : i32 to index
    %c0_211 = arith.constant 0 : index
    %411 = vector.load %arg15[%410, %c0_211] : memref<64x128xf32, #tpu.memory_space<vmem>>, vector<8x128xf32>
    %c0_212 = arith.constant 0 : index
    %c0_213 = arith.constant 0 : index
    %412 = vector.load %arg11[%c0_212, %c0_213] : memref<128x128xf32, #tpu.memory_space<vmem>>, vector<128x128xf32>
    %cst_214 = arith.constant dense<0.000000e+00> : vector<8x128xf32>
    %413 = tpu.matmul %405, %412, %cst_214 {dimension_numbers = #tpu.dot_dimension_numbers<[1], [0], [0], [1], [0, 0, 1, 1], [], []>} : vector<8x128xf32>, vector<128x128xf32>, vector<8x128xf32> -> vector<8x128xf32>
    %414 = arith.addf %411, %413 : vector<8x128xf32>
    %415 = arith.negf %414 : vector<8x128xf32>
    %416 = math.exp %415 : vector<8x128xf32>
    %cst_215 = arith.constant 1.000000e+00 : f32
    %417 = vector.broadcast %cst_215 : f32 to vector<8x128xf32>
    %418 = arith.addf %417, %416 : vector<8x128xf32>
    %419 = arith.divf %417, %418 : vector<8x128xf32>
    %420 = math.tanh %414 : vector<8x128xf32>
    %c64_i32_216 = arith.constant 64 : i32
    %421 = tpu.dynamic_rotate %420 by %c64_i32_216 dim 1 : vector<8x128xf32>, i32 -> vector<8x128xf32>
    %422 = arith.select %24, %401, %421 : vector<8x128xi1>, vector<8x128xf32>
    %423 = arith.mulf %419, %422 : vector<8x128xf32>
    %cst_217 = arith.constant 0.000000e+00 : f32
    %424 = vector.broadcast %cst_217 : f32 to vector<8x128xf32>
    %425 = arith.select %26, %423, %424 : vector<8x128xi1>, vector<8x128xf32>
    %c64_i32_218 = arith.constant 64 : i32
    %426 = tpu.dynamic_rotate %425 by %c64_i32_218 dim 1 : vector<8x128xf32>, i32 -> vector<8x128xf32>
    %427 = arith.addf %425, %426 : vector<8x128xf32>
    %c32_i32_219 = arith.constant 32 : i32
    %428 = tpu.dynamic_rotate %427 by %c32_i32_219 dim 1 : vector<8x128xf32>, i32 -> vector<8x128xf32>
    %429 = arith.addf %427, %428 : vector<8x128xf32>
    %430 = math.tanh %429 : vector<8x128xf32>
    %431 = arith.mulf %419, %430 : vector<8x128xf32>
    %cst_220 = arith.constant 0.000000e+00 : f32
    %432 = vector.broadcast %cst_220 : f32 to vector<8x128xf32>
    %433 = arith.select %28, %431, %432 : vector<8x128xi1>, vector<8x128xf32>
    %c8_i32_221 = arith.constant 8 : i32
    %434 = arith.muli %c5_i32_209, %c8_i32_221 : i32
    %435 = arith.index_cast %434 : i32 to index
    %c0_222 = arith.constant 0 : index
    %436 = vector.load %arg14[%435, %c0_222] : memref<64x128xf32, #tpu.memory_space<vmem>>, vector<8x128xf32>
    tpu.vector_store %arg14[%435, %c0_222], %433 {strides = array<i32>} : memref<64x128xf32, #tpu.memory_space<vmem>>, vector<8x128xf32>,
    %c6_i32_223 = arith.constant 6 : i32
    %c8_i32_224 = arith.constant 8 : i32
    %437 = arith.muli %c6_i32_223, %c8_i32_224 : i32
    %438 = arith.index_cast %437 : i32 to index
    %c0_225 = arith.constant 0 : index
    %439 = vector.load %arg15[%438, %c0_225] : memref<64x128xf32, #tpu.memory_space<vmem>>, vector<8x128xf32>
    %c0_226 = arith.constant 0 : index
    %c0_227 = arith.constant 0 : index
    %440 = vector.load %arg11[%c0_226, %c0_227] : memref<128x128xf32, #tpu.memory_space<vmem>>, vector<128x128xf32>
    %cst_228 = arith.constant dense<0.000000e+00> : vector<8x128xf32>
    %441 = tpu.matmul %433, %440, %cst_228 {dimension_numbers = #tpu.dot_dimension_numbers<[1], [0], [0], [1], [0, 0, 1, 1], [], []>} : vector<8x128xf32>, vector<128x128xf32>, vector<8x128xf32> -> vector<8x128xf32>
    %442 = arith.addf %439, %441 : vector<8x128xf32>
    %443 = arith.negf %442 : vector<8x128xf32>
    %444 = math.exp %443 : vector<8x128xf32>
    %cst_229 = arith.constant 1.000000e+00 : f32
    %445 = vector.broadcast %cst_229 : f32 to vector<8x128xf32>
    %446 = arith.addf %445, %444 : vector<8x128xf32>
    %447 = arith.divf %445, %446 : vector<8x128xf32>
    %448 = math.tanh %442 : vector<8x128xf32>
    %c64_i32_230 = arith.constant 64 : i32
    %449 = tpu.dynamic_rotate %448 by %c64_i32_230 dim 1 : vector<8x128xf32>, i32 -> vector<8x128xf32>
    %450 = arith.select %24, %429, %449 : vector<8x128xi1>, vector<8x128xf32>
    %451 = arith.mulf %447, %450 : vector<8x128xf32>
    %cst_231 = arith.constant 0.000000e+00 : f32
    %452 = vector.broadcast %cst_231 : f32 to vector<8x128xf32>
    %453 = arith.select %26, %451, %452 : vector<8x128xi1>, vector<8x128xf32>
    %c64_i32_232 = arith.constant 64 : i32
    %454 = tpu.dynamic_rotate %453 by %c64_i32_232 dim 1 : vector<8x128xf32>, i32 -> vector<8x128xf32>
    %455 = arith.addf %453, %454 : vector<8x128xf32>
    %c32_i32_233 = arith.constant 32 : i32
    %456 = tpu.dynamic_rotate %455 by %c32_i32_233 dim 1 : vector<8x128xf32>, i32 -> vector<8x128xf32>
    %457 = arith.addf %455, %456 : vector<8x128xf32>
    %458 = math.tanh %457 : vector<8x128xf32>
    %459 = arith.mulf %447, %458 : vector<8x128xf32>
    %cst_234 = arith.constant 0.000000e+00 : f32
    %460 = vector.broadcast %cst_234 : f32 to vector<8x128xf32>
    %461 = arith.select %28, %459, %460 : vector<8x128xi1>, vector<8x128xf32>
    %c8_i32_235 = arith.constant 8 : i32
    %462 = arith.muli %c6_i32_223, %c8_i32_235 : i32
    %463 = arith.index_cast %462 : i32 to index
    %c0_236 = arith.constant 0 : index
    %464 = vector.load %arg14[%463, %c0_236] : memref<64x128xf32, #tpu.memory_space<vmem>>, vector<8x128xf32>
    tpu.vector_store %arg14[%463, %c0_236], %461 {strides = array<i32>} : memref<64x128xf32, #tpu.memory_space<vmem>>, vector<8x128xf32>,
    %c7_i32_237 = arith.constant 7 : i32
    %c8_i32_238 = arith.constant 8 : i32
    %465 = arith.muli %c7_i32_237, %c8_i32_238 : i32
    %466 = arith.index_cast %465 : i32 to index
    %c0_239 = arith.constant 0 : index
    %467 = vector.load %arg15[%466, %c0_239] : memref<64x128xf32, #tpu.memory_space<vmem>>, vector<8x128xf32>
    %c0_240 = arith.constant 0 : index
    %c0_241 = arith.constant 0 : index
    %468 = vector.load %arg11[%c0_240, %c0_241] : memref<128x128xf32, #tpu.memory_space<vmem>>, vector<128x128xf32>
    %cst_242 = arith.constant dense<0.000000e+00> : vector<8x128xf32>
    %469 = tpu.matmul %461, %468, %cst_242 {dimension_numbers = #tpu.dot_dimension_numbers<[1], [0], [0], [1], [0, 0, 1, 1], [], []>} : vector<8x128xf32>, vector<128x128xf32>, vector<8x128xf32> -> vector<8x128xf32>
    %470 = arith.addf %467, %469 : vector<8x128xf32>
    %471 = arith.negf %470 : vector<8x128xf32>
    %472 = math.exp %471 : vector<8x128xf32>
    %cst_243 = arith.constant 1.000000e+00 : f32
    %473 = vector.broadcast %cst_243 : f32 to vector<8x128xf32>
    %474 = arith.addf %473, %472 : vector<8x128xf32>
    %475 = arith.divf %473, %474 : vector<8x128xf32>
    %476 = math.tanh %470 : vector<8x128xf32>
    %c64_i32_244 = arith.constant 64 : i32
    %477 = tpu.dynamic_rotate %476 by %c64_i32_244 dim 1 : vector<8x128xf32>, i32 -> vector<8x128xf32>
    %478 = arith.select %24, %457, %477 : vector<8x128xi1>, vector<8x128xf32>
    %479 = arith.mulf %475, %478 : vector<8x128xf32>
    %cst_245 = arith.constant 0.000000e+00 : f32
    %480 = vector.broadcast %cst_245 : f32 to vector<8x128xf32>
    %481 = arith.select %26, %479, %480 : vector<8x128xi1>, vector<8x128xf32>
    %c64_i32_246 = arith.constant 64 : i32
    %482 = tpu.dynamic_rotate %481 by %c64_i32_246 dim 1 : vector<8x128xf32>, i32 -> vector<8x128xf32>
    %483 = arith.addf %481, %482 : vector<8x128xf32>
    %c32_i32_247 = arith.constant 32 : i32
    %484 = tpu.dynamic_rotate %483 by %c32_i32_247 dim 1 : vector<8x128xf32>, i32 -> vector<8x128xf32>
    %485 = arith.addf %483, %484 : vector<8x128xf32>
    %486 = math.tanh %485 : vector<8x128xf32>
    %487 = arith.mulf %475, %486 : vector<8x128xf32>
    %cst_248 = arith.constant 0.000000e+00 : f32
    %488 = vector.broadcast %cst_248 : f32 to vector<8x128xf32>
    %489 = arith.select %28, %487, %488 : vector<8x128xi1>, vector<8x128xf32>
    %c8_i32_249 = arith.constant 8 : i32
    %490 = arith.muli %c7_i32_237, %c8_i32_249 : i32
    %491 = arith.index_cast %490 : i32 to index
    %c0_250 = arith.constant 0 : index
    %492 = vector.load %arg14[%491, %c0_250] : memref<64x128xf32, #tpu.memory_space<vmem>>, vector<8x128xf32>
    tpu.vector_store %arg14[%491, %c0_250], %489 {strides = array<i32>} : memref<64x128xf32, #tpu.memory_space<vmem>>, vector<8x128xf32>,
    %c8_i32_251 = arith.constant 8 : i32
    %c0_252 = arith.constant 0 : index
    %c0_253 = arith.constant 0 : index
    %493 = vector.load %arg14[%c0_252, %c0_253] : memref<64x128xf32, #tpu.memory_space<vmem>>, vector<64x128xf32>
    %c0_254 = arith.constant 0 : index
    %c0_255 = arith.constant 0 : index
    %494 = vector.load %arg5[%c0_254, %c0_255] : memref<128x128xf32, #tpu.memory_space<vmem>>, vector<128x128xf32>
    %cst_256 = arith.constant dense<0.000000e+00> : vector<64x128xf32>
    %495 = tpu.matmul %493, %494, %cst_256 {dimension_numbers = #tpu.dot_dimension_numbers<[1], [0], [0], [1], [0, 0, 1, 1], [], []>} : vector<64x128xf32>, vector<128x128xf32>, vector<64x128xf32> -> vector<64x128xf32>
    %c0_257 = arith.constant 0 : index
    %c0_258 = arith.constant 0 : index
    %496 = vector.load %arg6[%c0_257, %c0_258] : memref<1x128xf32, #tpu.memory_space<vmem>>, vector<1x128xf32>
    %497 = vector.broadcast %496 : vector<1x128xf32> to vector<64x128xf32>
    %498 = arith.addf %495, %497 : vector<64x128xf32>
    %c0_259 = arith.constant 0 : index
    %c0_260 = arith.constant 0 : index
    %499 = vector.load %arg13[%c0_259, %c0_260] : memref<64x128xf32, #tpu.memory_space<vmem>>, vector<64x128xf32>
    tpu.vector_store %arg13[%c0_259, %c0_260], %498 {strides = array<i32>} : memref<64x128xf32, #tpu.memory_space<vmem>>, vector<64x128xf32>,
    return
  }
}

</mosaic_0001>

<llo_original>
// kernel: image_captionizer_forward.1
$region0: #{image_captionizer_forward.1}
  #allocation0 [shape = 'u32[]', space=smem, size = 0x4, offset = 0x4, fixed_abs, tag = 'smem constant byte address 0x4 - core index']
  #allocation1 [shape = 'u32[144,128]{1,0:T(1,128)}', space=vmem, size = 0x12000, scoped, tag = 'internal scratch']
  #allocation2 [shape = 'f32[64,128]{1,0:T(8,128)}', space=vmem, size = 0x8000, scoped, tag = 'scratch operand']
  #allocation3 [shape = 'f32[64,128]{1,0:T(8,128)}', space=vmem, size = 0x8000, scoped, tag = 'scratch operand']
  %s0 = inlined_call_operand.vmem [shape: f32[8,768], index: 0, kind: input, shape index: {}]
  %s1 = inlined_call_operand.vmem [shape: s32[56,1], index: 1, kind: input, shape index: {}]
  %s2 = inlined_call_operand.vmem [shape: bf16[768,128], index: 2, kind: input, shape index: {}]
  %s3 = inlined_call_operand.vmem [shape: f32[1,128], index: 3, kind: input, shape index: {}]
  %s4 = inlined_call_operand.hbm [shape: f32[128,128], index: 4, kind: input, shape index: {}]
  %s5 = inlined_call_operand.hbm [shape: f32[128,128], index: 5, kind: input, shape index: {}]
  %s6 = inlined_call_operand.vmem [shape: f32[1,128], index: 6, kind: input, shape index: {}]
  %s7 = inlined_call_operand.hbm [shape: f32[128,128], index: 7, kind: input, shape index: {}]
  %s8 = inlined_call_operand.hbm [shape: f32[128,128], index: 8, kind: input, shape index: {}]
  %s9 = inlined_call_operand.vmem [shape: f32[1,128], index: 9, kind: input, shape index: {}]
  %s10 = inlined_call_operand.hbm [shape: f32[128,128], index: 10, kind: input, shape index: {}]
  %s11 = inlined_call_operand.hbm [shape: f32[128,128], index: 11, kind: input, shape index: {}]
  %s12 = inlined_call_operand.vmem [shape: f32[1,128], index: 12, kind: input, shape index: {}]
  %s13 = inlined_call_operand.vmem [shape: f32[64,128], index: 13, kind: output, shape index: {}]
  %s14 = sld [smem:[#allocation0]]
  $region86: #{image_captionizer_forward.1} parent=0
    _
  %s16 = ssub.s32 1, %s14
  %s17 = scalar_select 0, %s16, %s14
  $region1: #{image_captionizer_forward.1} parent=0
    #allocation4 [shape = 'u8[65536]{0}', space=vmem, size = 0x10000, scoped, tag = 'input window, operand 4, single buffered']
    #allocation5 [shape = 's32[1]{0}', space=sflag, size = 0x4, scoped, tag = 'scoped memory for image_captionizer_forward.1']
    #allocation6 [shape = 'u8[65536]{0}', space=vmem, size = 0x10000, scoped, tag = 'input window, operand 5, single buffered']
    #allocation7 [shape = 's32[1]{0}', space=sflag, size = 0x4, scoped, tag = 'scoped memory for image_captionizer_forward.1']
    #allocation8 [shape = 'u8[65536]{0}', space=vmem, size = 0x10000, scoped, tag = 'input window, operand 7, single buffered']
    #allocation9 [shape = 'u8[65536]{0}', space=vmem, size = 0x10000, scoped, tag = 'input window, operand 8, single buffered']
    #allocation10 [shape = 's32[1]{0}', space=sflag, size = 0x4, scoped, tag = 'scoped memory for image_captionizer_forward.1']
    #allocation11 [shape = 'u8[65536]{0}', space=vmem, size = 0x10000, scoped, tag = 'input window, operand 10, single buffered']
    #allocation12 [shape = 'u8[65536]{0}', space=vmem, size = 0x10000, scoped, tag = 'input window, operand 11, single buffered']
    #allocation13 [shape = 's32[1]{0}', space=sflag, size = 0x4, scoped, tag = 'scoped memory for image_captionizer_forward.1']
    %18 = vsyncpa [#allocation5], 0
    %19 = vsyncpa [#allocation7], 0
    %20 = vsyncpa [#allocation10], 0
    %21 = vsyncpa [#allocation13], 0
    // Predicated region
    $region2: #{image_captionizer_forward.1} parent=1 // pred_check
      _
    $region3: #{image_captionizer_forward.1} parent=1 // pred_check_branch
      %23 = sbr.rel (0) target = $region5
    $region4: #{image_captionizer_forward.1} parent=1 // pred_region
      _
    $region5: #{image_captionizer_forward.1} parent=1 // pred_fallthru
      _
    // Predicated region
    $region6: #{image_captionizer_forward.1} parent=1 // pred_check
      _
    $region7: #{image_captionizer_forward.1} parent=1 // pred_check_branch
      %25 = sbr.rel (0) target = $region9
    $region8: #{image_captionizer_forward.1} parent=1 // pred_region
      _
    $region9: #{image_captionizer_forward.1} parent=1 // pred_fallthru
      _
    // Predicated region
    $region10: #{image_captionizer_forward.1} parent=1 // pred_check
      _
    $region11: #{image_captionizer_forward.1} parent=1 // pred_check_branch
      %27 = sbr.rel (0) target = $region13
    $region12: #{image_captionizer_forward.1} parent=1 // pred_region
      _
    $region13: #{image_captionizer_forward.1} parent=1 // pred_fallthru
      _
    // Predicated region
    $region14: #{image_captionizer_forward.1} parent=1 // pred_check
      _
    $region15: #{image_captionizer_forward.1} parent=1 // pred_check_branch
      %29 = sbr.rel (0) target = $region17
    $region16: #{image_captionizer_forward.1} parent=1 // pred_region
      _
    $region17: #{image_captionizer_forward.1} parent=1 // pred_fallthru
      _
    // Predicated region
    $region18: #{image_captionizer_forward.1} parent=1 // pred_check
      _
    $region19: #{image_captionizer_forward.1} parent=1 // pred_check_branch
      %31 = sbr.rel (0) target = $region21
    $region20: #{image_captionizer_forward.1} parent=1 // pred_region
      %s33 = ssub.s32 2048, 2048
      %34 = vsyncadd [#allocation5], %s33
      %s35 = sshll.u32 [#allocation4], 4
      %s36 = int_to_ptr.vmem [resolvable:$true] %s35
      %41 = dma.hbm_to_vmem [thread:$0]  %s4, 2048, %s36, [#allocation5], 128, 128, 8
    $region21: #{image_captionizer_forward.1} parent=1 // pred_fallthru
      _
    // Predicated region
    $region22: #{image_captionizer_forward.1} parent=1 // pred_check
      _
    $region23: #{image_captionizer_forward.1} parent=1 // pred_check_branch
      %43 = sbr.rel (0) target = $region25
    $region24: #{image_captionizer_forward.1} parent=1 // pred_region
      %s45 = ssub.s32 2048, 2048
      %46 = vsyncadd [#allocation7], %s45
      %s47 = sshll.u32 [#allocation6], 4
      %s48 = int_to_ptr.vmem [resolvable:$true] %s47
      %53 = dma.hbm_to_vmem [thread:$0]  %s5, 2048, %s48, [#allocation7], 128, 128, 8
    $region25: #{image_captionizer_forward.1} parent=1 // pred_fallthru
      _
    // Predicated region
    $region26: #{image_captionizer_forward.1} parent=1 // pred_check
      _
    $region27: #{image_captionizer_forward.1} parent=1 // pred_check_branch
      %55 = sbr.rel (0) target = $region29
    $region28: #{image_captionizer_forward.1} parent=1 // pred_region
      _
    $region29: #{image_captionizer_forward.1} parent=1 // pred_fallthru
      _
    // Predicated region
    $region30: #{image_captionizer_forward.1} parent=1 // pred_check
      _
    $region31: #{image_captionizer_forward.1} parent=1 // pred_check_branch
      %57 = sbr.rel (0) target = $region33
    $region32: #{image_captionizer_forward.1} parent=1 // pred_region
      %s59 = ssub.s32 2048, 2048
      %60 = vsyncadd [#allocation7], %s59
      %s61 = sshll.u32 [#allocation8], 4
      %s62 = int_to_ptr.vmem [resolvable:$true] %s61
      %67 = dma.hbm_to_vmem [thread:$0]  %s7, 2048, %s62, [#allocation7], 128, 128, 8
    $region33: #{image_captionizer_forward.1} parent=1 // pred_fallthru
      _
    // Predicated region
    $region34: #{image_captionizer_forward.1} parent=1 // pred_check
      _
    $region35: #{image_captionizer_forward.1} parent=1 // pred_check_branch
      %69 = sbr.rel (0) target = $region37
    $region36: #{image_captionizer_forward.1} parent=1 // pred_region
      %s71 = ssub.s32 2048, 2048
      %72 = vsyncadd [#allocation10], %s71
      %s73 = sshll.u32 [#allocation9], 4
      %s74 = int_to_ptr.vmem [resolvable:$true] %s73
      %79 = dma.hbm_to_vmem [thread:$0]  %s8, 2048, %s74, [#allocation10], 128, 128, 8
    $region37: #{image_captionizer_forward.1} parent=1 // pred_fallthru
      _
    // Predicated region
    $region38: #{image_captionizer_forward.1} parent=1 // pred_check
      _
    $region39: #{image_captionizer_forward.1} parent=1 // pred_check_branch
      %81 = sbr.rel (0) target = $region41
    $region40: #{image_captionizer_forward.1} parent=1 // pred_region
      _
    $region41: #{image_captionizer_forward.1} parent=1 // pred_fallthru
      _
    // Predicated region
    $region42: #{image_captionizer_forward.1} parent=1 // pred_check
      _
    $region43: #{image_captionizer_forward.1} parent=1 // pred_check_branch
      %83 = sbr.rel (0) target = $region45
    $region44: #{image_captionizer_forward.1} parent=1 // pred_region
      %s85 = ssub.s32 2048, 2048
      %86 = vsyncadd [#allocation10], %s85
      %s87 = sshll.u32 [#allocation11], 4
      %s88 = int_to_ptr.vmem [resolvable:$true] %s87
      %93 = dma.hbm_to_vmem [thread:$0]  %s10, 2048, %s88, [#allocation10], 128, 128, 8
    $region45: #{image_captionizer_forward.1} parent=1 // pred_fallthru
      _
    // Predicated region
    $region46: #{image_captionizer_forward.1} parent=1 // pred_check
      _
    $region47: #{image_captionizer_forward.1} parent=1 // pred_check_branch
      %95 = sbr.rel (0) target = $region49
    $region48: #{image_captionizer_forward.1} parent=1 // pred_region
      %s97 = ssub.s32 2048, 2048
      %98 = vsyncadd [#allocation13], %s97
      %s99 = sshll.u32 [#allocation12], 4
      %s100 = int_to_ptr.vmem [resolvable:$true] %s99
      %105 = dma.hbm_to_vmem [thread:$0]  %s11, 2048, %s100, [#allocation13], 128, 128, 8
    $region49: #{image_captionizer_forward.1} parent=1 // pred_fallthru
      _
    // Predicated region
    $region50: #{image_captionizer_forward.1} parent=1 // pred_check
      _
    $region51: #{image_captionizer_forward.1} parent=1 // pred_check_branch
      %107 = sbr.rel (0) target = $region53
    $region52: #{image_captionizer_forward.1} parent=1 // pred_region
      _
    $region53: #{image_captionizer_forward.1} parent=1 // pred_fallthru
      _
    // Predicated region
    $region54: #{image_captionizer_forward.1} parent=1 // pred_check
      _
    $region55: #{image_captionizer_forward.1} parent=1 // pred_check_branch
      %109 = sbr.rel (0) target = $region57
    $region56: #{image_captionizer_forward.1} parent=1 // pred_region
      %110 = dma.done [#allocation5], 2048
    $region57: #{image_captionizer_forward.1} parent=1 // pred_fallthru
      _
    // Predicated region
    $region58: #{image_captionizer_forward.1} parent=1 // pred_check
      _
    $region59: #{image_captionizer_forward.1} parent=1 // pred_check_branch
      %112 = sbr.rel (0) target = $region61
    $region60: #{image_captionizer_forward.1} parent=1 // pred_region
      %113 = dma.done [#allocation7], 2048
    $region61: #{image_captionizer_forward.1} parent=1 // pred_fallthru
      _
    // Predicated region
    $region62: #{image_captionizer_forward.1} parent=1 // pred_check
      _
    $region63: #{image_captionizer_forward.1} parent=1 // pred_check_branch
      %115 = sbr.rel (0) target = $region65
    $region64: #{image_captionizer_forward.1} parent=1 // pred_region
      %116 = dma.done [#allocation7], 2048
    $region65: #{image_captionizer_forward.1} parent=1 // pred_fallthru
      _
    // Predicated region
    $region66: #{image_captionizer_forward.1} parent=1 // pred_check
      _
    $region67: #{image_captionizer_forward.1} parent=1 // pred_check_branch
      %118 = sbr.rel (0) target = $region69
    $region68: #{image_captionizer_forward.1} parent=1 // pred_region
      %119 = dma.done [#allocation10], 2048
    $region69: #{image_captionizer_forward.1} parent=1 // pred_fallthru
      _
    // Predicated region
    $region70: #{image_captionizer_forward.1} parent=1 // pred_check
      _
    $region71: #{image_captionizer_forward.1} parent=1 // pred_check_branch
      %121 = sbr.rel (0) target = $region73
    $region72: #{image_captionizer_forward.1} parent=1 // pred_region
      %122 = dma.done [#allocation10], 2048
    $region73: #{image_captionizer_forward.1} parent=1 // pred_fallthru
      _
    // Predicated region
    $region74: #{image_captionizer_forward.1} parent=1 // pred_check
      _
    $region75: #{image_captionizer_forward.1} parent=1 // pred_check_branch
      %124 = sbr.rel (0) target = $region77
    $region76: #{image_captionizer_forward.1} parent=1 // pred_region
      %125 = dma.done [#allocation13], 2048
    $region77: #{image_captionizer_forward.1} parent=1 // pred_fallthru
      _
    %v127 = vld [vmem:[%s0] sm:$0xff]
    %v128 = vld [vmem:[%s0 + $0x8] sm:$0xff]
    %v129 = vld [vmem:[%s0 + $0x10] sm:$0xff]
    %v130 = vld [vmem:[%s0 + $0x18] sm:$0xff]
    %v131 = vld [vmem:[%s0 + $0x20] sm:$0xff]
    %v132 = vld [vmem:[%s0 + $0x28] sm:$0xff]
    %v133 = vpack.c.bf16 %v127, %v127
    %v134 = vpack.c.bf16 %v128, %v128
    %v135 = vpack.c.bf16 %v129, %v129
    %v136 = vpack.c.bf16 %v130, %v130
    %v137 = vpack.c.bf16 %v131, %v131
    %v138 = vpack.c.bf16 %v132, %v132
    %v139 = vld [vmem:[%s2] sm:$0xf]
    %v140 = vld [vmem:[%s2 + $0x4] sm:$0xf]
    %v141 = vld [vmem:[%s2 + $0x8] sm:$0xf]
    %v142 = vld [vmem:[%s2 + $0xc] sm:$0xf]
    %v143 = vld [vmem:[%s2 + $0x10] sm:$0xf]
    %v144 = vld [vmem:[%s2 + $0x14] sm:$0xf]
    %v145 = vld [vmem:[%s2 + $0x18] sm:$0xf]
    %v146 = vld [vmem:[%s2 + $0x1c] sm:$0xf]
    %v147 = vld [vmem:[%s2 + $0x20] sm:$0xf]
    %v148 = vld [vmem:[%s2 + $0x24] sm:$0xf]
    %v149 = vld [vmem:[%s2 + $0x28] sm:$0xf]
    %v150 = vld [vmem:[%s2 + $0x2c] sm:$0xf]
    %v151 = vld [vmem:[%s2 + $0x30] sm:$0xf]
    %v152 = vld [vmem:[%s2 + $0x34] sm:$0xf]
    %v153 = vld [vmem:[%s2 + $0x38] sm:$0xf]
    %v154 = vld [vmem:[%s2 + $0x3c] sm:$0xf]
    %v155 = vld [vmem:[%s2 + $0x40] sm:$0xf]
    %v156 = vld [vmem:[%s2 + $0x44] sm:$0xf]
    %v157 = vld [vmem:[%s2 + $0x48] sm:$0xf]
    %v158 = vld [vmem:[%s2 + $0x4c] sm:$0xf]
    %v159 = vld [vmem:[%s2 + $0x50] sm:$0xf]
    %v160 = vld [vmem:[%s2 + $0x54] sm:$0xf]
    %v161 = vld [vmem:[%s2 + $0x58] sm:$0xf]
    %v162 = vld [vmem:[%s2 + $0x5c] sm:$0xf]
    %v163 = vld [vmem:[%s2 + $0x60] sm:$0xf]
    %v164 = vld [vmem:[%s2 + $0x64] sm:$0xf]
    %v165 = vld [vmem:[%s2 + $0x68] sm:$0xf]
    %v166 = vld [vmem:[%s2 + $0x6c] sm:$0xf]
    %v167 = vld [vmem:[%s2 + $0x70] sm:$0xf]
    %v168 = vld [vmem:[%s2 + $0x74] sm:$0xf]
    %v169 = vld [vmem:[%s2 + $0x78] sm:$0xf]
    %v170 = vld [vmem:[%s2 + $0x7c] sm:$0xf]
    %v171 = vld [vmem:[%s2 + $0x80] sm:$0xf]
    %v172 = vld [vmem:[%s2 + $0x84] sm:$0xf]
    %v173 = vld [vmem:[%s2 + $0x88] sm:$0xf]
    %v174 = vld [vmem:[%s2 + $0x8c] sm:$0xf]
    %v175 = vld [vmem:[%s2 + $0x90] sm:$0xf]
    %v176 = vld [vmem:[%s2 + $0x94] sm:$0xf]
    %v177 = vld [vmem:[%s2 + $0x98] sm:$0xf]
    %v178 = vld [vmem:[%s2 + $0x9c] sm:$0xf]
    %v179 = vld [vmem:[%s2 + $0xa0] sm:$0xf]
    %v180 = vld [vmem:[%s2 + $0xa4] sm:$0xf]
    %v181 = vld [vmem:[%s2 + $0xa8] sm:$0xf]
    %v182 = vld [vmem:[%s2 + $0xac] sm:$0xf]
    %v183 = vld [vmem:[%s2 + $0xb0] sm:$0xf]
    %v184 = vld [vmem:[%s2 + $0xb4] sm:$0xf]
    %v185 = vld [vmem:[%s2 + $0xb8] sm:$0xf]
    %v186 = vld [vmem:[%s2 + $0xbc] sm:$0xf]
    %v187 = vld [vmem:[%s2 + $0xc0] sm:$0xf]
    %v188 = vld [vmem:[%s2 + $0xc4] sm:$0xf]
    %v189 = vld [vmem:[%s2 + $0xc8] sm:$0xf]
    %v190 = vld [vmem:[%s2 + $0xcc] sm:$0xf]
    %v191 = vld [vmem:[%s2 + $0xd0] sm:$0xf]
    %v192 = vld [vmem:[%s2 + $0xd4] sm:$0xf]
    %v193 = vld [vmem:[%s2 + $0xd8] sm:$0xf]
    %v194 = vld [vmem:[%s2 + $0xdc] sm:$0xf]
    %v195 = vld [vmem:[%s2 + $0xe0] sm:$0xf]
    %v196 = vld [vmem:[%s2 + $0xe4] sm:$0xf]
    %v197 = vld [vmem:[%s2 + $0xe8] sm:$0xf]
    %v198 = vld [vmem:[%s2 + $0xec] sm:$0xf]
    %v199 = vld [vmem:[%s2 + $0xf0] sm:$0xf]
    %v200 = vld [vmem:[%s2 + $0xf4] sm:$0xf]
    %v201 = vld [vmem:[%s2 + $0xf8] sm:$0xf]
    %v202 = vld [vmem:[%s2 + $0xfc] sm:$0xf]
    %v203 = vld [vmem:[%s2 + $0x100] sm:$0xf]
    %v204 = vld [vmem:[%s2 + $0x104] sm:$0xf]
    %v205 = vld [vmem:[%s2 + $0x108] sm:$0xf]
    %v206 = vld [vmem:[%s2 + $0x10c] sm:$0xf]
    %v207 = vld [vmem:[%s2 + $0x110] sm:$0xf]
    %v208 = vld [vmem:[%s2 + $0x114] sm:$0xf]
    %v209 = vld [vmem:[%s2 + $0x118] sm:$0xf]
    %v210 = vld [vmem:[%s2 + $0x11c] sm:$0xf]
    %v211 = vld [vmem:[%s2 + $0x120] sm:$0xf]
    %v212 = vld [vmem:[%s2 + $0x124] sm:$0xf]
    %v213 = vld [vmem:[%s2 + $0x128] sm:$0xf]
    %v214 = vld [vmem:[%s2 + $0x12c] sm:$0xf]
    %v215 = vld [vmem:[%s2 + $0x130] sm:$0xf]
    %v216 = vld [vmem:[%s2 + $0x134] sm:$0xf]
    %v217 = vld [vmem:[%s2 + $0x138] sm:$0xf]
    %v218 = vld [vmem:[%s2 + $0x13c] sm:$0xf]
    %v219 = vld [vmem:[%s2 + $0x140] sm:$0xf]
    %v220 = vld [vmem:[%s2 + $0x144] sm:$0xf]
    %v221 = vld [vmem:[%s2 + $0x148] sm:$0xf]
    %v222 = vld [vmem:[%s2 + $0x14c] sm:$0xf]
    %v223 = vld [vmem:[%s2 + $0x150] sm:$0xf]
    %v224 = vld [vmem:[%s2 + $0x154] sm:$0xf]
    %v225 = vld [vmem:[%s2 + $0x158] sm:$0xf]
    %v226 = vld [vmem:[%s2 + $0x15c] sm:$0xf]
    %v227 = vld [vmem:[%s2 + $0x160] sm:$0xf]
    %v228 = vld [vmem:[%s2 + $0x164] sm:$0xf]
    %v229 = vld [vmem:[%s2 + $0x168] sm:$0xf]
    %v230 = vld [vmem:[%s2 + $0x16c] sm:$0xf]
    %v231 = vld [vmem:[%s2 + $0x170] sm:$0xf]
    %v232 = vld [vmem:[%s2 + $0x174] sm:$0xf]
    %v233 = vld [vmem:[%s2 + $0x178] sm:$0xf]
    %v234 = vld [vmem:[%s2 + $0x17c] sm:$0xf]
    %v235 = vld [vmem:[%s3] sm:$0x1]
    %v237 = vlaneseq
    %v238 = vshrl.u32 %v237, 7
    %v239 = vsub.s32 0, %v238
    %v240 = vrot.slane %v235, %v239
    %v338 = vunpack.c.l.b16 %v139
    %v339 = vunpack.c.l.b16 %v140
    %v340 = vunpack.c.l.b16 %v141
    %v341 = vunpack.c.l.b16 %v142
    %v342 = vunpack.c.l.b16 %v143
    %v343 = vunpack.c.l.b16 %v144
    %v344 = vunpack.c.l.b16 %v145
    %v345 = vunpack.c.l.b16 %v146
    %v346 = vunpack.c.l.b16 %v147
    %v347 = vunpack.c.l.b16 %v148
    %v348 = vunpack.c.l.b16 %v149
    %v349 = vunpack.c.l.b16 %v150
    %v350 = vunpack.c.l.b16 %v151
    %v351 = vunpack.c.l.b16 %v152
    %v352 = vunpack.c.l.b16 %v153
    %v353 = vunpack.c.l.b16 %v154
    %v354 = vunpack.c.l.b16 %v155
    %v355 = vunpack.c.l.b16 %v156
    %v356 = vunpack.c.l.b16 %v157
    %v357 = vunpack.c.l.b16 %v158
    %v358 = vunpack.c.l.b16 %v159
    %v359 = vunpack.c.l.b16 %v160
    %v360 = vunpack.c.l.b16 %v161
    %v361 = vunpack.c.l.b16 %v162
    %v362 = vunpack.c.l.b16 %v163
    %v363 = vunpack.c.l.b16 %v164
    %v364 = vunpack.c.l.b16 %v165
    %v365 = vunpack.c.l.b16 %v166
    %v366 = vunpack.c.l.b16 %v167
    %v367 = vunpack.c.l.b16 %v168
    %v368 = vunpack.c.l.b16 %v169
    %v369 = vunpack.c.l.b16 %v170
    %v370 = vunpack.c.l.b16 %v171
    %v371 = vunpack.c.l.b16 %v172
    %v372 = vunpack.c.l.b16 %v173
    %v373 = vunpack.c.l.b16 %v174
    %v374 = vunpack.c.l.b16 %v175
    %v375 = vunpack.c.l.b16 %v176
    %v376 = vunpack.c.l.b16 %v177
    %v377 = vunpack.c.l.b16 %v178
    %v378 = vunpack.c.l.b16 %v179
    %v379 = vunpack.c.l.b16 %v180
    %v380 = vunpack.c.l.b16 %v181
    %v381 = vunpack.c.l.b16 %v182
    %v382 = vunpack.c.l.b16 %v183
    %v383 = vunpack.c.l.b16 %v184
    %v384 = vunpack.c.l.b16 %v185
    %v385 = vunpack.c.l.b16 %v186
    %v386 = vunpack.c.l.b16 %v187
    %v387 = vunpack.c.l.b16 %v188
    %v388 = vunpack.c.l.b16 %v189
    %v389 = vunpack.c.l.b16 %v190
    %v390 = vunpack.c.l.b16 %v191
    %v391 = vunpack.c.l.b16 %v192
    %v392 = vunpack.c.l.b16 %v193
    %v393 = vunpack.c.l.b16 %v194
    %v394 = vunpack.c.l.b16 %v195
    %v395 = vunpack.c.l.b16 %v196
    %v396 = vunpack.c.l.b16 %v197
    %v397 = vunpack.c.l.b16 %v198
    %v398 = vunpack.c.l.b16 %v199
    %v399 = vunpack.c.l.b16 %v200
    %v400 = vunpack.c.l.b16 %v201
    %v401 = vunpack.c.l.b16 %v202
    %v402 = vunpack.c.l.b16 %v203
    %v403 = vunpack.c.l.b16 %v204
    %v404 = vunpack.c.l.b16 %v205
    %v405 = vunpack.c.l.b16 %v206
    %v406 = vunpack.c.l.b16 %v207
    %v407 = vunpack.c.l.b16 %v208
    %v408 = vunpack.c.l.b16 %v209
    %v409 = vunpack.c.l.b16 %v210
    %v410 = vunpack.c.l.b16 %v211
    %v411 = vunpack.c.l.b16 %v212
    %v412 = vunpack.c.l.b16 %v213
    %v413 = vunpack.c.l.b16 %v214
    %v414 = vunpack.c.l.b16 %v215
    %v415 = vunpack.c.l.b16 %v216
    %v416 = vunpack.c.l.b16 %v217
    %v417 = vunpack.c.l.b16 %v218
    %v418 = vunpack.c.l.b16 %v219
    %v419 = vunpack.c.l.b16 %v220
    %v420 = vunpack.c.l.b16 %v221
    %v421 = vunpack.c.l.b16 %v222
    %v422 = vunpack.c.l.b16 %v223
    %v423 = vunpack.c.l.b16 %v224
    %v424 = vunpack.c.l.b16 %v225
    %v425 = vunpack.c.l.b16 %v226
    %v426 = vunpack.c.l.b16 %v227
    %v427 = vunpack.c.l.b16 %v228
    %v428 = vunpack.c.l.b16 %v229
    %v429 = vunpack.c.l.b16 %v230
    %v430 = vunpack.c.l.b16 %v231
    %v431 = vunpack.c.l.b16 %v232
    %v432 = vunpack.c.l.b16 %v233
    %v433 = vunpack.c.l.b16 %v234
    %v434 = vpack.c.b16 %v339, %v338
    %v435 = vpack.c.b16 %v341, %v340
    %v436 = vpack.c.b16 %v343, %v342
    %v437 = vpack.c.b16 %v345, %v344
    %v438 = vpack.c.b16 %v347, %v346
    %v439 = vpack.c.b16 %v349, %v348
    %v440 = vpack.c.b16 %v351, %v350
    %v441 = vpack.c.b16 %v353, %v352
    %v442 = vpack.c.b16 %v355, %v354
    %v443 = vpack.c.b16 %v357, %v356
    %v444 = vpack.c.b16 %v359, %v358
    %v445 = vpack.c.b16 %v361, %v360
    %v446 = vpack.c.b16 %v363, %v362
    %v447 = vpack.c.b16 %v365, %v364
    %v448 = vpack.c.b16 %v367, %v366
    %v449 = vpack.c.b16 %v369, %v368
    %v450 = vpack.c.b16 %v371, %v370
    %v451 = vpack.c.b16 %v373, %v372
    %v452 = vpack.c.b16 %v375, %v374
    %v453 = vpack.c.b16 %v377, %v376
    %v454 = vpack.c.b16 %v379, %v378
    %v455 = vpack.c.b16 %v381, %v380
    %v456 = vpack.c.b16 %v383, %v382
    %v457 = vpack.c.b16 %v385, %v384
    %v458 = vpack.c.b16 %v387, %v386
    %v459 = vpack.c.b16 %v389, %v388
    %v460 = vpack.c.b16 %v391, %v390
    %v461 = vpack.c.b16 %v393, %v392
    %v462 = vpack.c.b16 %v395, %v394
    %v463 = vpack.c.b16 %v397, %v396
    %v464 = vpack.c.b16 %v399, %v398
    %v465 = vpack.c.b16 %v401, %v400
    %v466 = vpack.c.b16 %v403, %v402
    %v467 = vpack.c.b16 %v405, %v404
    %v468 = vpack.c.b16 %v407, %v406
    %v469 = vpack.c.b16 %v409, %v408
    %v470 = vpack.c.b16 %v411, %v410
    %v471 = vpack.c.b16 %v413, %v412
    %v472 = vpack.c.b16 %v415, %v414
    %v473 = vpack.c.b16 %v417, %v416
    %v474 = vpack.c.b16 %v419, %v418
    %v475 = vpack.c.b16 %v421, %v420
    %v476 = vpack.c.b16 %v423, %v422
    %v477 = vpack.c.b16 %v425, %v424
    %v478 = vpack.c.b16 %v427, %v426
    %v479 = vpack.c.b16 %v429, %v428
    %v480 = vpack.c.b16 %v431, %v430
    %v481 = vpack.c.b16 %v433, %v432
    %530 = vmatprep.subr.bf16.mxu0 0
    %531 = vmatpush1.bf16.msra.mxu0 %v434
    %532 = vmatprep.subr.bf16.mxu0 0
    %533 = vmatpush1.bf16.msra.mxu0 %v435
    %534 = vmatprep.subr.bf16.mxu0 0
    %535 = vmatpush1.bf16.msra.mxu0 %v436
    %536 = vmatprep.subr.bf16.mxu0 0
    %537 = vmatpush1.bf16.msra.mxu0 %v437
    %538 = vmatprep.subr.bf16.mxu0 0
    %539 = vmatpush1.bf16.msra.mxu0 %v438
    %540 = vmatprep.subr.bf16.mxu0 0
    %541 = vmatpush1.bf16.msra.mxu0 %v439
    %542 = vmatprep.subr.bf16.mxu0 0
    %543 = vmatpush1.bf16.msra.mxu0 %v440
    %544 = vmatprep.subr.bf16.mxu0 0
    %545 = vmatpush1.bf16.msra.mxu0 %v441
    %546 = vmatprep.subr.bf16.mxu0 0
    %547 = vmatpush1.bf16.msra.mxu0 %v442
    %548 = vmatprep.subr.bf16.mxu0 0
    %549 = vmatpush1.bf16.msra.mxu0 %v443
    %550 = vmatprep.subr.bf16.mxu0 0
    %551 = vmatpush1.bf16.msra.mxu0 %v444
    %552 = vmatprep.subr.bf16.mxu0 0
    %553 = vmatpush1.bf16.msra.mxu0 %v445
    %554 = vmatprep.subr.bf16.mxu0 0
    %555 = vmatpush1.bf16.msra.mxu0 %v446
    %556 = vmatprep.subr.bf16.mxu0 0
    %557 = vmatpush1.bf16.msra.mxu0 %v447
    %558 = vmatprep.subr.bf16.mxu0 0
    %559 = vmatpush1.bf16.msra.mxu0 %v448
    %560 = vmatprep.subr.bf16.mxu0 0
    %561 = vmatpush1.bf16.msra.mxu0 %v449
    %562 = vmatprep.mubr.bf16.mxu0 %v134
    %563 = vmatmul.mubr.bf16.gmra.mrb[0].mxu0 %v133
    %v564 = vpop.f32.mrb[0].mxu0
    %v565 = vadd.f32 %v240, %v564
    %v566 = vpop.f32.mrb[0].mxu0
    %v567 = vpop.f32.mrb[0].mxu0
    %v568 = vpop.f32.mrb[0].mxu0
    %569 = vdwg.mxu0
    %570 = vmatprep.subr.bf16.mxu0 0
    %571 = vmatpush1.bf16.msra.mxu0 %v450
    %572 = vmatprep.subr.bf16.mxu0 0
    %573 = vmatpush1.bf16.msra.mxu0 %v451
    %574 = vmatprep.subr.bf16.mxu0 0
    %575 = vmatpush1.bf16.msra.mxu0 %v452
    %576 = vmatprep.subr.bf16.mxu0 0
    %577 = vmatpush1.bf16.msra.mxu0 %v453
    %578 = vmatprep.subr.bf16.mxu0 0
    %579 = vmatpush1.bf16.msra.mxu0 %v454
    %580 = vmatprep.subr.bf16.mxu0 0
    %581 = vmatpush1.bf16.msra.mxu0 %v455
    %582 = vmatprep.subr.bf16.mxu0 0
    %583 = vmatpush1.bf16.msra.mxu0 %v456
    %584 = vmatprep.subr.bf16.mxu0 0
    %585 = vmatpush1.bf16.msra.mxu0 %v457
    %586 = vmatprep.subr.bf16.mxu0 0
    %587 = vmatpush1.bf16.msra.mxu0 %v458
    %588 = vmatprep.subr.bf16.mxu0 0
    %589 = vmatpush1.bf16.msra.mxu0 %v459
    %590 = vmatprep.subr.bf16.mxu0 0
    %591 = vmatpush1.bf16.msra.mxu0 %v460
    %592 = vmatprep.subr.bf16.mxu0 0
    %593 = vmatpush1.bf16.msra.mxu0 %v461
    %594 = vmatprep.subr.bf16.mxu0 0
    %595 = vmatpush1.bf16.msra.mxu0 %v462
    %596 = vmatprep.subr.bf16.mxu0 0
    %597 = vmatpush1.bf16.msra.mxu0 %v463
    %598 = vmatprep.subr.bf16.mxu0 0
    %599 = vmatpush1.bf16.msra.mxu0 %v464
    %600 = vmatprep.subr.bf16.mxu0 0
    %601 = vmatpush1.bf16.msra.mxu0 %v465
    %602 = vmatprep.mubr.bf16.mxu0 %v136
    %603 = vmatmul.mubr.bf16.gmra.mrb[0].mxu0 %v135
    %v604 = vpop.f32.mrb[0].mxu0
    %v605 = vadd.f32 %v565, %v604
    %v606 = vpop.f32.mrb[0].mxu0
    %v607 = vpop.f32.mrb[0].mxu0
    %v608 = vpop.f32.mrb[0].mxu0
    %609 = vdwg.mxu0
    %610 = vmatprep.subr.bf16.mxu0 0
    %611 = vmatpush1.bf16.msra.mxu0 %v466
    %612 = vmatprep.subr.bf16.mxu0 0
    %613 = vmatpush1.bf16.msra.mxu0 %v467
    %614 = vmatprep.subr.bf16.mxu0 0
    %615 = vmatpush1.bf16.msra.mxu0 %v468
    %616 = vmatprep.subr.bf16.mxu0 0
    %617 = vmatpush1.bf16.msra.mxu0 %v469
    %618 = vmatprep.subr.bf16.mxu0 0
    %619 = vmatpush1.bf16.msra.mxu0 %v470
    %620 = vmatprep.subr.bf16.mxu0 0
    %621 = vmatpush1.bf16.msra.mxu0 %v471
    %622 = vmatprep.subr.bf16.mxu0 0
    %623 = vmatpush1.bf16.msra.mxu0 %v472
    %624 = vmatprep.subr.bf16.mxu0 0
    %625 = vmatpush1.bf16.msra.mxu0 %v473
    %626 = vmatprep.subr.bf16.mxu0 0
    %627 = vmatpush1.bf16.msra.mxu0 %v474
    %628 = vmatprep.subr.bf16.mxu0 0
    %629 = vmatpush1.bf16.msra.mxu0 %v475
    %630 = vmatprep.subr.bf16.mxu0 0
    %631 = vmatpush1.bf16.msra.mxu0 %v476
    %632 = vmatprep.subr.bf16.mxu0 0
    %633 = vmatpush1.bf16.msra.mxu0 %v477
    %634 = vmatprep.subr.bf16.mxu0 0
    %635 = vmatpush1.bf16.msra.mxu0 %v478
    %636 = vmatprep.subr.bf16.mxu0 0
    %637 = vmatpush1.bf16.msra.mxu0 %v479
    %638 = vmatprep.subr.bf16.mxu0 0
    %639 = vmatpush1.bf16.msra.mxu0 %v480
    %640 = vmatprep.subr.bf16.mxu0 0
    %641 = vmatpush1.bf16.msra.mxu0 %v481
    %642 = vmatprep.mubr.bf16.mxu0 %v138
    %643 = vmatmul.mubr.bf16.gmra.mrb[0].mxu0 %v137
    %v644 = vpop.f32.mrb[0].mxu0
    %v645 = vadd.f32 %v605, %v644
    %v646 = vpop.f32.mrb[0].mxu0
    %v647 = vpop.f32.mrb[0].mxu0
    %v648 = vpop.f32.mrb[0].mxu0
    %649 = vdwg.mxu0
    %v650 = vmax.f32 %v645, 0.0
    %v651 = vld [vmem:[%s1] sm:$0xff]
    %v652 = vld [vmem:[%s1 + $0x8] sm:$0xff]
    %v653 = vld [vmem:[%s1 + $0x10] sm:$0xff]
    %v654 = vld [vmem:[%s1 + $0x18] sm:$0xff]
    %v655 = vld [vmem:[%s1 + $0x20] sm:$0xff]
    %v656 = vld [vmem:[%s1 + $0x28] sm:$0xff]
    %v657 = vld [vmem:[%s1 + $0x30] sm:$0xff]
    %v658 = vlaneseq
    %v659 = vand.u32 %v658, 127
    %660 = vset.pattern.permute.xlu0 0
    %661 = vperm.xlu0 %660, %v651
    %v662 = vpop.permute.xlu0 %661
    %663 = vset.pattern.permute.xlu0 0
    %664 = vperm.xlu0 %663, %v652
    %v665 = vpop.permute.xlu0 %664
    %666 = vset.pattern.permute.xlu0 0
    %667 = vperm.xlu0 %666, %v653
    %v668 = vpop.permute.xlu0 %667
    %669 = vset.pattern.permute.xlu0 0
    %670 = vperm.xlu0 %669, %v654
    %v671 = vpop.permute.xlu0 %670
    %672 = vset.pattern.permute.xlu0 0
    %673 = vperm.xlu0 %672, %v655
    %v674 = vpop.permute.xlu0 %673
    %675 = vset.pattern.permute.xlu0 0
    %676 = vperm.xlu0 %675, %v656
    %v677 = vpop.permute.xlu0 %676
    %678 = vset.pattern.permute.xlu0 0
    %679 = vperm.xlu0 %678, %v657
    %v680 = vpop.permute.xlu0 %679
    %vm681 = vcmp.eq.s32.totalorder %v662, %v659
    %vm682 = vcmp.eq.s32.totalorder %v665, %v659
    %vm683 = vcmp.eq.s32.totalorder %v668, %v659
    %vm684 = vcmp.eq.s32.totalorder %v671, %v659
    %vm685 = vcmp.eq.s32.totalorder %v674, %v659
    %vm686 = vcmp.eq.s32.totalorder %v677, %v659
    %vm687 = vcmp.eq.s32.totalorder %v680, %v659
    %v688 = vsel %vm681, 1, 0
    %v689 = vsel %vm682, 1, 0
    %v690 = vsel %vm683, 1, 0
    %v691 = vsel %vm684, 1, 0
    %v692 = vsel %vm685, 1, 0
    %v693 = vsel %vm686, 1, 0
    %v694 = vsel %vm687, 1, 0
    %v695 = vcvt.s32.f32 %v688
    %v696 = vcvt.s32.f32 %v689
    %v697 = vcvt.s32.f32 %v690
    %v698 = vcvt.s32.f32 %v691
    %v699 = vcvt.s32.f32 %v692
    %v700 = vcvt.s32.f32 %v693
    %v701 = vcvt.s32.f32 %v694
    %v702 = vld [vmem:[#allocation4] sm:$0xff]
    %v703 = vld [vmem:[#allocation4 + $0x8] sm:$0xff]
    %v704 = vld [vmem:[#allocation4 + $0x10] sm:$0xff]
    %v705 = vld [vmem:[#allocation4 + $0x18] sm:$0xff]
    %v706 = vld [vmem:[#allocation4 + $0x20] sm:$0xff]
    %v707 = vld [vmem:[#allocation4 + $0x28] sm:$0xff]
    %v708 = vld [vmem:[#allocation4 + $0x30] sm:$0xff]
    %v709 = vld [vmem:[#allocation4 + $0x38] sm:$0xff]
    %v710 = vld [vmem:[#allocation4 + $0x40] sm:$0xff]
    %v711 = vld [vmem:[#allocation4 + $0x48] sm:$0xff]
    %v712 = vld [vmem:[#allocation4 + $0x50] sm:$0xff]
    %v713 = vld [vmem:[#allocation4 + $0x58] sm:$0xff]
    %v714 = vld [vmem:[#allocation4 + $0x60] sm:$0xff]
    %v715 = vld [vmem:[#allocation4 + $0x68] sm:$0xff]
    %v716 = vld [vmem:[#allocation4 + $0x70] sm:$0xff]
    %v717 = vld [vmem:[#allocation4 + $0x78] sm:$0xff]
    %718 = vmatprep.subr.mxu0 0.0
    %719 = vmatpush1.msra.mxu0 %v702
    %720 = vmatprep.subr.mxu0 0.0
    %721 = vmatpush1.msra.mxu0 %v703
    %722 = vmatprep.subr.mxu0 0.0
    %723 = vmatpush1.msra.mxu0 %v704
    %724 = vmatprep.subr.mxu0 0.0
    %725 = vmatpush1.msra.mxu0 %v705
    %726 = vmatprep.subr.mxu0 0.0
    %727 = vmatpush1.msra.mxu0 %v706
    %728 = vmatprep.subr.mxu0 0.0
    %729 = vmatpush1.msra.mxu0 %v707
    %730 = vmatprep.subr.mxu0 0.0
    %731 = vmatpush1.msra.mxu0 %v708
    %732 = vmatprep.subr.mxu0 0.0
    %733 = vmatpush1.msra.mxu0 %v709
    %734 = vmatprep.subr.mxu0 0.0
    %735 = vmatpush1.msra.mxu0 %v710
    %736 = vmatprep.subr.mxu0 0.0
    %737 = vmatpush1.msra.mxu0 %v711
    %738 = vmatprep.subr.mxu0 0.0
    %739 = vmatpush1.msra.mxu0 %v712
    %740 = vmatprep.subr.mxu0 0.0
    %741 = vmatpush1.msra.mxu0 %v713
    %742 = vmatprep.subr.mxu0 0.0
    %743 = vmatpush1.msra.mxu0 %v714
    %744 = vmatprep.subr.mxu0 0.0
    %745 = vmatpush1.msra.mxu0 %v715
    %746 = vmatprep.subr.mxu0 0.0
    %747 = vmatpush1.msra.mxu0 %v716
    %748 = vmatprep.subr.mxu0 0.0
    %749 = vmatpush1.msra.mxu0 %v717
    %750 = vmatprep.subr.mxu0 0.0
    %751 = vmatpush1.msra.mxu0 0.0
    %752 = vmatprep.subr.mxu0 0.0
    %753 = vmatpush1.msra.mxu0 0.0
    %754 = vmatprep.subr.mxu0 0.0
    %755 = vmatpush1.msra.mxu0 0.0
    %756 = vmatprep.subr.mxu0 0.0
    %757 = vmatpush1.msra.mxu0 0.0
    %758 = vmatprep.subr.mxu0 0.0
    %759 = vmatpush1.msra.mxu0 0.0
    %760 = vmatprep.subr.mxu0 0.0
    %761 = vmatpush1.msra.mxu0 0.0
    %762 = vmatprep.subr.mxu0 0.0
    %763 = vmatpush1.msra.mxu0 0.0
    %764 = vmatprep.subr.mxu0 0.0
    %765 = vmatpush1.msra.mxu0 0.0
    %766 = vmatprep.subr.mxu0 0.0
    %767 = vmatpush1.msra.mxu0 0.0
    %768 = vmatprep.subr.mxu0 0.0
    %769 = vmatpush1.msra.mxu0 0.0
    %770 = vmatprep.subr.mxu0 0.0
    %771 = vmatpush1.msra.mxu0 0.0
    %772 = vmatprep.subr.mxu0 0.0
    %773 = vmatpush1.msra.mxu0 0.0
    %774 = vmatprep.subr.mxu0 0.0
    %775 = vmatpush1.msra.mxu0 0.0
    %776 = vmatprep.subr.mxu0 0.0
    %777 = vmatpush1.msra.mxu0 0.0
    %778 = vmatprep.subr.mxu0 0.0
    %779 = vmatpush1.msra.mxu0 0.0
    %780 = vmatprep.subr.mxu0 0.0
    %781 = vmatpush1.msra.mxu0 0.0
    %782 = vmatprep.mubr.f32.mxu0 0.0
    %783 = vmatmul.mubr.f32.gmra.mrb[0].mxu0 %v695
    %v784 = vpop.f32.mrb[0].mxu0
    %v785 = vadd.f32 0.0, %v784
    %v786 = vpop.f32.mrb[0].mxu0
    %787 = vmatprep.mubr.f32.mxu0 0.0
    %788 = vmatmul.mubr.f32.gmra.mrb[0].mxu0 %v696
    %v789 = vpop.f32.mrb[0].mxu0
    %v790 = vadd.f32 0.0, %v789
    %v791 = vpop.f32.mrb[0].mxu0
    %792 = vmatprep.mubr.f32.mxu0 0.0
    %793 = vmatmul.mubr.f32.gmra.mrb[0].mxu0 %v697
    %v794 = vpop.f32.mrb[0].mxu0
    %v795 = vadd.f32 0.0, %v794
    %v796 = vpop.f32.mrb[0].mxu0
    %797 = vmatprep.mubr.f32.mxu0 0.0
    %798 = vmatmul.mubr.f32.gmra.mrb[0].mxu0 %v698
    %v799 = vpop.f32.mrb[0].mxu0
    %v800 = vadd.f32 0.0, %v799
    %v801 = vpop.f32.mrb[0].mxu0
    %802 = vmatprep.mubr.f32.mxu0 0.0
    %803 = vmatmul.mubr.f32.gmra.mrb[0].mxu0 %v699
    %v804 = vpop.f32.mrb[0].mxu0
    %v805 = vadd.f32 0.0, %v804
    %v806 = vpop.f32.mrb[0].mxu0
    %807 = vmatprep.mubr.f32.mxu0 0.0
    %808 = vmatmul.mubr.f32.gmra.mrb[0].mxu0 %v700
    %v809 = vpop.f32.mrb[0].mxu0
    %v810 = vadd.f32 0.0, %v809
    %v811 = vpop.f32.mrb[0].mxu0
    %812 = vmatprep.mubr.f32.mxu0 0.0
    %813 = vmatmul.mubr.f32.gmra.mrb[0].mxu0 %v701
    %v814 = vpop.f32.mrb[0].mxu0
    %v815 = vadd.f32 0.0, %v814
    %v816 = vpop.f32.mrb[0].mxu0
    %817 = vdwg.mxu0
    %818 = vst [vmem:[#allocation2] sm:$0xff] %v650
    %819 = vst [vmem:[#allocation2 + $0x8] sm:$0xff] %v785
    %820 = vst [vmem:[#allocation2 + $0x10] sm:$0xff] %v790
    %821 = vst [vmem:[#allocation2 + $0x18] sm:$0xff] %v795
    %822 = vst [vmem:[#allocation2 + $0x20] sm:$0xff] %v800
    %823 = vst [vmem:[#allocation2 + $0x28] sm:$0xff] %v805
    %824 = vst [vmem:[#allocation2 + $0x30] sm:$0xff] %v810
    %825 = vst [vmem:[#allocation2 + $0x38] sm:$0xff] %v815
    %vm826 = vcmp.ge.s32.totalorder %v659, 32
    %vm827 = vcmp.lt.s32.totalorder %v659, 64
    %vm828 = vmand %vm826, %vm827
    %vm829 = vcmp.ge.s32.totalorder %v659, 96
    %v830 = vld [vmem:[#allocation2] sm:$0xff]
    %v831 = vld [vmem:[#allocation2 + $0x8] sm:$0xff]
    %v832 = vld [vmem:[#allocation2 + $0x10] sm:$0xff]
    %v833 = vld [vmem:[#allocation2 + $0x18] sm:$0xff]
    %v834 = vld [vmem:[#allocation2 + $0x20] sm:$0xff]
    %v835 = vld [vmem:[#allocation2 + $0x28] sm:$0xff]
    %v836 = vld [vmem:[#allocation2 + $0x30] sm:$0xff]
    %v837 = vld [vmem:[#allocation2 + $0x38] sm:$0xff]
    %v838 = vld [vmem:[#allocation8] sm:$0xff]
    %v839 = vld [vmem:[#allocation8 + $0x8] sm:$0xff]
    %v840 = vld [vmem:[#allocation8 + $0x10] sm:$0xff]
    %v841 = vld [vmem:[#allocation8 + $0x18] sm:$0xff]
    %v842 = vld [vmem:[#allocation8 + $0x20] sm:$0xff]
    %v843 = vld [vmem:[#allocation8 + $0x28] sm:$0xff]
    %v844 = vld [vmem:[#allocation8 + $0x30] sm:$0xff]
    %v845 = vld [vmem:[#allocation8 + $0x38] sm:$0xff]
    %v846 = vld [vmem:[#allocation8 + $0x40] sm:$0xff]
    %v847 = vld [vmem:[#allocation8 + $0x48] sm:$0xff]
    %v848 = vld [vmem:[#allocation8 + $0x50] sm:$0xff]
    %v849 = vld [vmem:[#allocation8 + $0x58] sm:$0xff]
    %v850 = vld [vmem:[#allocation8 + $0x60] sm:$0xff]
    %v851 = vld [vmem:[#allocation8 + $0x68] sm:$0xff]
    %v852 = vld [vmem:[#allocation8 + $0x70] sm:$0xff]
    %v853 = vld [vmem:[#allocation8 + $0x78] sm:$0xff]
    %v854 = vld [vmem:[%s9] sm:$0x1]
    %v856 = vlaneseq
    %v857 = vshrl.u32 %v856, 7
    %v858 = vsub.s32 0, %v857
    %v859 = vrot.slane %v854, %v858
    %861 = vmatprep.subr.mxu0 0.0
    %862 = vmatpush1.msra.mxu0 %v838
    %863 = vmatprep.subr.mxu0 0.0
    %864 = vmatpush1.msra.mxu0 %v839
    %865 = vmatprep.subr.mxu0 0.0
    %866 = vmatpush1.msra.mxu0 %v840
    %867 = vmatprep.subr.mxu0 0.0
    %868 = vmatpush1.msra.mxu0 %v841
    %869 = vmatprep.subr.mxu0 0.0
    %870 = vmatpush1.msra.mxu0 %v842
    %871 = vmatprep.subr.mxu0 0.0
    %872 = vmatpush1.msra.mxu0 %v843
    %873 = vmatprep.subr.mxu0 0.0
    %874 = vmatpush1.msra.mxu0 %v844
    %875 = vmatprep.subr.mxu0 0.0
    %876 = vmatpush1.msra.mxu0 %v845
    %877 = vmatprep.subr.mxu0 0.0
    %878 = vmatpush1.msra.mxu0 %v846
    %879 = vmatprep.subr.mxu0 0.0
    %880 = vmatpush1.msra.mxu0 %v847
    %881 = vmatprep.subr.mxu0 0.0
    %882 = vmatpush1.msra.mxu0 %v848
    %883 = vmatprep.subr.mxu0 0.0
    %884 = vmatpush1.msra.mxu0 %v849
    %885 = vmatprep.subr.mxu0 0.0
    %886 = vmatpush1.msra.mxu0 %v850
    %887 = vmatprep.subr.mxu0 0.0
    %888 = vmatpush1.msra.mxu0 %v851
    %889 = vmatprep.subr.mxu0 0.0
    %890 = vmatpush1.msra.mxu0 %v852
    %891 = vmatprep.subr.mxu0 0.0
    %892 = vmatpush1.msra.mxu0 %v853
    %893 = vmatprep.subr.mxu0 0.0
    %894 = vmatpush1.msra.mxu0 0.0
    %895 = vmatprep.subr.mxu0 0.0
    %896 = vmatpush1.msra.mxu0 0.0
    %897 = vmatprep.subr.mxu0 0.0
    %898 = vmatpush1.msra.mxu0 0.0
    %899 = vmatprep.subr.mxu0 0.0
    %900 = vmatpush1.msra.mxu0 0.0
    %901 = vmatprep.subr.mxu0 0.0
    %902 = vmatpush1.msra.mxu0 0.0
    %903 = vmatprep.subr.mxu0 0.0
    %904 = vmatpush1.msra.mxu0 0.0
    %905 = vmatprep.subr.mxu0 0.0
    %906 = vmatpush1.msra.mxu0 0.0
    %907 = vmatprep.subr.mxu0 0.0
    %908 = vmatpush1.msra.mxu0 0.0
    %909 = vmatprep.subr.mxu0 0.0
    %910 = vmatpush1.msra.mxu0 0.0
    %911 = vmatprep.subr.mxu0 0.0
    %912 = vmatpush1.msra.mxu0 0.0
    %913 = vmatprep.subr.mxu0 0.0
    %914 = vmatpush1.msra.mxu0 0.0
    %915 = vmatprep.subr.mxu0 0.0
    %916 = vmatpush1.msra.mxu0 0.0
    %917 = vmatprep.subr.mxu0 0.0
    %918 = vmatpush1.msra.mxu0 0.0
    %919 = vmatprep.subr.mxu0 0.0
    %920 = vmatpush1.msra.mxu0 0.0
    %921 = vmatprep.subr.mxu0 0.0
    %922 = vmatpush1.msra.mxu0 0.0
    %923 = vmatprep.subr.mxu0 0.0
    %924 = vmatpush1.msra.mxu0 0.0
    %925 = vmatprep.mubr.f32.mxu0 0.0
    %926 = vmatmul.mubr.f32.gmra.mrb[0].mxu0 %v830
    %v927 = vpop.f32.mrb[0].mxu0
    %v928 = vadd.f32 %v859, %v927
    %v929 = vpop.f32.mrb[0].mxu0
    %930 = vmatprep.mubr.f32.mxu0 0.0
    %931 = vmatmul.mubr.f32.gmra.mrb[0].mxu0 %v831
    %v932 = vpop.f32.mrb[0].mxu0
    %v933 = vadd.f32 %v859, %v932
    %v934 = vpop.f32.mrb[0].mxu0
    %935 = vmatprep.mubr.f32.mxu0 0.0
    %936 = vmatmul.mubr.f32.gmra.mrb[0].mxu0 %v832
    %v937 = vpop.f32.mrb[0].mxu0
    %v938 = vadd.f32 %v859, %v937
    %v939 = vpop.f32.mrb[0].mxu0
    %940 = vmatprep.mubr.f32.mxu0 0.0
    %941 = vmatmul.mubr.f32.gmra.mrb[0].mxu0 %v833
    %v942 = vpop.f32.mrb[0].mxu0
    %v943 = vadd.f32 %v859, %v942
    %v944 = vpop.f32.mrb[0].mxu0
    %945 = vmatprep.mubr.f32.mxu0 0.0
    %946 = vmatmul.mubr.f32.gmra.mrb[0].mxu0 %v834
    %v947 = vpop.f32.mrb[0].mxu0
    %v948 = vadd.f32 %v859, %v947
    %v949 = vpop.f32.mrb[0].mxu0
    %950 = vmatprep.mubr.f32.mxu0 0.0
    %951 = vmatmul.mubr.f32.gmra.mrb[0].mxu0 %v835
    %v952 = vpop.f32.mrb[0].mxu0
    %v953 = vadd.f32 %v859, %v952
    %v954 = vpop.f32.mrb[0].mxu0
    %955 = vmatprep.mubr.f32.mxu0 0.0
    %956 = vmatmul.mubr.f32.gmra.mrb[0].mxu0 %v836
    %v957 = vpop.f32.mrb[0].mxu0
    %v958 = vadd.f32 %v859, %v957
    %v959 = vpop.f32.mrb[0].mxu0
    %960 = vmatprep.mubr.f32.mxu0 0.0
    %961 = vmatmul.mubr.f32.gmra.mrb[0].mxu0 %v837
    %v962 = vpop.f32.mrb[0].mxu0
    %v963 = vadd.f32 %v859, %v962
    %v964 = vpop.f32.mrb[0].mxu0
    %965 = vdwg.mxu0
    %966 = vst [vmem:[#allocation3] sm:$0xff] %v928
    %967 = vst [vmem:[#allocation3 + $0x8] sm:$0xff] %v933
    %968 = vst [vmem:[#allocation3 + $0x10] sm:$0xff] %v938
    %969 = vst [vmem:[#allocation3 + $0x18] sm:$0xff] %v943
    %970 = vst [vmem:[#allocation3 + $0x20] sm:$0xff] %v948
    %971 = vst [vmem:[#allocation3 + $0x28] sm:$0xff] %v953
    %972 = vst [vmem:[#allocation3 + $0x30] sm:$0xff] %v958
    %973 = vst [vmem:[#allocation3 + $0x38] sm:$0xff] %v963
    %v974 = vld [vmem:[#allocation3] sm:$0xff]
    %v975 = vld [vmem:[#allocation9] sm:$0xff]
    %v976 = vld [vmem:[#allocation9 + $0x8] sm:$0xff]
    %v977 = vld [vmem:[#allocation9 + $0x10] sm:$0xff]
    %v978 = vld [vmem:[#allocation9 + $0x18] sm:$0xff]
    %v979 = vld [vmem:[#allocation9 + $0x20] sm:$0xff]
    %v980 = vld [vmem:[#allocation9 + $0x28] sm:$0xff]
    %v981 = vld [vmem:[#allocation9 + $0x30] sm:$0xff]
    %v982 = vld [vmem:[#allocation9 + $0x38] sm:$0xff]
    %v983 = vld [vmem:[#allocation9 + $0x40] sm:$0xff]
    %v984 = vld [vmem:[#allocation9 + $0x48] sm:$0xff]
    %v985 = vld [vmem:[#allocation9 + $0x50] sm:$0xff]
    %v986 = vld [vmem:[#allocation9 + $0x58] sm:$0xff]
    %v987 = vld [vmem:[#allocation9 + $0x60] sm:$0xff]
    %v988 = vld [vmem:[#allocation9 + $0x68] sm:$0xff]
    %v989 = vld [vmem:[#allocation9 + $0x70] sm:$0xff]
    %v990 = vld [vmem:[#allocation9 + $0x78] sm:$0xff]
    %991 = vmatprep.subr.mxu0 0.0
    %992 = vmatpush1.msra.mxu0 %v975
    %993 = vmatprep.subr.mxu0 0.0
    %994 = vmatpush1.msra.mxu0 %v976
    %995 = vmatprep.subr.mxu0 0.0
    %996 = vmatpush1.msra.mxu0 %v977
    %997 = vmatprep.subr.mxu0 0.0
    %998 = vmatpush1.msra.mxu0 %v978
    %999 = vmatprep.subr.mxu0 0.0
    %1000 = vmatpush1.msra.mxu0 %v979
    %1001 = vmatprep.subr.mxu0 0.0
    %1002 = vmatpush1.msra.mxu0 %v980
    %1003 = vmatprep.subr.mxu0 0.0
    %1004 = vmatpush1.msra.mxu0 %v981
    %1005 = vmatprep.subr.mxu0 0.0
    %1006 = vmatpush1.msra.mxu0 %v982
    %1007 = vmatprep.subr.mxu0 0.0
    %1008 = vmatpush1.msra.mxu0 %v983
    %1009 = vmatprep.subr.mxu0 0.0
    %1010 = vmatpush1.msra.mxu0 %v984
    %1011 = vmatprep.subr.mxu0 0.0
    %1012 = vmatpush1.msra.mxu0 %v985
    %1013 = vmatprep.subr.mxu0 0.0
    %1014 = vmatpush1.msra.mxu0 %v986
    %1015 = vmatprep.subr.mxu0 0.0
    %1016 = vmatpush1.msra.mxu0 %v987
    %1017 = vmatprep.subr.mxu0 0.0
    %1018 = vmatpush1.msra.mxu0 %v988
    %1019 = vmatprep.subr.mxu0 0.0
    %1020 = vmatpush1.msra.mxu0 %v989
    %1021 = vmatprep.subr.mxu0 0.0
    %1022 = vmatpush1.msra.mxu0 %v990
    %1023 = vmatprep.subr.mxu0 0.0
    %1024 = vmatpush1.msra.mxu0 0.0
    %1025 = vmatprep.subr.mxu0 0.0
    %1026 = vmatpush1.msra.mxu0 0.0
    %1027 = vmatprep.subr.mxu0 0.0
    %1028 = vmatpush1.msra.mxu0 0.0
    %1029 = vmatprep.subr.mxu0 0.0
    %1030 = vmatpush1.msra.mxu0 0.0
    %1031 = vmatprep.subr.mxu0 0.0
    %1032 = vmatpush1.msra.mxu0 0.0
    %1033 = vmatprep.subr.mxu0 0.0
    %1034 = vmatpush1.msra.mxu0 0.0
    %1035 = vmatprep.subr.mxu0 0.0
    %1036 = vmatpush1.msra.mxu0 0.0
    %1037 = vmatprep.subr.mxu0 0.0
    %1038 = vmatpush1.msra.mxu0 0.0
    %1039 = vmatprep.subr.mxu0 0.0
    %1040 = vmatpush1.msra.mxu0 0.0
    %1041 = vmatprep.subr.mxu0 0.0
    %1042 = vmatpush1.msra.mxu0 0.0
    %1043 = vmatprep.subr.mxu0 0.0
    %1044 = vmatpush1.msra.mxu0 0.0
    %1045 = vmatprep.subr.mxu0 0.0
    %1046 = vmatpush1.msra.mxu0 0.0
    %1047 = vmatprep.subr.mxu0 0.0
    %1048 = vmatpush1.msra.mxu0 0.0
    %1049 = vmatprep.subr.mxu0 0.0
    %1050 = vmatpush1.msra.mxu0 0.0
    %1051 = vmatprep.subr.mxu0 0.0
    %1052 = vmatpush1.msra.mxu0 0.0
    %1053 = vmatprep.subr.mxu0 0.0
    %1054 = vmatpush1.msra.mxu0 0.0
    %1055 = vmatprep.mubr.f32.mxu0 0.0
    %1056 = vmatmul.mubr.f32.gmra.mrb[0].mxu0 0.0
    %v1057 = vpop.f32.mrb[0].mxu0
    %v1058 = vadd.f32 0.0, %v1057
    %v1059 = vpop.f32.mrb[0].mxu0
    %1060 = vdwg.mxu0
    %v1061 = vadd.f32 %v974, %v1058
    %v1062 = vxor.u32 %v1061, 2147483648
    %v1063 = vmul.f32 %v1062, 1.442695
    %v1064 = vpow.pop %v1063
    %v1065 = vadd.f32 %v1064, 1.0
    %v1066 = vrcp.pop %v1065
    %v1067 = vmul.f32 1.0, %v1066
    %v1068 = vtanh.pop %v1061
    %1069 = vrot.lane.b32.xlu0 %v1068, 64
    %v1070 = vpop.permute.xlu0 %1069
    %v1071 = vsel %vm828, 0.0, %v1070
    %v1072 = vmul.f32 %v1067, %v1071
    %v1073 = vsel %vm827, %v1072, 0.0
    %1074 = vrot.lane.b32.xlu0 %v1073, 64
    %v1075 = vpop.permute.xlu0 %1074
    %v1076 = vadd.f32 %v1073, %v1075
    %1077 = vrot.lane.b32.xlu0 %v1076, 32
    %v1078 = vpop.permute.xlu0 %1077
    %v1079 = vadd.f32 %v1076, %v1078
    %v1080 = vtanh.pop %v1079
    %v1081 = vmul.f32 %v1067, %v1080
    %v1082 = vsel %vm829, %v1081, 0.0
    %1083 = vst [vmem:[#allocation2] sm:$0xff] %v1082
    %v1084 = vld [vmem:[#allocation3 + $0x8] sm:$0xff]
    %v1085 = vld [vmem:[#allocation9] sm:$0xff]
    %v1086 = vld [vmem:[#allocation9 + $0x8] sm:$0xff]
    %v1087 = vld [vmem:[#allocation9 + $0x10] sm:$0xff]
    %v1088 = vld [vmem:[#allocation9 + $0x18] sm:$0xff]
    %v1089 = vld [vmem:[#allocation9 + $0x20] sm:$0xff]
    %v1090 = vld [vmem:[#allocation9 + $0x28] sm:$0xff]
    %v1091 = vld [vmem:[#allocation9 + $0x30] sm:$0xff]
    %v1092 = vld [vmem:[#allocation9 + $0x38] sm:$0xff]
    %v1093 = vld [vmem:[#allocation9 + $0x40] sm:$0xff]
    %v1094 = vld [vmem:[#allocation9 + $0x48] sm:$0xff]
    %v1095 = vld [vmem:[#allocation9 + $0x50] sm:$0xff]
    %v1096 = vld [vmem:[#allocation9 + $0x58] sm:$0xff]
    %v1097 = vld [vmem:[#allocation9 + $0x60] sm:$0xff]
    %v1098 = vld [vmem:[#allocation9 + $0x68] sm:$0xff]
    %v1099 = vld [vmem:[#allocation9 + $0x70] sm:$0xff]
    %v1100 = vld [vmem:[#allocation9 + $0x78] sm:$0xff]
    %1101 = vmatprep.subr.mxu0 0.0
    %1102 = vmatpush1.msra.mxu0 %v1085
    %1103 = vmatprep.subr.mxu0 0.0
    %1104 = vmatpush1.msra.mxu0 %v1086
    %1105 = vmatprep.subr.mxu0 0.0
    %1106 = vmatpush1.msra.mxu0 %v1087
    %1107 = vmatprep.subr.mxu0 0.0
    %1108 = vmatpush1.msra.mxu0 %v1088
    %1109 = vmatprep.subr.mxu0 0.0
    %1110 = vmatpush1.msra.mxu0 %v1089
    %1111 = vmatprep.subr.mxu0 0.0
    %1112 = vmatpush1.msra.mxu0 %v1090
    %1113 = vmatprep.subr.mxu0 0.0
    %1114 = vmatpush1.msra.mxu0 %v1091
    %1115 = vmatprep.subr.mxu0 0.0
    %1116 = vmatpush1.msra.mxu0 %v1092
    %1117 = vmatprep.subr.mxu0 0.0
    %1118 = vmatpush1.msra.mxu0 %v1093
    %1119 = vmatprep.subr.mxu0 0.0
    %1120 = vmatpush1.msra.mxu0 %v1094
    %1121 = vmatprep.subr.mxu0 0.0
    %1122 = vmatpush1.msra.mxu0 %v1095
    %1123 = vmatprep.subr.mxu0 0.0
    %1124 = vmatpush1.msra.mxu0 %v1096
    %1125 = vmatprep.subr.mxu0 0.0
    %1126 = vmatpush1.msra.mxu0 %v1097
    %1127 = vmatprep.subr.mxu0 0.0
    %1128 = vmatpush1.msra.mxu0 %v1098
    %1129 = vmatprep.subr.mxu0 0.0
    %1130 = vmatpush1.msra.mxu0 %v1099
    %1131 = vmatprep.subr.mxu0 0.0
    %1132 = vmatpush1.msra.mxu0 %v1100
    %1133 = vmatprep.subr.mxu0 0.0
    %1134 = vmatpush1.msra.mxu0 0.0
    %1135 = vmatprep.subr.mxu0 0.0
    %1136 = vmatpush1.msra.mxu0 0.0
    %1137 = vmatprep.subr.mxu0 0.0
    %1138 = vmatpush1.msra.mxu0 0.0
    %1139 = vmatprep.subr.mxu0 0.0
    %1140 = vmatpush1.msra.mxu0 0.0
    %1141 = vmatprep.subr.mxu0 0.0
    %1142 = vmatpush1.msra.mxu0 0.0
    %1143 = vmatprep.subr.mxu0 0.0
    %1144 = vmatpush1.msra.mxu0 0.0
    %1145 = vmatprep.subr.mxu0 0.0
    %1146 = vmatpush1.msra.mxu0 0.0
    %1147 = vmatprep.subr.mxu0 0.0
    %1148 = vmatpush1.msra.mxu0 0.0
    %1149 = vmatprep.subr.mxu0 0.0
    %1150 = vmatpush1.msra.mxu0 0.0
    %1151 = vmatprep.subr.mxu0 0.0
    %1152 = vmatpush1.msra.mxu0 0.0
    %1153 = vmatprep.subr.mxu0 0.0
    %1154 = vmatpush1.msra.mxu0 0.0
    %1155 = vmatprep.subr.mxu0 0.0
    %1156 = vmatpush1.msra.mxu0 0.0
    %1157 = vmatprep.subr.mxu0 0.0
    %1158 = vmatpush1.msra.mxu0 0.0
    %1159 = vmatprep.subr.mxu0 0.0
    %1160 = vmatpush1.msra.mxu0 0.0
    %1161 = vmatprep.subr.mxu0 0.0
    %1162 = vmatpush1.msra.mxu0 0.0
    %1163 = vmatprep.subr.mxu0 0.0
    %1164 = vmatpush1.msra.mxu0 0.0
    %1165 = vmatprep.mubr.f32.mxu0 0.0
    %1166 = vmatmul.mubr.f32.gmra.mrb[0].mxu0 %v1082
    %v1167 = vpop.f32.mrb[0].mxu0
    %v1168 = vadd.f32 0.0, %v1167
    %v1169 = vpop.f32.mrb[0].mxu0
    %1170 = vdwg.mxu0
    %v1171 = vadd.f32 %v1084, %v1168
    %v1172 = vxor.u32 %v1171, 2147483648
    %v1173 = vmul.f32 %v1172, 1.442695
    %v1174 = vpow.pop %v1173
    %v1175 = vadd.f32 %v1174, 1.0
    %v1176 = vrcp.pop %v1175
    %v1177 = vmul.f32 1.0, %v1176
    %v1178 = vtanh.pop %v1171
    %1179 = vrot.lane.b32.xlu0 %v1178, 64
    %v1180 = vpop.permute.xlu0 %1179
    %v1181 = vsel %vm828, %v1079, %v1180
    %v1182 = vmul.f32 %v1177, %v1181
    %v1183 = vsel %vm827, %v1182, 0.0
    %1184 = vrot.lane.b32.xlu0 %v1183, 64
    %v1185 = vpop.permute.xlu0 %1184
    %v1186 = vadd.f32 %v1183, %v1185
    %1187 = vrot.lane.b32.xlu0 %v1186, 32
    %v1188 = vpop.permute.xlu0 %1187
    %v1189 = vadd.f32 %v1186, %v1188
    %v1190 = vtanh.pop %v1189
    %v1191 = vmul.f32 %v1177, %v1190
    %v1192 = vsel %vm829, %v1191, 0.0
    %1193 = vst [vmem:[#allocation2 + $0x8] sm:$0xff] %v1192
    %v1194 = vld [vmem:[#allocation3 + $0x10] sm:$0xff]
    %v1195 = vld [vmem:[#allocation9] sm:$0xff]
    %v1196 = vld [vmem:[#allocation9 + $0x8] sm:$0xff]
    %v1197 = vld [vmem:[#allocation9 + $0x10] sm:$0xff]
    %v1198 = vld [vmem:[#allocation9 + $0x18] sm:$0xff]
    %v1199 = vld [vmem:[#allocation9 + $0x20] sm:$0xff]
    %v1200 = vld [vmem:[#allocation9 + $0x28] sm:$0xff]
    %v1201 = vld [vmem:[#allocation9 + $0x30] sm:$0xff]
    %v1202 = vld [vmem:[#allocation9 + $0x38] sm:$0xff]
    %v1203 = vld [vmem:[#allocation9 + $0x40] sm:$0xff]
    %v1204 = vld [vmem:[#allocation9 + $0x48] sm:$0xff]
    %v1205 = vld [vmem:[#allocation9 + $0x50] sm:$0xff]
    %v1206 = vld [vmem:[#allocation9 + $0x58] sm:$0xff]
    %v1207 = vld [vmem:[#allocation9 + $0x60] sm:$0xff]
    %v1208 = vld [vmem:[#allocation9 + $0x68] sm:$0xff]
    %v1209 = vld [vmem:[#allocation9 + $0x70] sm:$0xff]
    %v1210 = vld [vmem:[#allocation9 + $0x78] sm:$0xff]
    %1211 = vmatprep.subr.mxu0 0.0
    %1212 = vmatpush1.msra.mxu0 %v1195
    %1213 = vmatprep.subr.mxu0 0.0
    %1214 = vmatpush1.msra.mxu0 %v1196
    %1215 = vmatprep.subr.mxu0 0.0
    %1216 = vmatpush1.msra.mxu0 %v1197
    %1217 = vmatprep.subr.mxu0 0.0
    %1218 = vmatpush1.msra.mxu0 %v1198
    %1219 = vmatprep.subr.mxu0 0.0
    %1220 = vmatpush1.msra.mxu0 %v1199
    %1221 = vmatprep.subr.mxu0 0.0
    %1222 = vmatpush1.msra.mxu0 %v1200
    %1223 = vmatprep.subr.mxu0 0.0
    %1224 = vmatpush1.msra.mxu0 %v1201
    %1225 = vmatprep.subr.mxu0 0.0
    %1226 = vmatpush1.msra.mxu0 %v1202
    %1227 = vmatprep.subr.mxu0 0.0
    %1228 = vmatpush1.msra.mxu0 %v1203
    %1229 = vmatprep.subr.mxu0 0.0
    %1230 = vmatpush1.msra.mxu0 %v1204
    %1231 = vmatprep.subr.mxu0 0.0
    %1232 = vmatpush1.msra.mxu0 %v1205
    %1233 = vmatprep.subr.mxu0 0.0
    %1234 = vmatpush1.msra.mxu0 %v1206
    %1235 = vmatprep.subr.mxu0 0.0
    %1236 = vmatpush1.msra.mxu0 %v1207
    %1237 = vmatprep.subr.mxu0 0.0
    %1238 = vmatpush1.msra.mxu0 %v1208
    %1239 = vmatprep.subr.mxu0 0.0
    %1240 = vmatpush1.msra.mxu0 %v1209
    %1241 = vmatprep.subr.mxu0 0.0
    %1242 = vmatpush1.msra.mxu0 %v1210
    %1243 = vmatprep.subr.mxu0 0.0
    %1244 = vmatpush1.msra.mxu0 0.0
    %1245 = vmatprep.subr.mxu0 0.0
    %1246 = vmatpush1.msra.mxu0 0.0
    %1247 = vmatprep.subr.mxu0 0.0
    %1248 = vmatpush1.msra.mxu0 0.0
    %1249 = vmatprep.subr.mxu0 0.0
    %1250 = vmatpush1.msra.mxu0 0.0
    %1251 = vmatprep.subr.mxu0 0.0
    %1252 = vmatpush1.msra.mxu0 0.0
    %1253 = vmatprep.subr.mxu0 0.0
    %1254 = vmatpush1.msra.mxu0 0.0
    %1255 = vmatprep.subr.mxu0 0.0
    %1256 = vmatpush1.msra.mxu0 0.0
    %1257 = vmatprep.subr.mxu0 0.0
    %1258 = vmatpush1.msra.mxu0 0.0
    %1259 = vmatprep.subr.mxu0 0.0
    %1260 = vmatpush1.msra.mxu0 0.0
    %1261 = vmatprep.subr.mxu0 0.0
    %1262 = vmatpush1.msra.mxu0 0.0
    %1263 = vmatprep.subr.mxu0 0.0
    %1264 = vmatpush1.msra.mxu0 0.0
    %1265 = vmatprep.subr.mxu0 0.0
    %1266 = vmatpush1.msra.mxu0 0.0
    %1267 = vmatprep.subr.mxu0 0.0
    %1268 = vmatpush1.msra.mxu0 0.0
    %1269 = vmatprep.subr.mxu0 0.0
    %1270 = vmatpush1.msra.mxu0 0.0
    %1271 = vmatprep.subr.mxu0 0.0
    %1272 = vmatpush1.msra.mxu0 0.0
    %1273 = vmatprep.subr.mxu0 0.0
    %1274 = vmatpush1.msra.mxu0 0.0
    %1275 = vmatprep.mubr.f32.mxu0 0.0
    %1276 = vmatmul.mubr.f32.gmra.mrb[0].mxu0 %v1192
    %v1277 = vpop.f32.mrb[0].mxu0
    %v1278 = vadd.f32 0.0, %v1277
    %v1279 = vpop.f32.mrb[0].mxu0
    %1280 = vdwg.mxu0
    %v1281 = vadd.f32 %v1194, %v1278
    %v1282 = vxor.u32 %v1281, 2147483648
    %v1283 = vmul.f32 %v1282, 1.442695
    %v1284 = vpow.pop %v1283
    %v1285 = vadd.f32 %v1284, 1.0
    %v1286 = vrcp.pop %v1285
    %v1287 = vmul.f32 1.0, %v1286
    %v1288 = vtanh.pop %v1281
    %1289 = vrot.lane.b32.xlu0 %v1288, 64
    %v1290 = vpop.permute.xlu0 %1289
    %v1291 = vsel %vm828, %v1189, %v1290
    %v1292 = vmul.f32 %v1287, %v1291
    %v1293 = vsel %vm827, %v1292, 0.0
    %1294 = vrot.lane.b32.xlu0 %v1293, 64
    %v1295 = vpop.permute.xlu0 %1294
    %v1296 = vadd.f32 %v1293, %v1295
    %1297 = vrot.lane.b32.xlu0 %v1296, 32
    %v1298 = vpop.permute.xlu0 %1297
    %v1299 = vadd.f32 %v1296, %v1298
    %v1300 = vtanh.pop %v1299
    %v1301 = vmul.f32 %v1287, %v1300
    %v1302 = vsel %vm829, %v1301, 0.0
    %1303 = vst [vmem:[#allocation2 + $0x10] sm:$0xff] %v1302
    %v1304 = vld [vmem:[#allocation3 + $0x18] sm:$0xff]
    %v1305 = vld [vmem:[#allocation9] sm:$0xff]
    %v1306 = vld [vmem:[#allocation9 + $0x8] sm:$0xff]
    %v1307 = vld [vmem:[#allocation9 + $0x10] sm:$0xff]
    %v1308 = vld [vmem:[#allocation9 + $0x18] sm:$0xff]
    %v1309 = vld [vmem:[#allocation9 + $0x20] sm:$0xff]
    %v1310 = vld [vmem:[#allocation9 + $0x28] sm:$0xff]
    %v1311 = vld [vmem:[#allocation9 + $0x30] sm:$0xff]
    %v1312 = vld [vmem:[#allocation9 + $0x38] sm:$0xff]
    %v1313 = vld [vmem:[#allocation9 + $0x40] sm:$0xff]
    %v1314 = vld [vmem:[#allocation9 + $0x48] sm:$0xff]
    %v1315 = vld [vmem:[#allocation9 + $0x50] sm:$0xff]
    %v1316 = vld [vmem:[#allocation9 + $0x58] sm:$0xff]
    %v1317 = vld [vmem:[#allocation9 + $0x60] sm:$0xff]
    %v1318 = vld [vmem:[#allocation9 + $0x68] sm:$0xff]
    %v1319 = vld [vmem:[#allocation9 + $0x70] sm:$0xff]
    %v1320 = vld [vmem:[#allocation9 + $0x78] sm:$0xff]
    %1321 = vmatprep.subr.mxu0 0.0
    %1322 = vmatpush1.msra.mxu0 %v1305
    %1323 = vmatprep.subr.mxu0 0.0
    %1324 = vmatpush1.msra.mxu0 %v1306
    %1325 = vmatprep.subr.mxu0 0.0
    %1326 = vmatpush1.msra.mxu0 %v1307
    %1327 = vmatprep.subr.mxu0 0.0
    %1328 = vmatpush1.msra.mxu0 %v1308
    %1329 = vmatprep.subr.mxu0 0.0
    %1330 = vmatpush1.msra.mxu0 %v1309
    %1331 = vmatprep.subr.mxu0 0.0
    %1332 = vmatpush1.msra.mxu0 %v1310
    %1333 = vmatprep.subr.mxu0 0.0
    %1334 = vmatpush1.msra.mxu0 %v1311
    %1335 = vmatprep.subr.mxu0 0.0
    %1336 = vmatpush1.msra.mxu0 %v1312
    %1337 = vmatprep.subr.mxu0 0.0
    %1338 = vmatpush1.msra.mxu0 %v1313
    %1339 = vmatprep.subr.mxu0 0.0
    %1340 = vmatpush1.msra.mxu0 %v1314
    %1341 = vmatprep.subr.mxu0 0.0
    %1342 = vmatpush1.msra.mxu0 %v1315
    %1343 = vmatprep.subr.mxu0 0.0
    %1344 = vmatpush1.msra.mxu0 %v1316
    %1345 = vmatprep.subr.mxu0 0.0
    %1346 = vmatpush1.msra.mxu0 %v1317
    %1347 = vmatprep.subr.mxu0 0.0
    %1348 = vmatpush1.msra.mxu0 %v1318
    %1349 = vmatprep.subr.mxu0 0.0
    %1350 = vmatpush1.msra.mxu0 %v1319
    %1351 = vmatprep.subr.mxu0 0.0
    %1352 = vmatpush1.msra.mxu0 %v1320
    %1353 = vmatprep.subr.mxu0 0.0
    %1354 = vmatpush1.msra.mxu0 0.0
    %1355 = vmatprep.subr.mxu0 0.0
    %1356 = vmatpush1.msra.mxu0 0.0
    %1357 = vmatprep.subr.mxu0 0.0
    %1358 = vmatpush1.msra.mxu0 0.0
    %1359 = vmatprep.subr.mxu0 0.0
    %1360 = vmatpush1.msra.mxu0 0.0
    %1361 = vmatprep.subr.mxu0 0.0
    %1362 = vmatpush1.msra.mxu0 0.0
    %1363 = vmatprep.subr.mxu0 0.0
    %1364 = vmatpush1.msra.mxu0 0.0
    %1365 = vmatprep.subr.mxu0 0.0
    %1366 = vmatpush1.msra.mxu0 0.0
    %1367 = vmatprep.subr.mxu0 0.0
    %1368 = vmatpush1.msra.mxu0 0.0
    %1369 = vmatprep.subr.mxu0 0.0
    %1370 = vmatpush1.msra.mxu0 0.0
    %1371 = vmatprep.subr.mxu0 0.0
    %1372 = vmatpush1.msra.mxu0 0.0
    %1373 = vmatprep.subr.mxu0 0.0
    %1374 = vmatpush1.msra.mxu0 0.0
    %1375 = vmatprep.subr.mxu0 0.0
    %1376 = vmatpush1.msra.mxu0 0.0
    %1377 = vmatprep.subr.mxu0 0.0
    %1378 = vmatpush1.msra.mxu0 0.0
    %1379 = vmatprep.subr.mxu0 0.0
    %1380 = vmatpush1.msra.mxu0 0.0
    %1381 = vmatprep.subr.mxu0 0.0
    %1382 = vmatpush1.msra.mxu0 0.0
    %1383 = vmatprep.subr.mxu0 0.0
    %1384 = vmatpush1.msra.mxu0 0.0
    %1385 = vmatprep.mubr.f32.mxu0 0.0
    %1386 = vmatmul.mubr.f32.gmra.mrb[0].mxu0 %v1302
    %v1387 = vpop.f32.mrb[0].mxu0
    %v1388 = vadd.f32 0.0, %v1387
    %v1389 = vpop.f32.mrb[0].mxu0
    %1390 = vdwg.mxu0
    %v1391 = vadd.f32 %v1304, %v1388
    %v1392 = vxor.u32 %v1391, 2147483648
    %v1393 = vmul.f32 %v1392, 1.442695
    %v1394 = vpow.pop %v1393
    %v1395 = vadd.f32 %v1394, 1.0
    %v1396 = vrcp.pop %v1395
    %v1397 = vmul.f32 1.0, %v1396
    %v1398 = vtanh.pop %v1391
    %1399 = vrot.lane.b32.xlu0 %v1398, 64
    %v1400 = vpop.permute.xlu0 %1399
    %v1401 = vsel %vm828, %v1299, %v1400
    %v1402 = vmul.f32 %v1397, %v1401
    %v1403 = vsel %vm827, %v1402, 0.0
    %1404 = vrot.lane.b32.xlu0 %v1403, 64
    %v1405 = vpop.permute.xlu0 %1404
    %v1406 = vadd.f32 %v1403, %v1405
    %1407 = vrot.lane.b32.xlu0 %v1406, 32
    %v1408 = vpop.permute.xlu0 %1407
    %v1409 = vadd.f32 %v1406, %v1408
    %v1410 = vtanh.pop %v1409
    %v1411 = vmul.f32 %v1397, %v1410
    %v1412 = vsel %vm829, %v1411, 0.0
    %1413 = vst [vmem:[#allocation2 + $0x18] sm:$0xff] %v1412
    %v1414 = vld [vmem:[#allocation3 + $0x20] sm:$0xff]
    %v1415 = vld [vmem:[#allocation9] sm:$0xff]
    %v1416 = vld [vmem:[#allocation9 + $0x8] sm:$0xff]
    %v1417 = vld [vmem:[#allocation9 + $0x10] sm:$0xff]
    %v1418 = vld [vmem:[#allocation9 + $0x18] sm:$0xff]
    %v1419 = vld [vmem:[#allocation9 + $0x20] sm:$0xff]
    %v1420 = vld [vmem:[#allocation9 + $0x28] sm:$0xff]
    %v1421 = vld [vmem:[#allocation9 + $0x30] sm:$0xff]
    %v1422 = vld [vmem:[#allocation9 + $0x38] sm:$0xff]
    %v1423 = vld [vmem:[#allocation9 + $0x40] sm:$0xff]
    %v1424 = vld [vmem:[#allocation9 + $0x48] sm:$0xff]
    %v1425 = vld [vmem:[#allocation9 + $0x50] sm:$0xff]
    %v1426 = vld [vmem:[#allocation9 + $0x58] sm:$0xff]
    %v1427 = vld [vmem:[#allocation9 + $0x60] sm:$0xff]
    %v1428 = vld [vmem:[#allocation9 + $0x68] sm:$0xff]
    %v1429 = vld [vmem:[#allocation9 + $0x70] sm:$0xff]
    %v1430 = vld [vmem:[#allocation9 + $0x78] sm:$0xff]
    %1431 = vmatprep.subr.mxu0 0.0
    %1432 = vmatpush1.msra.mxu0 %v1415
    %1433 = vmatprep.subr.mxu0 0.0
    %1434 = vmatpush1.msra.mxu0 %v1416
    %1435 = vmatprep.subr.mxu0 0.0
    %1436 = vmatpush1.msra.mxu0 %v1417
    %1437 = vmatprep.subr.mxu0 0.0
    %1438 = vmatpush1.msra.mxu0 %v1418
    %1439 = vmatprep.subr.mxu0 0.0
    %1440 = vmatpush1.msra.mxu0 %v1419
    %1441 = vmatprep.subr.mxu0 0.0
    %1442 = vmatpush1.msra.mxu0 %v1420
    %1443 = vmatprep.subr.mxu0 0.0
    %1444 = vmatpush1.msra.mxu0 %v1421
    %1445 = vmatprep.subr.mxu0 0.0
    %1446 = vmatpush1.msra.mxu0 %v1422
    %1447 = vmatprep.subr.mxu0 0.0
    %1448 = vmatpush1.msra.mxu0 %v1423
    %1449 = vmatprep.subr.mxu0 0.0
    %1450 = vmatpush1.msra.mxu0 %v1424
    %1451 = vmatprep.subr.mxu0 0.0
    %1452 = vmatpush1.msra.mxu0 %v1425
    %1453 = vmatprep.subr.mxu0 0.0
    %1454 = vmatpush1.msra.mxu0 %v1426
    %1455 = vmatprep.subr.mxu0 0.0
    %1456 = vmatpush1.msra.mxu0 %v1427
    %1457 = vmatprep.subr.mxu0 0.0
    %1458 = vmatpush1.msra.mxu0 %v1428
    %1459 = vmatprep.subr.mxu0 0.0
    %1460 = vmatpush1.msra.mxu0 %v1429
    %1461 = vmatprep.subr.mxu0 0.0
    %1462 = vmatpush1.msra.mxu0 %v1430
    %1463 = vmatprep.subr.mxu0 0.0
    %1464 = vmatpush1.msra.mxu0 0.0
    %1465 = vmatprep.subr.mxu0 0.0
    %1466 = vmatpush1.msra.mxu0 0.0
    %1467 = vmatprep.subr.mxu0 0.0
    %1468 = vmatpush1.msra.mxu0 0.0
    %1469 = vmatprep.subr.mxu0 0.0
    %1470 = vmatpush1.msra.mxu0 0.0
    %1471 = vmatprep.subr.mxu0 0.0
    %1472 = vmatpush1.msra.mxu0 0.0
    %1473 = vmatprep.subr.mxu0 0.0
    %1474 = vmatpush1.msra.mxu0 0.0
    %1475 = vmatprep.subr.mxu0 0.0
    %1476 = vmatpush1.msra.mxu0 0.0
    %1477 = vmatprep.subr.mxu0 0.0
    %1478 = vmatpush1.msra.mxu0 0.0
    %1479 = vmatprep.subr.mxu0 0.0
    %1480 = vmatpush1.msra.mxu0 0.0
    %1481 = vmatprep.subr.mxu0 0.0
    %1482 = vmatpush1.msra.mxu0 0.0
    %1483 = vmatprep.subr.mxu0 0.0
    %1484 = vmatpush1.msra.mxu0 0.0
    %1485 = vmatprep.subr.mxu0 0.0
    %1486 = vmatpush1.msra.mxu0 0.0
    %1487 = vmatprep.subr.mxu0 0.0
    %1488 = vmatpush1.msra.mxu0 0.0
    %1489 = vmatprep.subr.mxu0 0.0
    %1490 = vmatpush1.msra.mxu0 0.0
    %1491 = vmatprep.subr.mxu0 0.0
    %1492 = vmatpush1.msra.mxu0 0.0
    %1493 = vmatprep.subr.mxu0 0.0
    %1494 = vmatpush1.msra.mxu0 0.0
    %1495 = vmatprep.mubr.f32.mxu0 0.0
    %1496 = vmatmul.mubr.f32.gmra.mrb[0].mxu0 %v1412
    %v1497 = vpop.f32.mrb[0].mxu0
    %v1498 = vadd.f32 0.0, %v1497
    %v1499 = vpop.f32.mrb[0].mxu0
    %1500 = vdwg.mxu0
    %v1501 = vadd.f32 %v1414, %v1498
    %v1502 = vxor.u32 %v1501, 2147483648
    %v1503 = vmul.f32 %v1502, 1.442695
    %v1504 = vpow.pop %v1503
    %v1505 = vadd.f32 %v1504, 1.0
    %v1506 = vrcp.pop %v1505
    %v1507 = vmul.f32 1.0, %v1506
    %v1508 = vtanh.pop %v1501
    %1509 = vrot.lane.b32.xlu0 %v1508, 64
    %v1510 = vpop.permute.xlu0 %1509
    %v1511 = vsel %vm828, %v1409, %v1510
    %v1512 = vmul.f32 %v1507, %v1511
    %v1513 = vsel %vm827, %v1512, 0.0
    %1514 = vrot.lane.b32.xlu0 %v1513, 64
    %v1515 = vpop.permute.xlu0 %1514
    %v1516 = vadd.f32 %v1513, %v1515
    %1517 = vrot.lane.b32.xlu0 %v1516, 32
    %v1518 = vpop.permute.xlu0 %1517
    %v1519 = vadd.f32 %v1516, %v1518
    %v1520 = vtanh.pop %v1519
    %v1521 = vmul.f32 %v1507, %v1520
    %v1522 = vsel %vm829, %v1521, 0.0
    %1523 = vst [vmem:[#allocation2 + $0x20] sm:$0xff] %v1522
    %v1524 = vld [vmem:[#allocation3 + $0x28] sm:$0xff]
    %v1525 = vld [vmem:[#allocation9] sm:$0xff]
    %v1526 = vld [vmem:[#allocation9 + $0x8] sm:$0xff]
    %v1527 = vld [vmem:[#allocation9 + $0x10] sm:$0xff]
    %v1528 = vld [vmem:[#allocation9 + $0x18] sm:$0xff]
    %v1529 = vld [vmem:[#allocation9 + $0x20] sm:$0xff]
    %v1530 = vld [vmem:[#allocation9 + $0x28] sm:$0xff]
    %v1531 = vld [vmem:[#allocation9 + $0x30] sm:$0xff]
    %v1532 = vld [vmem:[#allocation9 + $0x38] sm:$0xff]
    %v1533 = vld [vmem:[#allocation9 + $0x40] sm:$0xff]
    %v1534 = vld [vmem:[#allocation9 + $0x48] sm:$0xff]
    %v1535 = vld [vmem:[#allocation9 + $0x50] sm:$0xff]
    %v1536 = vld [vmem:[#allocation9 + $0x58] sm:$0xff]
    %v1537 = vld [vmem:[#allocation9 + $0x60] sm:$0xff]
    %v1538 = vld [vmem:[#allocation9 + $0x68] sm:$0xff]
    %v1539 = vld [vmem:[#allocation9 + $0x70] sm:$0xff]
    %v1540 = vld [vmem:[#allocation9 + $0x78] sm:$0xff]
    %1541 = vmatprep.subr.mxu0 0.0
    %1542 = vmatpush1.msra.mxu0 %v1525
    %1543 = vmatprep.subr.mxu0 0.0
    %1544 = vmatpush1.msra.mxu0 %v1526
    %1545 = vmatprep.subr.mxu0 0.0
    %1546 = vmatpush1.msra.mxu0 %v1527
    %1547 = vmatprep.subr.mxu0 0.0
    %1548 = vmatpush1.msra.mxu0 %v1528
    %1549 = vmatprep.subr.mxu0 0.0
    %1550 = vmatpush1.msra.mxu0 %v1529
    %1551 = vmatprep.subr.mxu0 0.0
    %1552 = vmatpush1.msra.mxu0 %v1530
    %1553 = vmatprep.subr.mxu0 0.0
    %1554 = vmatpush1.msra.mxu0 %v1531
    %1555 = vmatprep.subr.mxu0 0.0
    %1556 = vmatpush1.msra.mxu0 %v1532
    %1557 = vmatprep.subr.mxu0 0.0
    %1558 = vmatpush1.msra.mxu0 %v1533
    %1559 = vmatprep.subr.mxu0 0.0
    %1560 = vmatpush1.msra.mxu0 %v1534
    %1561 = vmatprep.subr.mxu0 0.0
    %1562 = vmatpush1.msra.mxu0 %v1535
    %1563 = vmatprep.subr.mxu0 0.0
    %1564 = vmatpush1.msra.mxu0 %v1536
    %1565 = vmatprep.subr.mxu0 0.0
    %1566 = vmatpush1.msra.mxu0 %v1537
    %1567 = vmatprep.subr.mxu0 0.0
    %1568 = vmatpush1.msra.mxu0 %v1538
    %1569 = vmatprep.subr.mxu0 0.0
    %1570 = vmatpush1.msra.mxu0 %v1539
    %1571 = vmatprep.subr.mxu0 0.0
    %1572 = vmatpush1.msra.mxu0 %v1540
    %1573 = vmatprep.subr.mxu0 0.0
    %1574 = vmatpush1.msra.mxu0 0.0
    %1575 = vmatprep.subr.mxu0 0.0
    %1576 = vmatpush1.msra.mxu0 0.0
    %1577 = vmatprep.subr.mxu0 0.0
    %1578 = vmatpush1.msra.mxu0 0.0
    %1579 = vmatprep.subr.mxu0 0.0
    %1580 = vmatpush1.msra.mxu0 0.0
    %1581 = vmatprep.subr.mxu0 0.0
    %1582 = vmatpush1.msra.mxu0 0.0
    %1583 = vmatprep.subr.mxu0 0.0
    %1584 = vmatpush1.msra.mxu0 0.0
    %1585 = vmatprep.subr.mxu0 0.0
    %1586 = vmatpush1.msra.mxu0 0.0
    %1587 = vmatprep.subr.mxu0 0.0
    %1588 = vmatpush1.msra.mxu0 0.0
    %1589 = vmatprep.subr.mxu0 0.0
    %1590 = vmatpush1.msra.mxu0 0.0
    %1591 = vmatprep.subr.mxu0 0.0
    %1592 = vmatpush1.msra.mxu0 0.0
    %1593 = vmatprep.subr.mxu0 0.0
    %1594 = vmatpush1.msra.mxu0 0.0
    %1595 = vmatprep.subr.mxu0 0.0
    %1596 = vmatpush1.msra.mxu0 0.0
    %1597 = vmatprep.subr.mxu0 0.0
    %1598 = vmatpush1.msra.mxu0 0.0
    %1599 = vmatprep.subr.mxu0 0.0
    %1600 = vmatpush1.msra.mxu0 0.0
    %1601 = vmatprep.subr.mxu0 0.0
    %1602 = vmatpush1.msra.mxu0 0.0
    %1603 = vmatprep.subr.mxu0 0.0
    %1604 = vmatpush1.msra.mxu0 0.0
    %1605 = vmatprep.mubr.f32.mxu0 0.0
    %1606 = vmatmul.mubr.f32.gmra.mrb[0].mxu0 %v1522
    %v1607 = vpop.f32.mrb[0].mxu0
    %v1608 = vadd.f32 0.0, %v1607
    %v1609 = vpop.f32.mrb[0].mxu0
    %1610 = vdwg.mxu0
    %v1611 = vadd.f32 %v1524, %v1608
    %v1612 = vxor.u32 %v1611, 2147483648
    %v1613 = vmul.f32 %v1612, 1.442695
    %v1614 = vpow.pop %v1613
    %v1615 = vadd.f32 %v1614, 1.0
    %v1616 = vrcp.pop %v1615
    %v1617 = vmul.f32 1.0, %v1616
    %v1618 = vtanh.pop %v1611
    %1619 = vrot.lane.b32.xlu0 %v1618, 64
    %v1620 = vpop.permute.xlu0 %1619
    %v1621 = vsel %vm828, %v1519, %v1620
    %v1622 = vmul.f32 %v1617, %v1621
    %v1623 = vsel %vm827, %v1622, 0.0
    %1624 = vrot.lane.b32.xlu0 %v1623, 64
    %v1625 = vpop.permute.xlu0 %1624
    %v1626 = vadd.f32 %v1623, %v1625
    %1627 = vrot.lane.b32.xlu0 %v1626, 32
    %v1628 = vpop.permute.xlu0 %1627
    %v1629 = vadd.f32 %v1626, %v1628
    %v1630 = vtanh.pop %v1629
    %v1631 = vmul.f32 %v1617, %v1630
    %v1632 = vsel %vm829, %v1631, 0.0
    %1633 = vst [vmem:[#allocation2 + $0x28] sm:$0xff] %v1632
    %v1634 = vld [vmem:[#allocation3 + $0x30] sm:$0xff]
    %v1635 = vld [vmem:[#allocation9] sm:$0xff]
    %v1636 = vld [vmem:[#allocation9 + $0x8] sm:$0xff]
    %v1637 = vld [vmem:[#allocation9 + $0x10] sm:$0xff]
    %v1638 = vld [vmem:[#allocation9 + $0x18] sm:$0xff]
    %v1639 = vld [vmem:[#allocation9 + $0x20] sm:$0xff]
    %v1640 = vld [vmem:[#allocation9 + $0x28] sm:$0xff]
    %v1641 = vld [vmem:[#allocation9 + $0x30] sm:$0xff]
    %v1642 = vld [vmem:[#allocation9 + $0x38] sm:$0xff]
    %v1643 = vld [vmem:[#allocation9 + $0x40] sm:$0xff]
    %v1644 = vld [vmem:[#allocation9 + $0x48] sm:$0xff]
    %v1645 = vld [vmem:[#allocation9 + $0x50] sm:$0xff]
    %v1646 = vld [vmem:[#allocation9 + $0x58] sm:$0xff]
    %v1647 = vld [vmem:[#allocation9 + $0x60] sm:$0xff]
    %v1648 = vld [vmem:[#allocation9 + $0x68] sm:$0xff]
    %v1649 = vld [vmem:[#allocation9 + $0x70] sm:$0xff]
    %v1650 = vld [vmem:[#allocation9 + $0x78] sm:$0xff]
    %1651 = vmatprep.subr.mxu0 0.0
    %1652 = vmatpush1.msra.mxu0 %v1635
    %1653 = vmatprep.subr.mxu0 0.0
    %1654 = vmatpush1.msra.mxu0 %v1636
    %1655 = vmatprep.subr.mxu0 0.0
    %1656 = vmatpush1.msra.mxu0 %v1637
    %1657 = vmatprep.subr.mxu0 0.0
    %1658 = vmatpush1.msra.mxu0 %v1638
    %1659 = vmatprep.subr.mxu0 0.0
    %1660 = vmatpush1.msra.mxu0 %v1639
    %1661 = vmatprep.subr.mxu0 0.0
    %1662 = vmatpush1.msra.mxu0 %v1640
    %1663 = vmatprep.subr.mxu0 0.0
    %1664 = vmatpush1.msra.mxu0 %v1641
    %1665 = vmatprep.subr.mxu0 0.0
    %1666 = vmatpush1.msra.mxu0 %v1642
    %1667 = vmatprep.subr.mxu0 0.0
    %1668 = vmatpush1.msra.mxu0 %v1643
    %1669 = vmatprep.subr.mxu0 0.0
    %1670 = vmatpush1.msra.mxu0 %v1644
    %1671 = vmatprep.subr.mxu0 0.0
    %1672 = vmatpush1.msra.mxu0 %v1645
    %1673 = vmatprep.subr.mxu0 0.0
    %1674 = vmatpush1.msra.mxu0 %v1646
    %1675 = vmatprep.subr.mxu0 0.0
    %1676 = vmatpush1.msra.mxu0 %v1647
    %1677 = vmatprep.subr.mxu0 0.0
    %1678 = vmatpush1.msra.mxu0 %v1648
    %1679 = vmatprep.subr.mxu0 0.0
    %1680 = vmatpush1.msra.mxu0 %v1649
    %1681 = vmatprep.subr.mxu0 0.0
    %1682 = vmatpush1.msra.mxu0 %v1650
    %1683 = vmatprep.subr.mxu0 0.0
    %1684 = vmatpush1.msra.mxu0 0.0
    %1685 = vmatprep.subr.mxu0 0.0
    %1686 = vmatpush1.msra.mxu0 0.0
    %1687 = vmatprep.subr.mxu0 0.0
    %1688 = vmatpush1.msra.mxu0 0.0
    %1689 = vmatprep.subr.mxu0 0.0
    %1690 = vmatpush1.msra.mxu0 0.0
    %1691 = vmatprep.subr.mxu0 0.0
    %1692 = vmatpush1.msra.mxu0 0.0
    %1693 = vmatprep.subr.mxu0 0.0
    %1694 = vmatpush1.msra.mxu0 0.0
    %1695 = vmatprep.subr.mxu0 0.0
    %1696 = vmatpush1.msra.mxu0 0.0
    %1697 = vmatprep.subr.mxu0 0.0
    %1698 = vmatpush1.msra.mxu0 0.0
    %1699 = vmatprep.subr.mxu0 0.0
    %1700 = vmatpush1.msra.mxu0 0.0
    %1701 = vmatprep.subr.mxu0 0.0
    %1702 = vmatpush1.msra.mxu0 0.0
    %1703 = vmatprep.subr.mxu0 0.0
    %1704 = vmatpush1.msra.mxu0 0.0
    %1705 = vmatprep.subr.mxu0 0.0
    %1706 = vmatpush1.msra.mxu0 0.0
    %1707 = vmatprep.subr.mxu0 0.0
    %1708 = vmatpush1.msra.mxu0 0.0
    %1709 = vmatprep.subr.mxu0 0.0
    %1710 = vmatpush1.msra.mxu0 0.0
    %1711 = vmatprep.subr.mxu0 0.0
    %1712 = vmatpush1.msra.mxu0 0.0
    %1713 = vmatprep.subr.mxu0 0.0
    %1714 = vmatpush1.msra.mxu0 0.0
    %1715 = vmatprep.mubr.f32.mxu0 0.0
    %1716 = vmatmul.mubr.f32.gmra.mrb[0].mxu0 %v1632
    %v1717 = vpop.f32.mrb[0].mxu0
    %v1718 = vadd.f32 0.0, %v1717
    %v1719 = vpop.f32.mrb[0].mxu0
    %1720 = vdwg.mxu0
    %v1721 = vadd.f32 %v1634, %v1718
    %v1722 = vxor.u32 %v1721, 2147483648
    %v1723 = vmul.f32 %v1722, 1.442695
    %v1724 = vpow.pop %v1723
    %v1725 = vadd.f32 %v1724, 1.0
    %v1726 = vrcp.pop %v1725
    %v1727 = vmul.f32 1.0, %v1726
    %v1728 = vtanh.pop %v1721
    %1729 = vrot.lane.b32.xlu0 %v1728, 64
    %v1730 = vpop.permute.xlu0 %1729
    %v1731 = vsel %vm828, %v1629, %v1730
    %v1732 = vmul.f32 %v1727, %v1731
    %v1733 = vsel %vm827, %v1732, 0.0
    %1734 = vrot.lane.b32.xlu0 %v1733, 64
    %v1735 = vpop.permute.xlu0 %1734
    %v1736 = vadd.f32 %v1733, %v1735
    %1737 = vrot.lane.b32.xlu0 %v1736, 32
    %v1738 = vpop.permute.xlu0 %1737
    %v1739 = vadd.f32 %v1736, %v1738
    %v1740 = vtanh.pop %v1739
    %v1741 = vmul.f32 %v1727, %v1740
    %v1742 = vsel %vm829, %v1741, 0.0
    %1743 = vst [vmem:[#allocation2 + $0x30] sm:$0xff] %v1742
    %v1744 = vld [vmem:[#allocation3 + $0x38] sm:$0xff]
    %v1745 = vld [vmem:[#allocation9] sm:$0xff]
    %v1746 = vld [vmem:[#allocation9 + $0x8] sm:$0xff]
    %v1747 = vld [vmem:[#allocation9 + $0x10] sm:$0xff]
    %v1748 = vld [vmem:[#allocation9 + $0x18] sm:$0xff]
    %v1749 = vld [vmem:[#allocation9 + $0x20] sm:$0xff]
    %v1750 = vld [vmem:[#allocation9 + $0x28] sm:$0xff]
    %v1751 = vld [vmem:[#allocation9 + $0x30] sm:$0xff]
    %v1752 = vld [vmem:[#allocation9 + $0x38] sm:$0xff]
    %v1753 = vld [vmem:[#allocation9 + $0x40] sm:$0xff]
    %v1754 = vld [vmem:[#allocation9 + $0x48] sm:$0xff]
    %v1755 = vld [vmem:[#allocation9 + $0x50] sm:$0xff]
    %v1756 = vld [vmem:[#allocation9 + $0x58] sm:$0xff]
    %v1757 = vld [vmem:[#allocation9 + $0x60] sm:$0xff]
    %v1758 = vld [vmem:[#allocation9 + $0x68] sm:$0xff]
    %v1759 = vld [vmem:[#allocation9 + $0x70] sm:$0xff]
    %v1760 = vld [vmem:[#allocation9 + $0x78] sm:$0xff]
    %1761 = vmatprep.subr.mxu0 0.0
    %1762 = vmatpush1.msra.mxu0 %v1745
    %1763 = vmatprep.subr.mxu0 0.0
    %1764 = vmatpush1.msra.mxu0 %v1746
    %1765 = vmatprep.subr.mxu0 0.0
    %1766 = vmatpush1.msra.mxu0 %v1747
    %1767 = vmatprep.subr.mxu0 0.0
    %1768 = vmatpush1.msra.mxu0 %v1748
    %1769 = vmatprep.subr.mxu0 0.0
    %1770 = vmatpush1.msra.mxu0 %v1749
    %1771 = vmatprep.subr.mxu0 0.0
    %1772 = vmatpush1.msra.mxu0 %v1750
    %1773 = vmatprep.subr.mxu0 0.0
    %1774 = vmatpush1.msra.mxu0 %v1751
    %1775 = vmatprep.subr.mxu0 0.0
    %1776 = vmatpush1.msra.mxu0 %v1752
    %1777 = vmatprep.subr.mxu0 0.0
    %1778 = vmatpush1.msra.mxu0 %v1753
    %1779 = vmatprep.subr.mxu0 0.0
    %1780 = vmatpush1.msra.mxu0 %v1754
    %1781 = vmatprep.subr.mxu0 0.0
    %1782 = vmatpush1.msra.mxu0 %v1755
    %1783 = vmatprep.subr.mxu0 0.0
    %1784 = vmatpush1.msra.mxu0 %v1756
    %1785 = vmatprep.subr.mxu0 0.0
    %1786 = vmatpush1.msra.mxu0 %v1757
    %1787 = vmatprep.subr.mxu0 0.0
    %1788 = vmatpush1.msra.mxu0 %v1758
    %1789 = vmatprep.subr.mxu0 0.0
    %1790 = vmatpush1.msra.mxu0 %v1759
    %1791 = vmatprep.subr.mxu0 0.0
    %1792 = vmatpush1.msra.mxu0 %v1760
    %1793 = vmatprep.subr.mxu0 0.0
    %1794 = vmatpush1.msra.mxu0 0.0
    %1795 = vmatprep.subr.mxu0 0.0
    %1796 = vmatpush1.msra.mxu0 0.0
    %1797 = vmatprep.subr.mxu0 0.0
    %1798 = vmatpush1.msra.mxu0 0.0
    %1799 = vmatprep.subr.mxu0 0.0
    %1800 = vmatpush1.msra.mxu0 0.0
    %1801 = vmatprep.subr.mxu0 0.0
    %1802 = vmatpush1.msra.mxu0 0.0
    %1803 = vmatprep.subr.mxu0 0.0
    %1804 = vmatpush1.msra.mxu0 0.0
    %1805 = vmatprep.subr.mxu0 0.0
    %1806 = vmatpush1.msra.mxu0 0.0
    %1807 = vmatprep.subr.mxu0 0.0
    %1808 = vmatpush1.msra.mxu0 0.0
    %1809 = vmatprep.subr.mxu0 0.0
    %1810 = vmatpush1.msra.mxu0 0.0
    %1811 = vmatprep.subr.mxu0 0.0
    %1812 = vmatpush1.msra.mxu0 0.0
    %1813 = vmatprep.subr.mxu0 0.0
    %1814 = vmatpush1.msra.mxu0 0.0
    %1815 = vmatprep.subr.mxu0 0.0
    %1816 = vmatpush1.msra.mxu0 0.0
    %1817 = vmatprep.subr.mxu0 0.0
    %1818 = vmatpush1.msra.mxu0 0.0
    %1819 = vmatprep.subr.mxu0 0.0
    %1820 = vmatpush1.msra.mxu0 0.0
    %1821 = vmatprep.subr.mxu0 0.0
    %1822 = vmatpush1.msra.mxu0 0.0
    %1823 = vmatprep.subr.mxu0 0.0
    %1824 = vmatpush1.msra.mxu0 0.0
    %1825 = vmatprep.mubr.f32.mxu0 0.0
    %1826 = vmatmul.mubr.f32.gmra.mrb[0].mxu0 %v1742
    %v1827 = vpop.f32.mrb[0].mxu0
    %v1828 = vadd.f32 0.0, %v1827
    %v1829 = vpop.f32.mrb[0].mxu0
    %1830 = vdwg.mxu0
    %v1831 = vadd.f32 %v1744, %v1828
    %v1832 = vxor.u32 %v1831, 2147483648
    %v1833 = vmul.f32 %v1832, 1.442695
    %v1834 = vpow.pop %v1833
    %v1835 = vadd.f32 %v1834, 1.0
    %v1836 = vrcp.pop %v1835
    %v1837 = vmul.f32 1.0, %v1836
    %v1838 = vtanh.pop %v1831
    %1839 = vrot.lane.b32.xlu0 %v1838, 64
    %v1840 = vpop.permute.xlu0 %1839
    %v1841 = vsel %vm828, %v1739, %v1840
    %v1842 = vmul.f32 %v1837, %v1841
    %v1843 = vsel %vm827, %v1842, 0.0
    %1844 = vrot.lane.b32.xlu0 %v1843, 64
    %v1845 = vpop.permute.xlu0 %1844
    %v1846 = vadd.f32 %v1843, %v1845
    %1847 = vrot.lane.b32.xlu0 %v1846, 32
    %v1848 = vpop.permute.xlu0 %1847
    %v1849 = vadd.f32 %v1846, %v1848
    %v1850 = vtanh.pop %v1849
    %v1851 = vmul.f32 %v1837, %v1850
    %v1852 = vsel %vm829, %v1851, 0.0
    %1853 = vst [vmem:[#allocation2 + $0x38] sm:$0xff] %v1852
    %v1854 = vld [vmem:[#allocation2] sm:$0xff]
    %v1855 = vld [vmem:[#allocation2 + $0x8] sm:$0xff]
    %v1856 = vld [vmem:[#allocation2 + $0x10] sm:$0xff]
    %v1857 = vld [vmem:[#allocation2 + $0x18] sm:$0xff]
    %v1858 = vld [vmem:[#allocation2 + $0x20] sm:$0xff]
    %v1859 = vld [vmem:[#allocation2 + $0x28] sm:$0xff]
    %v1860 = vld [vmem:[#allocation2 + $0x30] sm:$0xff]
    %v1861 = vld [vmem:[#allocation2 + $0x38] sm:$0xff]
    %v1862 = vld [vmem:[#allocation11] sm:$0xff]
    %v1863 = vld [vmem:[#allocation11 + $0x8] sm:$0xff]
    %v1864 = vld [vmem:[#allocation11 + $0x10] sm:$0xff]
    %v1865 = vld [vmem:[#allocation11 + $0x18] sm:$0xff]
    %v1866 = vld [vmem:[#allocation11 + $0x20] sm:$0xff]
    %v1867 = vld [vmem:[#allocation11 + $0x28] sm:$0xff]
    %v1868 = vld [vmem:[#allocation11 + $0x30] sm:$0xff]
    %v1869 = vld [vmem:[#allocation11 + $0x38] sm:$0xff]
    %v1870 = vld [vmem:[#allocation11 + $0x40] sm:$0xff]
    %v1871 = vld [vmem:[#allocation11 + $0x48] sm:$0xff]
    %v1872 = vld [vmem:[#allocation11 + $0x50] sm:$0xff]
    %v1873 = vld [vmem:[#allocation11 + $0x58] sm:$0xff]
    %v1874 = vld [vmem:[#allocation11 + $0x60] sm:$0xff]
    %v1875 = vld [vmem:[#allocation11 + $0x68] sm:$0xff]
    %v1876 = vld [vmem:[#allocation11 + $0x70] sm:$0xff]
    %v1877 = vld [vmem:[#allocation11 + $0x78] sm:$0xff]
    %v1878 = vld [vmem:[%s12] sm:$0x1]
    %v1880 = vlaneseq
    %v1881 = vshrl.u32 %v1880, 7
    %v1882 = vsub.s32 0, %v1881
    %v1883 = vrot.slane %v1878, %v1882
    %1885 = vmatprep.subr.mxu0 0.0
    %1886 = vmatpush1.msra.mxu0 %v1862
    %1887 = vmatprep.subr.mxu0 0.0
    %1888 = vmatpush1.msra.mxu0 %v1863
    %1889 = vmatprep.subr.mxu0 0.0
    %1890 = vmatpush1.msra.mxu0 %v1864
    %1891 = vmatprep.subr.mxu0 0.0
    %1892 = vmatpush1.msra.mxu0 %v1865
    %1893 = vmatprep.subr.mxu0 0.0
    %1894 = vmatpush1.msra.mxu0 %v1866
    %1895 = vmatprep.subr.mxu0 0.0
    %1896 = vmatpush1.msra.mxu0 %v1867
    %1897 = vmatprep.subr.mxu0 0.0
    %1898 = vmatpush1.msra.mxu0 %v1868
    %1899 = vmatprep.subr.mxu0 0.0
    %1900 = vmatpush1.msra.mxu0 %v1869
    %1901 = vmatprep.subr.mxu0 0.0
    %1902 = vmatpush1.msra.mxu0 %v1870
    %1903 = vmatprep.subr.mxu0 0.0
    %1904 = vmatpush1.msra.mxu0 %v1871
    %1905 = vmatprep.subr.mxu0 0.0
    %1906 = vmatpush1.msra.mxu0 %v1872
    %1907 = vmatprep.subr.mxu0 0.0
    %1908 = vmatpush1.msra.mxu0 %v1873
    %1909 = vmatprep.subr.mxu0 0.0
    %1910 = vmatpush1.msra.mxu0 %v1874
    %1911 = vmatprep.subr.mxu0 0.0
    %1912 = vmatpush1.msra.mxu0 %v1875
    %1913 = vmatprep.subr.mxu0 0.0
    %1914 = vmatpush1.msra.mxu0 %v1876
    %1915 = vmatprep.subr.mxu0 0.0
    %1916 = vmatpush1.msra.mxu0 %v1877
    %1917 = vmatprep.subr.mxu0 0.0
    %1918 = vmatpush1.msra.mxu0 0.0
    %1919 = vmatprep.subr.mxu0 0.0
    %1920 = vmatpush1.msra.mxu0 0.0
    %1921 = vmatprep.subr.mxu0 0.0
    %1922 = vmatpush1.msra.mxu0 0.0
    %1923 = vmatprep.subr.mxu0 0.0
    %1924 = vmatpush1.msra.mxu0 0.0
    %1925 = vmatprep.subr.mxu0 0.0
    %1926 = vmatpush1.msra.mxu0 0.0
    %1927 = vmatprep.subr.mxu0 0.0
    %1928 = vmatpush1.msra.mxu0 0.0
    %1929 = vmatprep.subr.mxu0 0.0
    %1930 = vmatpush1.msra.mxu0 0.0
    %1931 = vmatprep.subr.mxu0 0.0
    %1932 = vmatpush1.msra.mxu0 0.0
    %1933 = vmatprep.subr.mxu0 0.0
    %1934 = vmatpush1.msra.mxu0 0.0
    %1935 = vmatprep.subr.mxu0 0.0
    %1936 = vmatpush1.msra.mxu0 0.0
    %1937 = vmatprep.subr.mxu0 0.0
    %1938 = vmatpush1.msra.mxu0 0.0
    %1939 = vmatprep.subr.mxu0 0.0
    %1940 = vmatpush1.msra.mxu0 0.0
    %1941 = vmatprep.subr.mxu0 0.0
    %1942 = vmatpush1.msra.mxu0 0.0
    %1943 = vmatprep.subr.mxu0 0.0
    %1944 = vmatpush1.msra.mxu0 0.0
    %1945 = vmatprep.subr.mxu0 0.0
    %1946 = vmatpush1.msra.mxu0 0.0
    %1947 = vmatprep.subr.mxu0 0.0
    %1948 = vmatpush1.msra.mxu0 0.0
    %1949 = vmatprep.mubr.f32.mxu0 0.0
    %1950 = vmatmul.mubr.f32.gmra.mrb[0].mxu0 %v1854
    %v1951 = vpop.f32.mrb[0].mxu0
    %v1952 = vadd.f32 %v1883, %v1951
    %v1953 = vpop.f32.mrb[0].mxu0
    %1954 = vmatprep.mubr.f32.mxu0 0.0
    %1955 = vmatmul.mubr.f32.gmra.mrb[0].mxu0 %v1855
    %v1956 = vpop.f32.mrb[0].mxu0
    %v1957 = vadd.f32 %v1883, %v1956
    %v1958 = vpop.f32.mrb[0].mxu0
    %1959 = vmatprep.mubr.f32.mxu0 0.0
    %1960 = vmatmul.mubr.f32.gmra.mrb[0].mxu0 %v1856
    %v1961 = vpop.f32.mrb[0].mxu0
    %v1962 = vadd.f32 %v1883, %v1961
    %v1963 = vpop.f32.mrb[0].mxu0
    %1964 = vmatprep.mubr.f32.mxu0 0.0
    %1965 = vmatmul.mubr.f32.gmra.mrb[0].mxu0 %v1857
    %v1966 = vpop.f32.mrb[0].mxu0
    %v1967 = vadd.f32 %v1883, %v1966
    %v1968 = vpop.f32.mrb[0].mxu0
    %1969 = vmatprep.mubr.f32.mxu0 0.0
    %1970 = vmatmul.mubr.f32.gmra.mrb[0].mxu0 %v1858
    %v1971 = vpop.f32.mrb[0].mxu0
    %v1972 = vadd.f32 %v1883, %v1971
    %v1973 = vpop.f32.mrb[0].mxu0
    %1974 = vmatprep.mubr.f32.mxu0 0.0
    %1975 = vmatmul.mubr.f32.gmra.mrb[0].mxu0 %v1859
    %v1976 = vpop.f32.mrb[0].mxu0
    %v1977 = vadd.f32 %v1883, %v1976
    %v1978 = vpop.f32.mrb[0].mxu0
    %1979 = vmatprep.mubr.f32.mxu0 0.0
    %1980 = vmatmul.mubr.f32.gmra.mrb[0].mxu0 %v1860
    %v1981 = vpop.f32.mrb[0].mxu0
    %v1982 = vadd.f32 %v1883, %v1981
    %v1983 = vpop.f32.mrb[0].mxu0
    %1984 = vmatprep.mubr.f32.mxu0 0.0
    %1985 = vmatmul.mubr.f32.gmra.mrb[0].mxu0 %v1861
    %v1986 = vpop.f32.mrb[0].mxu0
    %v1987 = vadd.f32 %v1883, %v1986
    %v1988 = vpop.f32.mrb[0].mxu0
    %1989 = vdwg.mxu0
    %1990 = vst [vmem:[#allocation3] sm:$0xff] %v1952
    %1991 = vst [vmem:[#allocation3 + $0x8] sm:$0xff] %v1957
    %1992 = vst [vmem:[#allocation3 + $0x10] sm:$0xff] %v1962
    %1993 = vst [vmem:[#allocation3 + $0x18] sm:$0xff] %v1967
    %1994 = vst [vmem:[#allocation3 + $0x20] sm:$0xff] %v1972
    %1995 = vst [vmem:[#allocation3 + $0x28] sm:$0xff] %v1977
    %1996 = vst [vmem:[#allocation3 + $0x30] sm:$0xff] %v1982
    %1997 = vst [vmem:[#allocation3 + $0x38] sm:$0xff] %v1987
    %v1998 = vld [vmem:[#allocation3] sm:$0xff]
    %v1999 = vld [vmem:[#allocation12] sm:$0xff]
    %v2000 = vld [vmem:[#allocation12 + $0x8] sm:$0xff]
    %v2001 = vld [vmem:[#allocation12 + $0x10] sm:$0xff]
    %v2002 = vld [vmem:[#allocation12 + $0x18] sm:$0xff]
    %v2003 = vld [vmem:[#allocation12 + $0x20] sm:$0xff]
    %v2004 = vld [vmem:[#allocation12 + $0x28] sm:$0xff]
    %v2005 = vld [vmem:[#allocation12 + $0x30] sm:$0xff]
    %v2006 = vld [vmem:[#allocation12 + $0x38] sm:$0xff]
    %v2007 = vld [vmem:[#allocation12 + $0x40] sm:$0xff]
    %v2008 = vld [vmem:[#allocation12 + $0x48] sm:$0xff]
    %v2009 = vld [vmem:[#allocation12 + $0x50] sm:$0xff]
    %v2010 = vld [vmem:[#allocation12 + $0x58] sm:$0xff]
    %v2011 = vld [vmem:[#allocation12 + $0x60] sm:$0xff]
    %v2012 = vld [vmem:[#allocation12 + $0x68] sm:$0xff]
    %v2013 = vld [vmem:[#allocation12 + $0x70] sm:$0xff]
    %v2014 = vld [vmem:[#allocation12 + $0x78] sm:$0xff]
    %2015 = vmatprep.subr.mxu0 0.0
    %2016 = vmatpush1.msra.mxu0 %v1999
    %2017 = vmatprep.subr.mxu0 0.0
    %2018 = vmatpush1.msra.mxu0 %v2000
    %2019 = vmatprep.subr.mxu0 0.0
    %2020 = vmatpush1.msra.mxu0 %v2001
    %2021 = vmatprep.subr.mxu0 0.0
    %2022 = vmatpush1.msra.mxu0 %v2002
    %2023 = vmatprep.subr.mxu0 0.0
    %2024 = vmatpush1.msra.mxu0 %v2003
    %2025 = vmatprep.subr.mxu0 0.0
    %2026 = vmatpush1.msra.mxu0 %v2004
    %2027 = vmatprep.subr.mxu0 0.0
    %2028 = vmatpush1.msra.mxu0 %v2005
    %2029 = vmatprep.subr.mxu0 0.0
    %2030 = vmatpush1.msra.mxu0 %v2006
    %2031 = vmatprep.subr.mxu0 0.0
    %2032 = vmatpush1.msra.mxu0 %v2007
    %2033 = vmatprep.subr.mxu0 0.0
    %2034 = vmatpush1.msra.mxu0 %v2008
    %2035 = vmatprep.subr.mxu0 0.0
    %2036 = vmatpush1.msra.mxu0 %v2009
    %2037 = vmatprep.subr.mxu0 0.0
    %2038 = vmatpush1.msra.mxu0 %v2010
    %2039 = vmatprep.subr.mxu0 0.0
    %2040 = vmatpush1.msra.mxu0 %v2011
    %2041 = vmatprep.subr.mxu0 0.0
    %2042 = vmatpush1.msra.mxu0 %v2012
    %2043 = vmatprep.subr.mxu0 0.0
    %2044 = vmatpush1.msra.mxu0 %v2013
    %2045 = vmatprep.subr.mxu0 0.0
    %2046 = vmatpush1.msra.mxu0 %v2014
    %2047 = vmatprep.subr.mxu0 0.0
    %2048 = vmatpush1.msra.mxu0 0.0
    %2049 = vmatprep.subr.mxu0 0.0
    %2050 = vmatpush1.msra.mxu0 0.0
    %2051 = vmatprep.subr.mxu0 0.0
    %2052 = vmatpush1.msra.mxu0 0.0
    %2053 = vmatprep.subr.mxu0 0.0
    %2054 = vmatpush1.msra.mxu0 0.0
    %2055 = vmatprep.subr.mxu0 0.0
    %2056 = vmatpush1.msra.mxu0 0.0
    %2057 = vmatprep.subr.mxu0 0.0
    %2058 = vmatpush1.msra.mxu0 0.0
    %2059 = vmatprep.subr.mxu0 0.0
    %2060 = vmatpush1.msra.mxu0 0.0
    %2061 = vmatprep.subr.mxu0 0.0
    %2062 = vmatpush1.msra.mxu0 0.0
    %2063 = vmatprep.subr.mxu0 0.0
    %2064 = vmatpush1.msra.mxu0 0.0
    %2065 = vmatprep.subr.mxu0 0.0
    %2066 = vmatpush1.msra.mxu0 0.0
    %2067 = vmatprep.subr.mxu0 0.0
    %2068 = vmatpush1.msra.mxu0 0.0
    %2069 = vmatprep.subr.mxu0 0.0
    %2070 = vmatpush1.msra.mxu0 0.0
    %2071 = vmatprep.subr.mxu0 0.0
    %2072 = vmatpush1.msra.mxu0 0.0
    %2073 = vmatprep.subr.mxu0 0.0
    %2074 = vmatpush1.msra.mxu0 0.0
    %2075 = vmatprep.subr.mxu0 0.0
    %2076 = vmatpush1.msra.mxu0 0.0
    %2077 = vmatprep.subr.mxu0 0.0
    %2078 = vmatpush1.msra.mxu0 0.0
    %2079 = vmatprep.mubr.f32.mxu0 0.0
    %2080 = vmatmul.mubr.f32.gmra.mrb[0].mxu0 0.0
    %v2081 = vpop.f32.mrb[0].mxu0
    %v2082 = vadd.f32 0.0, %v2081
    %v2083 = vpop.f32.mrb[0].mxu0
    %2084 = vdwg.mxu0
    %v2085 = vadd.f32 %v1998, %v2082
    %v2086 = vxor.u32 %v2085, 2147483648
    %v2087 = vmul.f32 %v2086, 1.442695
    %v2088 = vpow.pop %v2087
    %v2089 = vadd.f32 %v2088, 1.0
    %v2090 = vrcp.pop %v2089
    %v2091 = vmul.f32 1.0, %v2090
    %v2092 = vtanh.pop %v2085
    %2093 = vrot.lane.b32.xlu0 %v2092, 64
    %v2094 = vpop.permute.xlu0 %2093
    %v2095 = vsel %vm828, 0.0, %v2094
    %v2096 = vmul.f32 %v2091, %v2095
    %v2097 = vsel %vm827, %v2096, 0.0
    %2098 = vrot.lane.b32.xlu0 %v2097, 64
    %v2099 = vpop.permute.xlu0 %2098
    %v2100 = vadd.f32 %v2097, %v2099
    %2101 = vrot.lane.b32.xlu0 %v2100, 32
    %v2102 = vpop.permute.xlu0 %2101
    %v2103 = vadd.f32 %v2100, %v2102
    %v2104 = vtanh.pop %v2103
    %v2105 = vmul.f32 %v2091, %v2104
    %v2106 = vsel %vm829, %v2105, 0.0
    %2107 = vst [vmem:[#allocation2] sm:$0xff] %v2106
    %v2108 = vld [vmem:[#allocation3 + $0x8] sm:$0xff]
    %v2109 = vld [vmem:[#allocation12] sm:$0xff]
    %v2110 = vld [vmem:[#allocation12 + $0x8] sm:$0xff]
    %v2111 = vld [vmem:[#allocation12 + $0x10] sm:$0xff]
    %v2112 = vld [vmem:[#allocation12 + $0x18] sm:$0xff]
    %v2113 = vld [vmem:[#allocation12 + $0x20] sm:$0xff]
    %v2114 = vld [vmem:[#allocation12 + $0x28] sm:$0xff]
    %v2115 = vld [vmem:[#allocation12 + $0x30] sm:$0xff]
    %v2116 = vld [vmem:[#allocation12 + $0x38] sm:$0xff]
    %v2117 = vld [vmem:[#allocation12 + $0x40] sm:$0xff]
    %v2118 = vld [vmem:[#allocation12 + $0x48] sm:$0xff]
    %v2119 = vld [vmem:[#allocation12 + $0x50] sm:$0xff]
    %v2120 = vld [vmem:[#allocation12 + $0x58] sm:$0xff]
    %v2121 = vld [vmem:[#allocation12 + $0x60] sm:$0xff]
    %v2122 = vld [vmem:[#allocation12 + $0x68] sm:$0xff]
    %v2123 = vld [vmem:[#allocation12 + $0x70] sm:$0xff]
    %v2124 = vld [vmem:[#allocation12 + $0x78] sm:$0xff]
    %2125 = vmatprep.subr.mxu0 0.0
    %2126 = vmatpush1.msra.mxu0 %v2109
    %2127 = vmatprep.subr.mxu0 0.0
    %2128 = vmatpush1.msra.mxu0 %v2110
    %2129 = vmatprep.subr.mxu0 0.0
    %2130 = vmatpush1.msra.mxu0 %v2111
    %2131 = vmatprep.subr.mxu0 0.0
    %2132 = vmatpush1.msra.mxu0 %v2112
    %2133 = vmatprep.subr.mxu0 0.0
    %2134 = vmatpush1.msra.mxu0 %v2113
    %2135 = vmatprep.subr.mxu0 0.0
    %2136 = vmatpush1.msra.mxu0 %v2114
    %2137 = vmatprep.subr.mxu0 0.0
    %2138 = vmatpush1.msra.mxu0 %v2115
    %2139 = vmatprep.subr.mxu0 0.0
    %2140 = vmatpush1.msra.mxu0 %v2116
    %2141 = vmatprep.subr.mxu0 0.0
    %2142 = vmatpush1.msra.mxu0 %v2117
    %2143 = vmatprep.subr.mxu0 0.0
    %2144 = vmatpush1.msra.mxu0 %v2118
    %2145 = vmatprep.subr.mxu0 0.0
    %2146 = vmatpush1.msra.mxu0 %v2119
    %2147 = vmatprep.subr.mxu0 0.0
    %2148 = vmatpush1.msra.mxu0 %v2120
    %2149 = vmatprep.subr.mxu0 0.0
    %2150 = vmatpush1.msra.mxu0 %v2121
    %2151 = vmatprep.subr.mxu0 0.0
    %2152 = vmatpush1.msra.mxu0 %v2122
    %2153 = vmatprep.subr.mxu0 0.0
    %2154 = vmatpush1.msra.mxu0 %v2123
    %2155 = vmatprep.subr.mxu0 0.0
    %2156 = vmatpush1.msra.mxu0 %v2124
    %2157 = vmatprep.subr.mxu0 0.0
    %2158 = vmatpush1.msra.mxu0 0.0
    %2159 = vmatprep.subr.mxu0 0.0
    %2160 = vmatpush1.msra.mxu0 0.0
    %2161 = vmatprep.subr.mxu0 0.0
    %2162 = vmatpush1.msra.mxu0 0.0
    %2163 = vmatprep.subr.mxu0 0.0
    %2164 = vmatpush1.msra.mxu0 0.0
    %2165 = vmatprep.subr.mxu0 0.0
    %2166 = vmatpush1.msra.mxu0 0.0
    %2167 = vmatprep.subr.mxu0 0.0
    %2168 = vmatpush1.msra.mxu0 0.0
    %2169 = vmatprep.subr.mxu0 0.0
    %2170 = vmatpush1.msra.mxu0 0.0
    %2171 = vmatprep.subr.mxu0 0.0
    %2172 = vmatpush1.msra.mxu0 0.0
    %2173 = vmatprep.subr.mxu0 0.0
    %2174 = vmatpush1.msra.mxu0 0.0
    %2175 = vmatprep.subr.mxu0 0.0
    %2176 = vmatpush1.msra.mxu0 0.0
    %2177 = vmatprep.subr.mxu0 0.0
    %2178 = vmatpush1.msra.mxu0 0.0
    %2179 = vmatprep.subr.mxu0 0.0
    %2180 = vmatpush1.msra.mxu0 0.0
    %2181 = vmatprep.subr.mxu0 0.0
    %2182 = vmatpush1.msra.mxu0 0.0
    %2183 = vmatprep.subr.mxu0 0.0
    %2184 = vmatpush1.msra.mxu0 0.0
    %2185 = vmatprep.subr.mxu0 0.0
    %2186 = vmatpush1.msra.mxu0 0.0
    %2187 = vmatprep.subr.mxu0 0.0
    %2188 = vmatpush1.msra.mxu0 0.0
    %2189 = vmatprep.mubr.f32.mxu0 0.0
    %2190 = vmatmul.mubr.f32.gmra.mrb[0].mxu0 %v2106
    %v2191 = vpop.f32.mrb[0].mxu0
    %v2192 = vadd.f32 0.0, %v2191
    %v2193 = vpop.f32.mrb[0].mxu0
    %2194 = vdwg.mxu0
    %v2195 = vadd.f32 %v2108, %v2192
    %v2196 = vxor.u32 %v2195, 2147483648
    %v2197 = vmul.f32 %v2196, 1.442695
    %v2198 = vpow.pop %v2197
    %v2199 = vadd.f32 %v2198, 1.0
    %v2200 = vrcp.pop %v2199
    %v2201 = vmul.f32 1.0, %v2200
    %v2202 = vtanh.pop %v2195
    %2203 = vrot.lane.b32.xlu0 %v2202, 64
    %v2204 = vpop.permute.xlu0 %2203
    %v2205 = vsel %vm828, %v2103, %v2204
    %v2206 = vmul.f32 %v2201, %v2205
    %v2207 = vsel %vm827, %v2206, 0.0
    %2208 = vrot.lane.b32.xlu0 %v2207, 64
    %v2209 = vpop.permute.xlu0 %2208
    %v2210 = vadd.f32 %v2207, %v2209
    %2211 = vrot.lane.b32.xlu0 %v2210, 32
    %v2212 = vpop.permute.xlu0 %2211
    %v2213 = vadd.f32 %v2210, %v2212
    %v2214 = vtanh.pop %v2213
    %v2215 = vmul.f32 %v2201, %v2214
    %v2216 = vsel %vm829, %v2215, 0.0
    %2217 = vst [vmem:[#allocation2 + $0x8] sm:$0xff] %v2216
    %v2218 = vld [vmem:[#allocation3 + $0x10] sm:$0xff]
    %v2219 = vld [vmem:[#allocation12] sm:$0xff]
    %v2220 = vld [vmem:[#allocation12 + $0x8] sm:$0xff]
    %v2221 = vld [vmem:[#allocation12 + $0x10] sm:$0xff]
    %v2222 = vld [vmem:[#allocation12 + $0x18] sm:$0xff]
    %v2223 = vld [vmem:[#allocation12 + $0x20] sm:$0xff]
    %v2224 = vld [vmem:[#allocation12 + $0x28] sm:$0xff]
    %v2225 = vld [vmem:[#allocation12 + $0x30] sm:$0xff]
    %v2226 = vld [vmem:[#allocation12 + $0x38] sm:$0xff]
    %v2227 = vld [vmem:[#allocation12 + $0x40] sm:$0xff]
    %v2228 = vld [vmem:[#allocation12 + $0x48] sm:$0xff]
    %v2229 = vld [vmem:[#allocation12 + $0x50] sm:$0xff]
    %v2230 = vld [vmem:[#allocation12 + $0x58] sm:$0xff]
    %v2231 = vld [vmem:[#allocation12 + $0x60] sm:$0xff]
    %v2232 = vld [vmem:[#allocation12 + $0x68] sm:$0xff]
    %v2233 = vld [vmem:[#allocation12 + $0x70] sm:$0xff]
    %v2234 = vld [vmem:[#allocation12 + $0x78] sm:$0xff]
    %2235 = vmatprep.subr.mxu0 0.0
    %2236 = vmatpush1.msra.mxu0 %v2219
    %2237 = vmatprep.subr.mxu0 0.0
    %2238 = vmatpush1.msra.mxu0 %v2220
    %2239 = vmatprep.subr.mxu0 0.0
    %2240 = vmatpush1.msra.mxu0 %v2221
    %2241 = vmatprep.subr.mxu0 0.0
    %2242 = vmatpush1.msra.mxu0 %v2222
    %2243 = vmatprep.subr.mxu0 0.0
    %2244 = vmatpush1.msra.mxu0 %v2223
    %2245 = vmatprep.subr.mxu0 0.0
    %2246 = vmatpush1.msra.mxu0 %v2224
    %2247 = vmatprep.subr.mxu0 0.0
    %2248 = vmatpush1.msra.mxu0 %v2225
    %2249 = vmatprep.subr.mxu0 0.0
    %2250 = vmatpush1.msra.mxu0 %v2226
    %2251 = vmatprep.subr.mxu0 0.0
    %2252 = vmatpush1.msra.mxu0 %v2227
    %2253 = vmatprep.subr.mxu0 0.0
    %2254 = vmatpush1.msra.mxu0 %v2228
    %2255 = vmatprep.subr.mxu0 0.0
    %2256 = vmatpush1.msra.mxu0 %v2229
    %2257 = vmatprep.subr.mxu0 0.0
    %2258 = vmatpush1.msra.mxu0 %v2230
    %2259 = vmatprep.subr.mxu0 0.0
    %2260 = vmatpush1.msra.mxu0 %v2231
    %2261 = vmatprep.subr.mxu0 0.0
    %2262 = vmatpush1.msra.mxu0 %v2232
    %2263 = vmatprep.subr.mxu0 0.0
    %2264 = vmatpush1.msra.mxu0 %v2233
    %2265 = vmatprep.subr.mxu0 0.0
    %2266 = vmatpush1.msra.mxu0 %v2234
    %2267 = vmatprep.subr.mxu0 0.0
    %2268 = vmatpush1.msra.mxu0 0.0
    %2269 = vmatprep.subr.mxu0 0.0
    %2270 = vmatpush1.msra.mxu0 0.0
    %2271 = vmatprep.subr.mxu0 0.0
    %2272 = vmatpush1.msra.mxu0 0.0
    %2273 = vmatprep.subr.mxu0 0.0
    %2274 = vmatpush1.msra.mxu0 0.0
    %2275 = vmatprep.subr.mxu0 0.0
    %2276 = vmatpush1.msra.mxu0 0.0
    %2277 = vmatprep.subr.mxu0 0.0
    %2278 = vmatpush1.msra.mxu0 0.0
    %2279 = vmatprep.subr.mxu0 0.0
    %2280 = vmatpush1.msra.mxu0 0.0
    %2281 = vmatprep.subr.mxu0 0.0
    %2282 = vmatpush1.msra.mxu0 0.0
    %2283 = vmatprep.subr.mxu0 0.0
    %2284 = vmatpush1.msra.mxu0 0.0
    %2285 = vmatprep.subr.mxu0 0.0
    %2286 = vmatpush1.msra.mxu0 0.0
    %2287 = vmatprep.subr.mxu0 0.0
    %2288 = vmatpush1.msra.mxu0 0.0
    %2289 = vmatprep.subr.mxu0 0.0
    %2290 = vmatpush1.msra.mxu0 0.0
    %2291 = vmatprep.subr.mxu0 0.0
    %2292 = vmatpush1.msra.mxu0 0.0
    %2293 = vmatprep.subr.mxu0 0.0
    %2294 = vmatpush1.msra.mxu0 0.0
    %2295 = vmatprep.subr.mxu0 0.0
    %2296 = vmatpush1.msra.mxu0 0.0
    %2297 = vmatprep.subr.mxu0 0.0
    %2298 = vmatpush1.msra.mxu0 0.0
    %2299 = vmatprep.mubr.f32.mxu0 0.0
    %2300 = vmatmul.mubr.f32.gmra.mrb[0].mxu0 %v2216
    %v2301 = vpop.f32.mrb[0].mxu0
    %v2302 = vadd.f32 0.0, %v2301
    %v2303 = vpop.f32.mrb[0].mxu0
    %2304 = vdwg.mxu0
    %v2305 = vadd.f32 %v2218, %v2302
    %v2306 = vxor.u32 %v2305, 2147483648
    %v2307 = vmul.f32 %v2306, 1.442695
    %v2308 = vpow.pop %v2307
    %v2309 = vadd.f32 %v2308, 1.0
    %v2310 = vrcp.pop %v2309
    %v2311 = vmul.f32 1.0, %v2310
    %v2312 = vtanh.pop %v2305
    %2313 = vrot.lane.b32.xlu0 %v2312, 64
    %v2314 = vpop.permute.xlu0 %2313
    %v2315 = vsel %vm828, %v2213, %v2314
    %v2316 = vmul.f32 %v2311, %v2315
    %v2317 = vsel %vm827, %v2316, 0.0
    %2318 = vrot.lane.b32.xlu0 %v2317, 64
    %v2319 = vpop.permute.xlu0 %2318
    %v2320 = vadd.f32 %v2317, %v2319
    %2321 = vrot.lane.b32.xlu0 %v2320, 32
    %v2322 = vpop.permute.xlu0 %2321
    %v2323 = vadd.f32 %v2320, %v2322
    %v2324 = vtanh.pop %v2323
    %v2325 = vmul.f32 %v2311, %v2324
    %v2326 = vsel %vm829, %v2325, 0.0
    %2327 = vst [vmem:[#allocation2 + $0x10] sm:$0xff] %v2326
    %v2328 = vld [vmem:[#allocation3 + $0x18] sm:$0xff]
    %v2329 = vld [vmem:[#allocation12] sm:$0xff]
    %v2330 = vld [vmem:[#allocation12 + $0x8] sm:$0xff]
    %v2331 = vld [vmem:[#allocation12 + $0x10] sm:$0xff]
    %v2332 = vld [vmem:[#allocation12 + $0x18] sm:$0xff]
    %v2333 = vld [vmem:[#allocation12 + $0x20] sm:$0xff]
    %v2334 = vld [vmem:[#allocation12 + $0x28] sm:$0xff]
    %v2335 = vld [vmem:[#allocation12 + $0x30] sm:$0xff]
    %v2336 = vld [vmem:[#allocation12 + $0x38] sm:$0xff]
    %v2337 = vld [vmem:[#allocation12 + $0x40] sm:$0xff]
    %v2338 = vld [vmem:[#allocation12 + $0x48] sm:$0xff]
    %v2339 = vld [vmem:[#allocation12 + $0x50] sm:$0xff]
    %v2340 = vld [vmem:[#allocation12 + $0x58] sm:$0xff]
    %v2341 = vld [vmem:[#allocation12 + $0x60] sm:$0xff]
    %v2342 = vld [vmem:[#allocation12 + $0x68] sm:$0xff]
    %v2343 = vld [vmem:[#allocation12 + $0x70] sm:$0xff]
    %v2344 = vld [vmem:[#allocation12 + $0x78] sm:$0xff]
    %2345 = vmatprep.subr.mxu0 0.0
    %2346 = vmatpush1.msra.mxu0 %v2329
    %2347 = vmatprep.subr.mxu0 0.0
    %2348 = vmatpush1.msra.mxu0 %v2330
    %2349 = vmatprep.subr.mxu0 0.0
    %2350 = vmatpush1.msra.mxu0 %v2331
    %2351 = vmatprep.subr.mxu0 0.0
    %2352 = vmatpush1.msra.mxu0 %v2332
    %2353 = vmatprep.subr.mxu0 0.0
    %2354 = vmatpush1.msra.mxu0 %v2333
    %2355 = vmatprep.subr.mxu0 0.0
    %2356 = vmatpush1.msra.mxu0 %v2334
    %2357 = vmatprep.subr.mxu0 0.0
    %2358 = vmatpush1.msra.mxu0 %v2335
    %2359 = vmatprep.subr.mxu0 0.0
    %2360 = vmatpush1.msra.mxu0 %v2336
    %2361 = vmatprep.subr.mxu0 0.0
    %2362 = vmatpush1.msra.mxu0 %v2337
    %2363 = vmatprep.subr.mxu0 0.0
    %2364 = vmatpush1.msra.mxu0 %v2338
    %2365 = vmatprep.subr.mxu0 0.0
    %2366 = vmatpush1.msra.mxu0 %v2339
    %2367 = vmatprep.subr.mxu0 0.0
    %2368 = vmatpush1.msra.mxu0 %v2340
    %2369 = vmatprep.subr.mxu0 0.0
    %2370 = vmatpush1.msra.mxu0 %v2341
    %2371 = vmatprep.subr.mxu0 0.0
    %2372 = vmatpush1.msra.mxu0 %v2342
    %2373 = vmatprep.subr.mxu0 0.0
    %2374 = vmatpush1.msra.mxu0 %v2343
    %2375 = vmatprep.subr.mxu0 0.0
    %2376 = vmatpush1.msra.mxu0 %v2344
    %2377 = vmatprep.subr.mxu0 0.0
    %2378 = vmatpush1.msra.mxu0 0.0
    %2379 = vmatprep.subr.mxu0 0.0
    %2380 = vmatpush1.msra.mxu0 0.0
    %2381 = vmatprep.subr.mxu0 0.0
    %2382 = vmatpush1.msra.mxu0 0.0
    %2383 = vmatprep.subr.mxu0 0.0
    %2384 = vmatpush1.msra.mxu0 0.0
    %2385 = vmatprep.subr.mxu0 0.0
    %2386 = vmatpush1.msra.mxu0 0.0
    %2387 = vmatprep.subr.mxu0 0.0
    %2388 = vmatpush1.msra.mxu0 0.0
    %2389 = vmatprep.subr.mxu0 0.0
    %2390 = vmatpush1.msra.mxu0 0.0
    %2391 = vmatprep.subr.mxu0 0.0
    %2392 = vmatpush1.msra.mxu0 0.0
    %2393 = vmatprep.subr.mxu0 0.0
    %2394 = vmatpush1.msra.mxu0 0.0
    %2395 = vmatprep.subr.mxu0 0.0
    %2396 = vmatpush1.msra.mxu0 0.0
    %2397 = vmatprep.subr.mxu0 0.0
    %2398 = vmatpush1.msra.mxu0 0.0
    %2399 = vmatprep.subr.mxu0 0.0
    %2400 = vmatpush1.msra.mxu0 0.0
    %2401 = vmatprep.subr.mxu0 0.0
    %2402 = vmatpush1.msra.mxu0 0.0
    %2403 = vmatprep.subr.mxu0 0.0
    %2404 = vmatpush1.msra.mxu0 0.0
    %2405 = vmatprep.subr.mxu0 0.0
    %2406 = vmatpush1.msra.mxu0 0.0
    %2407 = vmatprep.subr.mxu0 0.0
    %2408 = vmatpush1.msra.mxu0 0.0
    %2409 = vmatprep.mubr.f32.mxu0 0.0
    %2410 = vmatmul.mubr.f32.gmra.mrb[0].mxu0 %v2326
    %v2411 = vpop.f32.mrb[0].mxu0
    %v2412 = vadd.f32 0.0, %v2411
    %v2413 = vpop.f32.mrb[0].mxu0
    %2414 = vdwg.mxu0
    %v2415 = vadd.f32 %v2328, %v2412
    %v2416 = vxor.u32 %v2415, 2147483648
    %v2417 = vmul.f32 %v2416, 1.442695
    %v2418 = vpow.pop %v2417
    %v2419 = vadd.f32 %v2418, 1.0
    %v2420 = vrcp.pop %v2419
    %v2421 = vmul.f32 1.0, %v2420
    %v2422 = vtanh.pop %v2415
    %2423 = vrot.lane.b32.xlu0 %v2422, 64
    %v2424 = vpop.permute.xlu0 %2423
    %v2425 = vsel %vm828, %v2323, %v2424
    %v2426 = vmul.f32 %v2421, %v2425
    %v2427 = vsel %vm827, %v2426, 0.0
    %2428 = vrot.lane.b32.xlu0 %v2427, 64
    %v2429 = vpop.permute.xlu0 %2428
    %v2430 = vadd.f32 %v2427, %v2429
    %2431 = vrot.lane.b32.xlu0 %v2430, 32
    %v2432 = vpop.permute.xlu0 %2431
    %v2433 = vadd.f32 %v2430, %v2432
    %v2434 = vtanh.pop %v2433
    %v2435 = vmul.f32 %v2421, %v2434
    %v2436 = vsel %vm829, %v2435, 0.0
    %2437 = vst [vmem:[#allocation2 + $0x18] sm:$0xff] %v2436
    %v2438 = vld [vmem:[#allocation3 + $0x20] sm:$0xff]
    %v2439 = vld [vmem:[#allocation12] sm:$0xff]
    %v2440 = vld [vmem:[#allocation12 + $0x8] sm:$0xff]
    %v2441 = vld [vmem:[#allocation12 + $0x10] sm:$0xff]
    %v2442 = vld [vmem:[#allocation12 + $0x18] sm:$0xff]
    %v2443 = vld [vmem:[#allocation12 + $0x20] sm:$0xff]
    %v2444 = vld [vmem:[#allocation12 + $0x28] sm:$0xff]
    %v2445 = vld [vmem:[#allocation12 + $0x30] sm:$0xff]
    %v2446 = vld [vmem:[#allocation12 + $0x38] sm:$0xff]
    %v2447 = vld [vmem:[#allocation12 + $0x40] sm:$0xff]
    %v2448 = vld [vmem:[#allocation12 + $0x48] sm:$0xff]
    %v2449 = vld [vmem:[#allocation12 + $0x50] sm:$0xff]
    %v2450 = vld [vmem:[#allocation12 + $0x58] sm:$0xff]
    %v2451 = vld [vmem:[#allocation12 + $0x60] sm:$0xff]
    %v2452 = vld [vmem:[#allocation12 + $0x68] sm:$0xff]
    %v2453 = vld [vmem:[#allocation12 + $0x70] sm:$0xff]
    %v2454 = vld [vmem:[#allocation12 + $0x78] sm:$0xff]
    %2455 = vmatprep.subr.mxu0 0.0
    %2456 = vmatpush1.msra.mxu0 %v2439
    %2457 = vmatprep.subr.mxu0 0.0
    %2458 = vmatpush1.msra.mxu0 %v2440
    %2459 = vmatprep.subr.mxu0 0.0
    %2460 = vmatpush1.msra.mxu0 %v2441
    %2461 = vmatprep.subr.mxu0 0.0
    %2462 = vmatpush1.msra.mxu0 %v2442
    %2463 = vmatprep.subr.mxu0 0.0
    %2464 = vmatpush1.msra.mxu0 %v2443
    %2465 = vmatprep.subr.mxu0 0.0
    %2466 = vmatpush1.msra.mxu0 %v2444
    %2467 = vmatprep.subr.mxu0 0.0
    %2468 = vmatpush1.msra.mxu0 %v2445
    %2469 = vmatprep.subr.mxu0 0.0
    %2470 = vmatpush1.msra.mxu0 %v2446
    %2471 = vmatprep.subr.mxu0 0.0
    %2472 = vmatpush1.msra.mxu0 %v2447
    %2473 = vmatprep.subr.mxu0 0.0
    %2474 = vmatpush1.msra.mxu0 %v2448
    %2475 = vmatprep.subr.mxu0 0.0
    %2476 = vmatpush1.msra.mxu0 %v2449
    %2477 = vmatprep.subr.mxu0 0.0
    %2478 = vmatpush1.msra.mxu0 %v2450
    %2479 = vmatprep.subr.mxu0 0.0
    %2480 = vmatpush1.msra.mxu0 %v2451
    %2481 = vmatprep.subr.mxu0 0.0
    %2482 = vmatpush1.msra.mxu0 %v2452
    %2483 = vmatprep.subr.mxu0 0.0
    %2484 = vmatpush1.msra.mxu0 %v2453
    %2485 = vmatprep.subr.mxu0 0.0
    %2486 = vmatpush1.msra.mxu0 %v2454
    %2487 = vmatprep.subr.mxu0 0.0
    %2488 = vmatpush1.msra.mxu0 0.0
    %2489 = vmatprep.subr.mxu0 0.0
    %2490 = vmatpush1.msra.mxu0 0.0
    %2491 = vmatprep.subr.mxu0 0.0
    %2492 = vmatpush1.msra.mxu0 0.0
    %2493 = vmatprep.subr.mxu0 0.0
    %2494 = vmatpush1.msra.mxu0 0.0
    %2495 = vmatprep.subr.mxu0 0.0
    %2496 = vmatpush1.msra.mxu0 0.0
    %2497 = vmatprep.subr.mxu0 0.0
    %2498 = vmatpush1.msra.mxu0 0.0
    %2499 = vmatprep.subr.mxu0 0.0
    %2500 = vmatpush1.msra.mxu0 0.0
    %2501 = vmatprep.subr.mxu0 0.0
    %2502 = vmatpush1.msra.mxu0 0.0
    %2503 = vmatprep.subr.mxu0 0.0
    %2504 = vmatpush1.msra.mxu0 0.0
    %2505 = vmatprep.subr.mxu0 0.0
    %2506 = vmatpush1.msra.mxu0 0.0
    %2507 = vmatprep.subr.mxu0 0.0
    %2508 = vmatpush1.msra.mxu0 0.0
    %2509 = vmatprep.subr.mxu0 0.0
    %2510 = vmatpush1.msra.mxu0 0.0
    %2511 = vmatprep.subr.mxu0 0.0
    %2512 = vmatpush1.msra.mxu0 0.0
    %2513 = vmatprep.subr.mxu0 0.0
    %2514 = vmatpush1.msra.mxu0 0.0
    %2515 = vmatprep.subr.mxu0 0.0
    %2516 = vmatpush1.msra.mxu0 0.0
    %2517 = vmatprep.subr.mxu0 0.0
    %2518 = vmatpush1.msra.mxu0 0.0
    %2519 = vmatprep.mubr.f32.mxu0 0.0
    %2520 = vmatmul.mubr.f32.gmra.mrb[0].mxu0 %v2436
    %v2521 = vpop.f32.mrb[0].mxu0
    %v2522 = vadd.f32 0.0, %v2521
    %v2523 = vpop.f32.mrb[0].mxu0
    %2524 = vdwg.mxu0
    %v2525 = vadd.f32 %v2438, %v2522
    %v2526 = vxor.u32 %v2525, 2147483648
    %v2527 = vmul.f32 %v2526, 1.442695
    %v2528 = vpow.pop %v2527
    %v2529 = vadd.f32 %v2528, 1.0
    %v2530 = vrcp.pop %v2529
    %v2531 = vmul.f32 1.0, %v2530
    %v2532 = vtanh.pop %v2525
    %2533 = vrot.lane.b32.xlu0 %v2532, 64
    %v2534 = vpop.permute.xlu0 %2533
    %v2535 = vsel %vm828, %v2433, %v2534
    %v2536 = vmul.f32 %v2531, %v2535
    %v2537 = vsel %vm827, %v2536, 0.0
    %2538 = vrot.lane.b32.xlu0 %v2537, 64
    %v2539 = vpop.permute.xlu0 %2538
    %v2540 = vadd.f32 %v2537, %v2539
    %2541 = vrot.lane.b32.xlu0 %v2540, 32
    %v2542 = vpop.permute.xlu0 %2541
    %v2543 = vadd.f32 %v2540, %v2542
    %v2544 = vtanh.pop %v2543
    %v2545 = vmul.f32 %v2531, %v2544
    %v2546 = vsel %vm829, %v2545, 0.0
    %2547 = vst [vmem:[#allocation2 + $0x20] sm:$0xff] %v2546
    %v2548 = vld [vmem:[#allocation3 + $0x28] sm:$0xff]
    %v2549 = vld [vmem:[#allocation12] sm:$0xff]
    %v2550 = vld [vmem:[#allocation12 + $0x8] sm:$0xff]
    %v2551 = vld [vmem:[#allocation12 + $0x10] sm:$0xff]
    %v2552 = vld [vmem:[#allocation12 + $0x18] sm:$0xff]
    %v2553 = vld [vmem:[#allocation12 + $0x20] sm:$0xff]
    %v2554 = vld [vmem:[#allocation12 + $0x28] sm:$0xff]
    %v2555 = vld [vmem:[#allocation12 + $0x30] sm:$0xff]
    %v2556 = vld [vmem:[#allocation12 + $0x38] sm:$0xff]
    %v2557 = vld [vmem:[#allocation12 + $0x40] sm:$0xff]
    %v2558 = vld [vmem:[#allocation12 + $0x48] sm:$0xff]
    %v2559 = vld [vmem:[#allocation12 + $0x50] sm:$0xff]
    %v2560 = vld [vmem:[#allocation12 + $0x58] sm:$0xff]
    %v2561 = vld [vmem:[#allocation12 + $0x60] sm:$0xff]
    %v2562 = vld [vmem:[#allocation12 + $0x68] sm:$0xff]
    %v2563 = vld [vmem:[#allocation12 + $0x70] sm:$0xff]
    %v2564 = vld [vmem:[#allocation12 + $0x78] sm:$0xff]
    %2565 = vmatprep.subr.mxu0 0.0
    %2566 = vmatpush1.msra.mxu0 %v2549
    %2567 = vmatprep.subr.mxu0 0.0
    %2568 = vmatpush1.msra.mxu0 %v2550
    %2569 = vmatprep.subr.mxu0 0.0
    %2570 = vmatpush1.msra.mxu0 %v2551
    %2571 = vmatprep.subr.mxu0 0.0
    %2572 = vmatpush1.msra.mxu0 %v2552
    %2573 = vmatprep.subr.mxu0 0.0
    %2574 = vmatpush1.msra.mxu0 %v2553
    %2575 = vmatprep.subr.mxu0 0.0
    %2576 = vmatpush1.msra.mxu0 %v2554
    %2577 = vmatprep.subr.mxu0 0.0
    %2578 = vmatpush1.msra.mxu0 %v2555
    %2579 = vmatprep.subr.mxu0 0.0
    %2580 = vmatpush1.msra.mxu0 %v2556
    %2581 = vmatprep.subr.mxu0 0.0
    %2582 = vmatpush1.msra.mxu0 %v2557
    %2583 = vmatprep.subr.mxu0 0.0
    %2584 = vmatpush1.msra.mxu0 %v2558
    %2585 = vmatprep.subr.mxu0 0.0
    %2586 = vmatpush1.msra.mxu0 %v2559
    %2587 = vmatprep.subr.mxu0 0.0
    %2588 = vmatpush1.msra.mxu0 %v2560
    %2589 = vmatprep.subr.mxu0 0.0
    %2590 = vmatpush1.msra.mxu0 %v2561
    %2591 = vmatprep.subr.mxu0 0.0
    %2592 = vmatpush1.msra.mxu0 %v2562
    %2593 = vmatprep.subr.mxu0 0.0
    %2594 = vmatpush1.msra.mxu0 %v2563
    %2595 = vmatprep.subr.mxu0 0.0
    %2596 = vmatpush1.msra.mxu0 %v2564
    %2597 = vmatprep.subr.mxu0 0.0
    %2598 = vmatpush1.msra.mxu0 0.0
    %2599 = vmatprep.subr.mxu0 0.0
    %2600 = vmatpush1.msra.mxu0 0.0
    %2601 = vmatprep.subr.mxu0 0.0
    %2602 = vmatpush1.msra.mxu0 0.0
    %2603 = vmatprep.subr.mxu0 0.0
    %2604 = vmatpush1.msra.mxu0 0.0
    %2605 = vmatprep.subr.mxu0 0.0
    %2606 = vmatpush1.msra.mxu0 0.0
    %2607 = vmatprep.subr.mxu0 0.0
    %2608 = vmatpush1.msra.mxu0 0.0
    %2609 = vmatprep.subr.mxu0 0.0
    %2610 = vmatpush1.msra.mxu0 0.0
    %2611 = vmatprep.subr.mxu0 0.0
    %2612 = vmatpush1.msra.mxu0 0.0
    %2613 = vmatprep.subr.mxu0 0.0
    %2614 = vmatpush1.msra.mxu0 0.0
    %2615 = vmatprep.subr.mxu0 0.0
    %2616 = vmatpush1.msra.mxu0 0.0
    %2617 = vmatprep.subr.mxu0 0.0
    %2618 = vmatpush1.msra.mxu0 0.0
    %2619 = vmatprep.subr.mxu0 0.0
    %2620 = vmatpush1.msra.mxu0 0.0
    %2621 = vmatprep.subr.mxu0 0.0
    %2622 = vmatpush1.msra.mxu0 0.0
    %2623 = vmatprep.subr.mxu0 0.0
    %2624 = vmatpush1.msra.mxu0 0.0
    %2625 = vmatprep.subr.mxu0 0.0
    %2626 = vmatpush1.msra.mxu0 0.0
    %2627 = vmatprep.subr.mxu0 0.0
    %2628 = vmatpush1.msra.mxu0 0.0
    %2629 = vmatprep.mubr.f32.mxu0 0.0
    %2630 = vmatmul.mubr.f32.gmra.mrb[0].mxu0 %v2546
    %v2631 = vpop.f32.mrb[0].mxu0
    %v2632 = vadd.f32 0.0, %v2631
    %v2633 = vpop.f32.mrb[0].mxu0
    %2634 = vdwg.mxu0
    %v2635 = vadd.f32 %v2548, %v2632
    %v2636 = vxor.u32 %v2635, 2147483648
    %v2637 = vmul.f32 %v2636, 1.442695
    %v2638 = vpow.pop %v2637
    %v2639 = vadd.f32 %v2638, 1.0
    %v2640 = vrcp.pop %v2639
    %v2641 = vmul.f32 1.0, %v2640
    %v2642 = vtanh.pop %v2635
    %2643 = vrot.lane.b32.xlu0 %v2642, 64
    %v2644 = vpop.permute.xlu0 %2643
    %v2645 = vsel %vm828, %v2543, %v2644
    %v2646 = vmul.f32 %v2641, %v2645
    %v2647 = vsel %vm827, %v2646, 0.0
    %2648 = vrot.lane.b32.xlu0 %v2647, 64
    %v2649 = vpop.permute.xlu0 %2648
    %v2650 = vadd.f32 %v2647, %v2649
    %2651 = vrot.lane.b32.xlu0 %v2650, 32
    %v2652 = vpop.permute.xlu0 %2651
    %v2653 = vadd.f32 %v2650, %v2652
    %v2654 = vtanh.pop %v2653
    %v2655 = vmul.f32 %v2641, %v2654
    %v2656 = vsel %vm829, %v2655, 0.0
    %2657 = vst [vmem:[#allocation2 + $0x28] sm:$0xff] %v2656
    %v2658 = vld [vmem:[#allocation3 + $0x30] sm:$0xff]
    %v2659 = vld [vmem:[#allocation12] sm:$0xff]
    %v2660 = vld [vmem:[#allocation12 + $0x8] sm:$0xff]
    %v2661 = vld [vmem:[#allocation12 + $0x10] sm:$0xff]
    %v2662 = vld [vmem:[#allocation12 + $0x18] sm:$0xff]
    %v2663 = vld [vmem:[#allocation12 + $0x20] sm:$0xff]
    %v2664 = vld [vmem:[#allocation12 + $0x28] sm:$0xff]
    %v2665 = vld [vmem:[#allocation12 + $0x30] sm:$0xff]
    %v2666 = vld [vmem:[#allocation12 + $0x38] sm:$0xff]
    %v2667 = vld [vmem:[#allocation12 + $0x40] sm:$0xff]
    %v2668 = vld [vmem:[#allocation12 + $0x48] sm:$0xff]
    %v2669 = vld [vmem:[#allocation12 + $0x50] sm:$0xff]
    %v2670 = vld [vmem:[#allocation12 + $0x58] sm:$0xff]
    %v2671 = vld [vmem:[#allocation12 + $0x60] sm:$0xff]
    %v2672 = vld [vmem:[#allocation12 + $0x68] sm:$0xff]
    %v2673 = vld [vmem:[#allocation12 + $0x70] sm:$0xff]
    %v2674 = vld [vmem:[#allocation12 + $0x78] sm:$0xff]
    %2675 = vmatprep.subr.mxu0 0.0
    %2676 = vmatpush1.msra.mxu0 %v2659
    %2677 = vmatprep.subr.mxu0 0.0
    %2678 = vmatpush1.msra.mxu0 %v2660
    %2679 = vmatprep.subr.mxu0 0.0
    %2680 = vmatpush1.msra.mxu0 %v2661
    %2681 = vmatprep.subr.mxu0 0.0
    %2682 = vmatpush1.msra.mxu0 %v2662
    %2683 = vmatprep.subr.mxu0 0.0
    %2684 = vmatpush1.msra.mxu0 %v2663
    %2685 = vmatprep.subr.mxu0 0.0
    %2686 = vmatpush1.msra.mxu0 %v2664
    %2687 = vmatprep.subr.mxu0 0.0
    %2688 = vmatpush1.msra.mxu0 %v2665
    %2689 = vmatprep.subr.mxu0 0.0
    %2690 = vmatpush1.msra.mxu0 %v2666
    %2691 = vmatprep.subr.mxu0 0.0
    %2692 = vmatpush1.msra.mxu0 %v2667
    %2693 = vmatprep.subr.mxu0 0.0
    %2694 = vmatpush1.msra.mxu0 %v2668
    %2695 = vmatprep.subr.mxu0 0.0
    %2696 = vmatpush1.msra.mxu0 %v2669
    %2697 = vmatprep.subr.mxu0 0.0
    %2698 = vmatpush1.msra.mxu0 %v2670
    %2699 = vmatprep.subr.mxu0 0.0
    %2700 = vmatpush1.msra.mxu0 %v2671
    %2701 = vmatprep.subr.mxu0 0.0
    %2702 = vmatpush1.msra.mxu0 %v2672
    %2703 = vmatprep.subr.mxu0 0.0
    %2704 = vmatpush1.msra.mxu0 %v2673
    %2705 = vmatprep.subr.mxu0 0.0
    %2706 = vmatpush1.msra.mxu0 %v2674
    %2707 = vmatprep.subr.mxu0 0.0
    %2708 = vmatpush1.msra.mxu0 0.0
    %2709 = vmatprep.subr.mxu0 0.0
    %2710 = vmatpush1.msra.mxu0 0.0
    %2711 = vmatprep.subr.mxu0 0.0
    %2712 = vmatpush1.msra.mxu0 0.0
    %2713 = vmatprep.subr.mxu0 0.0
    %2714 = vmatpush1.msra.mxu0 0.0
    %2715 = vmatprep.subr.mxu0 0.0
    %2716 = vmatpush1.msra.mxu0 0.0
    %2717 = vmatprep.subr.mxu0 0.0
    %2718 = vmatpush1.msra.mxu0 0.0
    %2719 = vmatprep.subr.mxu0 0.0
    %2720 = vmatpush1.msra.mxu0 0.0
    %2721 = vmatprep.subr.mxu0 0.0
    %2722 = vmatpush1.msra.mxu0 0.0
    %2723 = vmatprep.subr.mxu0 0.0
    %2724 = vmatpush1.msra.mxu0 0.0
    %2725 = vmatprep.subr.mxu0 0.0
    %2726 = vmatpush1.msra.mxu0 0.0
    %2727 = vmatprep.subr.mxu0 0.0
    %2728 = vmatpush1.msra.mxu0 0.0
    %2729 = vmatprep.subr.mxu0 0.0
    %2730 = vmatpush1.msra.mxu0 0.0
    %2731 = vmatprep.subr.mxu0 0.0
    %2732 = vmatpush1.msra.mxu0 0.0
    %2733 = vmatprep.subr.mxu0 0.0
    %2734 = vmatpush1.msra.mxu0 0.0
    %2735 = vmatprep.subr.mxu0 0.0
    %2736 = vmatpush1.msra.mxu0 0.0
    %2737 = vmatprep.subr.mxu0 0.0
    %2738 = vmatpush1.msra.mxu0 0.0
    %2739 = vmatprep.mubr.f32.mxu0 0.0
    %2740 = vmatmul.mubr.f32.gmra.mrb[0].mxu0 %v2656
    %v2741 = vpop.f32.mrb[0].mxu0
    %v2742 = vadd.f32 0.0, %v2741
    %v2743 = vpop.f32.mrb[0].mxu0
    %2744 = vdwg.mxu0
    %v2745 = vadd.f32 %v2658, %v2742
    %v2746 = vxor.u32 %v2745, 2147483648
    %v2747 = vmul.f32 %v2746, 1.442695
    %v2748 = vpow.pop %v2747
    %v2749 = vadd.f32 %v2748, 1.0
    %v2750 = vrcp.pop %v2749
    %v2751 = vmul.f32 1.0, %v2750
    %v2752 = vtanh.pop %v2745
    %2753 = vrot.lane.b32.xlu0 %v2752, 64
    %v2754 = vpop.permute.xlu0 %2753
    %v2755 = vsel %vm828, %v2653, %v2754
    %v2756 = vmul.f32 %v2751, %v2755
    %v2757 = vsel %vm827, %v2756, 0.0
    %2758 = vrot.lane.b32.xlu0 %v2757, 64
    %v2759 = vpop.permute.xlu0 %2758
    %v2760 = vadd.f32 %v2757, %v2759
    %2761 = vrot.lane.b32.xlu0 %v2760, 32
    %v2762 = vpop.permute.xlu0 %2761
    %v2763 = vadd.f32 %v2760, %v2762
    %v2764 = vtanh.pop %v2763
    %v2765 = vmul.f32 %v2751, %v2764
    %v2766 = vsel %vm829, %v2765, 0.0
    %2767 = vst [vmem:[#allocation2 + $0x30] sm:$0xff] %v2766
    %v2768 = vld [vmem:[#allocation3 + $0x38] sm:$0xff]
    %v2769 = vld [vmem:[#allocation12] sm:$0xff]
    %v2770 = vld [vmem:[#allocation12 + $0x8] sm:$0xff]
    %v2771 = vld [vmem:[#allocation12 + $0x10] sm:$0xff]
    %v2772 = vld [vmem:[#allocation12 + $0x18] sm:$0xff]
    %v2773 = vld [vmem:[#allocation12 + $0x20] sm:$0xff]
    %v2774 = vld [vmem:[#allocation12 + $0x28] sm:$0xff]
    %v2775 = vld [vmem:[#allocation12 + $0x30] sm:$0xff]
    %v2776 = vld [vmem:[#allocation12 + $0x38] sm:$0xff]
    %v2777 = vld [vmem:[#allocation12 + $0x40] sm:$0xff]
    %v2778 = vld [vmem:[#allocation12 + $0x48] sm:$0xff]
    %v2779 = vld [vmem:[#allocation12 + $0x50] sm:$0xff]
    %v2780 = vld [vmem:[#allocation12 + $0x58] sm:$0xff]
    %v2781 = vld [vmem:[#allocation12 + $0x60] sm:$0xff]
    %v2782 = vld [vmem:[#allocation12 + $0x68] sm:$0xff]
    %v2783 = vld [vmem:[#allocation12 + $0x70] sm:$0xff]
    %v2784 = vld [vmem:[#allocation12 + $0x78] sm:$0xff]
    %2785 = vmatprep.subr.mxu0 0.0
    %2786 = vmatpush1.msra.mxu0 %v2769
    %2787 = vmatprep.subr.mxu0 0.0
    %2788 = vmatpush1.msra.mxu0 %v2770
    %2789 = vmatprep.subr.mxu0 0.0
    %2790 = vmatpush1.msra.mxu0 %v2771
    %2791 = vmatprep.subr.mxu0 0.0
    %2792 = vmatpush1.msra.mxu0 %v2772
    %2793 = vmatprep.subr.mxu0 0.0
    %2794 = vmatpush1.msra.mxu0 %v2773
    %2795 = vmatprep.subr.mxu0 0.0
    %2796 = vmatpush1.msra.mxu0 %v2774
    %2797 = vmatprep.subr.mxu0 0.0
    %2798 = vmatpush1.msra.mxu0 %v2775
    %2799 = vmatprep.subr.mxu0 0.0
    %2800 = vmatpush1.msra.mxu0 %v2776
    %2801 = vmatprep.subr.mxu0 0.0
    %2802 = vmatpush1.msra.mxu0 %v2777
    %2803 = vmatprep.subr.mxu0 0.0
    %2804 = vmatpush1.msra.mxu0 %v2778
    %2805 = vmatprep.subr.mxu0 0.0
    %2806 = vmatpush1.msra.mxu0 %v2779
    %2807 = vmatprep.subr.mxu0 0.0
    %2808 = vmatpush1.msra.mxu0 %v2780
    %2809 = vmatprep.subr.mxu0 0.0
    %2810 = vmatpush1.msra.mxu0 %v2781
    %2811 = vmatprep.subr.mxu0 0.0
    %2812 = vmatpush1.msra.mxu0 %v2782
    %2813 = vmatprep.subr.mxu0 0.0
    %2814 = vmatpush1.msra.mxu0 %v2783
    %2815 = vmatprep.subr.mxu0 0.0
    %2816 = vmatpush1.msra.mxu0 %v2784
    %2817 = vmatprep.subr.mxu0 0.0
    %2818 = vmatpush1.msra.mxu0 0.0
    %2819 = vmatprep.subr.mxu0 0.0
    %2820 = vmatpush1.msra.mxu0 0.0
    %2821 = vmatprep.subr.mxu0 0.0
    %2822 = vmatpush1.msra.mxu0 0.0
    %2823 = vmatprep.subr.mxu0 0.0
    %2824 = vmatpush1.msra.mxu0 0.0
    %2825 = vmatprep.subr.mxu0 0.0
    %2826 = vmatpush1.msra.mxu0 0.0
    %2827 = vmatprep.subr.mxu0 0.0
    %2828 = vmatpush1.msra.mxu0 0.0
    %2829 = vmatprep.subr.mxu0 0.0
    %2830 = vmatpush1.msra.mxu0 0.0
    %2831 = vmatprep.subr.mxu0 0.0
    %2832 = vmatpush1.msra.mxu0 0.0
    %2833 = vmatprep.subr.mxu0 0.0
    %2834 = vmatpush1.msra.mxu0 0.0
    %2835 = vmatprep.subr.mxu0 0.0
    %2836 = vmatpush1.msra.mxu0 0.0
    %2837 = vmatprep.subr.mxu0 0.0
    %2838 = vmatpush1.msra.mxu0 0.0
    %2839 = vmatprep.subr.mxu0 0.0
    %2840 = vmatpush1.msra.mxu0 0.0
    %2841 = vmatprep.subr.mxu0 0.0
    %2842 = vmatpush1.msra.mxu0 0.0
    %2843 = vmatprep.subr.mxu0 0.0
    %2844 = vmatpush1.msra.mxu0 0.0
    %2845 = vmatprep.subr.mxu0 0.0
    %2846 = vmatpush1.msra.mxu0 0.0
    %2847 = vmatprep.subr.mxu0 0.0
    %2848 = vmatpush1.msra.mxu0 0.0
    %2849 = vmatprep.mubr.f32.mxu0 0.0
    %2850 = vmatmul.mubr.f32.gmra.mrb[0].mxu0 %v2766
    %v2851 = vpop.f32.mrb[0].mxu0
    %v2852 = vadd.f32 0.0, %v2851
    %v2853 = vpop.f32.mrb[0].mxu0
    %2854 = vdwg.mxu0
    %v2855 = vadd.f32 %v2768, %v2852
    %v2856 = vxor.u32 %v2855, 2147483648
    %v2857 = vmul.f32 %v2856, 1.442695
    %v2858 = vpow.pop %v2857
    %v2859 = vadd.f32 %v2858, 1.0
    %v2860 = vrcp.pop %v2859
    %v2861 = vmul.f32 1.0, %v2860
    %v2862 = vtanh.pop %v2855
    %2863 = vrot.lane.b32.xlu0 %v2862, 64
    %v2864 = vpop.permute.xlu0 %2863
    %v2865 = vsel %vm828, %v2763, %v2864
    %v2866 = vmul.f32 %v2861, %v2865
    %v2867 = vsel %vm827, %v2866, 0.0
    %2868 = vrot.lane.b32.xlu0 %v2867, 64
    %v2869 = vpop.permute.xlu0 %2868
    %v2870 = vadd.f32 %v2867, %v2869
    %2871 = vrot.lane.b32.xlu0 %v2870, 32
    %v2872 = vpop.permute.xlu0 %2871
    %v2873 = vadd.f32 %v2870, %v2872
    %v2874 = vtanh.pop %v2873
    %v2875 = vmul.f32 %v2861, %v2874
    %v2876 = vsel %vm829, %v2875, 0.0
    %2877 = vst [vmem:[#allocation2 + $0x38] sm:$0xff] %v2876
    %v2878 = vld [vmem:[#allocation2] sm:$0xff]
    %v2879 = vld [vmem:[#allocation2 + $0x8] sm:$0xff]
    %v2880 = vld [vmem:[#allocation2 + $0x10] sm:$0xff]
    %v2881 = vld [vmem:[#allocation2 + $0x18] sm:$0xff]
    %v2882 = vld [vmem:[#allocation2 + $0x20] sm:$0xff]
    %v2883 = vld [vmem:[#allocation2 + $0x28] sm:$0xff]
    %v2884 = vld [vmem:[#allocation2 + $0x30] sm:$0xff]
    %v2885 = vld [vmem:[#allocation2 + $0x38] sm:$0xff]
    %v2886 = vld [vmem:[#allocation6] sm:$0xff]
    %v2887 = vld [vmem:[#allocation6 + $0x8] sm:$0xff]
    %v2888 = vld [vmem:[#allocation6 + $0x10] sm:$0xff]
    %v2889 = vld [vmem:[#allocation6 + $0x18] sm:$0xff]
    %v2890 = vld [vmem:[#allocation6 + $0x20] sm:$0xff]
    %v2891 = vld [vmem:[#allocation6 + $0x28] sm:$0xff]
    %v2892 = vld [vmem:[#allocation6 + $0x30] sm:$0xff]
    %v2893 = vld [vmem:[#allocation6 + $0x38] sm:$0xff]
    %v2894 = vld [vmem:[#allocation6 + $0x40] sm:$0xff]
    %v2895 = vld [vmem:[#allocation6 + $0x48] sm:$0xff]
    %v2896 = vld [vmem:[#allocation6 + $0x50] sm:$0xff]
    %v2897 = vld [vmem:[#allocation6 + $0x58] sm:$0xff]
    %v2898 = vld [vmem:[#allocation6 + $0x60] sm:$0xff]
    %v2899 = vld [vmem:[#allocation6 + $0x68] sm:$0xff]
    %v2900 = vld [vmem:[#allocation6 + $0x70] sm:$0xff]
    %v2901 = vld [vmem:[#allocation6 + $0x78] sm:$0xff]
    %v2902 = vld [vmem:[%s6] sm:$0x1]
    %v2904 = vlaneseq
    %v2905 = vshrl.u32 %v2904, 7
    %v2906 = vsub.s32 0, %v2905
    %v2907 = vrot.slane %v2902, %v2906
    %2909 = vmatprep.subr.mxu0 0.0
    %2910 = vmatpush1.msra.mxu0 %v2886
    %2911 = vmatprep.subr.mxu0 0.0
    %2912 = vmatpush1.msra.mxu0 %v2887
    %2913 = vmatprep.subr.mxu0 0.0
    %2914 = vmatpush1.msra.mxu0 %v2888
    %2915 = vmatprep.subr.mxu0 0.0
    %2916 = vmatpush1.msra.mxu0 %v2889
    %2917 = vmatprep.subr.mxu0 0.0
    %2918 = vmatpush1.msra.mxu0 %v2890
    %2919 = vmatprep.subr.mxu0 0.0
    %2920 = vmatpush1.msra.mxu0 %v2891
    %2921 = vmatprep.subr.mxu0 0.0
    %2922 = vmatpush1.msra.mxu0 %v2892
    %2923 = vmatprep.subr.mxu0 0.0
    %2924 = vmatpush1.msra.mxu0 %v2893
    %2925 = vmatprep.subr.mxu0 0.0
    %2926 = vmatpush1.msra.mxu0 %v2894
    %2927 = vmatprep.subr.mxu0 0.0
    %2928 = vmatpush1.msra.mxu0 %v2895
    %2929 = vmatprep.subr.mxu0 0.0
    %2930 = vmatpush1.msra.mxu0 %v2896
    %2931 = vmatprep.subr.mxu0 0.0
    %2932 = vmatpush1.msra.mxu0 %v2897
    %2933 = vmatprep.subr.mxu0 0.0
    %2934 = vmatpush1.msra.mxu0 %v2898
    %2935 = vmatprep.subr.mxu0 0.0
    %2936 = vmatpush1.msra.mxu0 %v2899
    %2937 = vmatprep.subr.mxu0 0.0
    %2938 = vmatpush1.msra.mxu0 %v2900
    %2939 = vmatprep.subr.mxu0 0.0
    %2940 = vmatpush1.msra.mxu0 %v2901
    %2941 = vmatprep.subr.mxu0 0.0
    %2942 = vmatpush1.msra.mxu0 0.0
    %2943 = vmatprep.subr.mxu0 0.0
    %2944 = vmatpush1.msra.mxu0 0.0
    %2945 = vmatprep.subr.mxu0 0.0
    %2946 = vmatpush1.msra.mxu0 0.0
    %2947 = vmatprep.subr.mxu0 0.0
    %2948 = vmatpush1.msra.mxu0 0.0
    %2949 = vmatprep.subr.mxu0 0.0
    %2950 = vmatpush1.msra.mxu0 0.0
    %2951 = vmatprep.subr.mxu0 0.0
    %2952 = vmatpush1.msra.mxu0 0.0
    %2953 = vmatprep.subr.mxu0 0.0
    %2954 = vmatpush1.msra.mxu0 0.0
    %2955 = vmatprep.subr.mxu0 0.0
    %2956 = vmatpush1.msra.mxu0 0.0
    %2957 = vmatprep.subr.mxu0 0.0
    %2958 = vmatpush1.msra.mxu0 0.0
    %2959 = vmatprep.subr.mxu0 0.0
    %2960 = vmatpush1.msra.mxu0 0.0
    %2961 = vmatprep.subr.mxu0 0.0
    %2962 = vmatpush1.msra.mxu0 0.0
    %2963 = vmatprep.subr.mxu0 0.0
    %2964 = vmatpush1.msra.mxu0 0.0
    %2965 = vmatprep.subr.mxu0 0.0
    %2966 = vmatpush1.msra.mxu0 0.0
    %2967 = vmatprep.subr.mxu0 0.0
    %2968 = vmatpush1.msra.mxu0 0.0
    %2969 = vmatprep.subr.mxu0 0.0
    %2970 = vmatpush1.msra.mxu0 0.0
    %2971 = vmatprep.subr.mxu0 0.0
    %2972 = vmatpush1.msra.mxu0 0.0
    %2973 = vmatprep.mubr.f32.mxu0 0.0
    %2974 = vmatmul.mubr.f32.gmra.mrb[0].mxu0 %v2878
    %v2975 = vpop.f32.mrb[0].mxu0
    %v2976 = vadd.f32 %v2907, %v2975
    %v2977 = vpop.f32.mrb[0].mxu0
    %2978 = vmatprep.mubr.f32.mxu0 0.0
    %2979 = vmatmul.mubr.f32.gmra.mrb[0].mxu0 %v2879
    %v2980 = vpop.f32.mrb[0].mxu0
    %v2981 = vadd.f32 %v2907, %v2980
    %v2982 = vpop.f32.mrb[0].mxu0
    %2983 = vmatprep.mubr.f32.mxu0 0.0
    %2984 = vmatmul.mubr.f32.gmra.mrb[0].mxu0 %v2880
    %v2985 = vpop.f32.mrb[0].mxu0
    %v2986 = vadd.f32 %v2907, %v2985
    %v2987 = vpop.f32.mrb[0].mxu0
    %2988 = vmatprep.mubr.f32.mxu0 0.0
    %2989 = vmatmul.mubr.f32.gmra.mrb[0].mxu0 %v2881
    %v2990 = vpop.f32.mrb[0].mxu0
    %v2991 = vadd.f32 %v2907, %v2990
    %v2992 = vpop.f32.mrb[0].mxu0
    %2993 = vmatprep.mubr.f32.mxu0 0.0
    %2994 = vmatmul.mubr.f32.gmra.mrb[0].mxu0 %v2882
    %v2995 = vpop.f32.mrb[0].mxu0
    %v2996 = vadd.f32 %v2907, %v2995
    %v2997 = vpop.f32.mrb[0].mxu0
    %2998 = vmatprep.mubr.f32.mxu0 0.0
    %2999 = vmatmul.mubr.f32.gmra.mrb[0].mxu0 %v2883
    %v3000 = vpop.f32.mrb[0].mxu0
    %v3001 = vadd.f32 %v2907, %v3000
    %v3002 = vpop.f32.mrb[0].mxu0
    %3003 = vmatprep.mubr.f32.mxu0 0.0
    %3004 = vmatmul.mubr.f32.gmra.mrb[0].mxu0 %v2884
    %v3005 = vpop.f32.mrb[0].mxu0
    %v3006 = vadd.f32 %v2907, %v3005
    %v3007 = vpop.f32.mrb[0].mxu0
    %3008 = vmatprep.mubr.f32.mxu0 0.0
    %3009 = vmatmul.mubr.f32.gmra.mrb[0].mxu0 %v2885
    %v3010 = vpop.f32.mrb[0].mxu0
    %v3011 = vadd.f32 %v2907, %v3010
    %v3012 = vpop.f32.mrb[0].mxu0
    %3013 = vdwg.mxu0
    %3014 = vst [vmem:[%s13] sm:$0xff] %v2976
    %3015 = vst [vmem:[%s13 + $0x8] sm:$0xff] %v2981
    %3016 = vst [vmem:[%s13 + $0x10] sm:$0xff] %v2986
    %3017 = vst [vmem:[%s13 + $0x18] sm:$0xff] %v2991
    %3018 = vst [vmem:[%s13 + $0x20] sm:$0xff] %v2996
    %3019 = vst [vmem:[%s13 + $0x28] sm:$0xff] %v3001
    %3020 = vst [vmem:[%s13 + $0x30] sm:$0xff] %v3006
    %3021 = vst [vmem:[%s13 + $0x38] sm:$0xff] %v3011
    // Predicated region
    $region78: #{image_captionizer_forward.1} parent=1 // pred_check
      _
    $region79: #{image_captionizer_forward.1} parent=1 // pred_check_branch
      %3023 = sbr.rel (0) target = $region81
    $region80: #{image_captionizer_forward.1} parent=1 // pred_region
      _
    $region81: #{image_captionizer_forward.1} parent=1 // pred_fallthru
      _
    // Predicated region
    $region82: #{image_captionizer_forward.1} parent=1 // pred_check
      _
    $region83: #{image_captionizer_forward.1} parent=1 // pred_check_branch
      %3025 = sbr.rel (0) target = $region85
    $region84: #{image_captionizer_forward.1} parent=1 // pred_region
      _
    $region85: #{image_captionizer_forward.1} parent=1 // pred_fallthru
      _
    %3026 = vsyncpa [#allocation5], 1
    %3027 = vsyncpa [#allocation7], 1
    %3028 = vsyncpa [#allocation10], 1
    %3029 = vsyncpa [#allocation13], 1

</llo_original>
